<compile_context>
chip_gen: v7x
topology: tpu7x:2x2x1
jax: 0.10.0
libtpu: 0.0.40
codegen_flags: <defaults>
</compile_context>

<pallas_src>
import jax
import jax.numpy as jnp
from jax.experimental import pallas as pl
from jax.experimental.pallas import tpu as pltpu

_BN_EPS = 1e-5
_VMEM_LIMIT = 32 * 1024 * 1024  # explicit scoped-VMEM cap, safe on v5e/v6e/v7x


def _cparams(grid_rank=1):
    return pltpu.CompilerParams(
        dimension_semantics=("parallel",) * grid_rank,
        vmem_limit_bytes=_VMEM_LIMIT)


# -----------------------------------------------------------------------------
# In-kernel helpers
# -----------------------------------------------------------------------------
def _shift(x, s):
    """result[i, :] = x[i - s, :] along axis 0, zero-filled out of range."""
    n = x.shape[0]
    rolled = pltpu.roll(x, shift=s % n, axis=0)
    idx = jax.lax.broadcasted_iota(jnp.int32, x.shape, 0)
    if s > 0:
        return jnp.where(idx < s, jnp.zeros_like(rolled), rolled)
    return jnp.where(idx >= n + s, jnp.zeros_like(rolled), rolled)


def _concat_lanes(vals):
    return vals[0] if len(vals) == 1 else jnp.concatenate(vals, axis=-1)


# -----------------------------------------------------------------------------
# Pallas kernels
# -----------------------------------------------------------------------------
def _stem_kernel(x0_ref, x1_ref, x2_ref, x3_ref, w_ref, s_ref, b_ref, o_ref):
    """Fused Conv1d(k=7,s=2,p=3) + BN + ReLU + MaxPool1d(k=3,s=2,p=1).

    x{r}_ref: (1, Q, Cin) rows x[4j + r]   (Q = L // 4)
    w_ref:    (7*Cin, F0) taps stacked in k order
    o_ref:    (1, Q, F0)
    """
    x0 = x0_ref[0].astype(jnp.float32)
    x1 = x1_ref[0].astype(jnp.float32)
    x2 = x2_ref[0].astype(jnp.float32)
    x3 = x3_ref[0].astype(jnp.float32)
    # conv output at even / odd stride-2 positions: y[2j] and y[2j+1],
    # each expressed as ONE stacked-tap matmul (no post-hoc subsampling).
    pe = _concat_lanes([_shift(x1, 1), _shift(x2, 1), _shift(x3, 1),
                        x0, x1, x2, x3]).astype(jnp.bfloat16)
    po = _concat_lanes([_shift(x3, 1), x0, x1, x2, x3,
                        _shift(x0, -1), _shift(x1, -1)]).astype(jnp.bfloat16)
    w = w_ref[...]
    ye = jnp.dot(pe, w, preferred_element_type=jnp.float32)   # (Q, F0)
    yo = jnp.dot(po, w, preferred_element_type=jnp.float32)
    s = s_ref[...]
    b = b_ref[...]
    ae = jnp.maximum(ye * s + b, 0.0)      # ReLU(BN(y[2j]))
    ao = jnp.maximum(yo * s + b, 0.0)      # ReLU(BN(y[2j+1]))
    # maxpool(k=3, s=2, p=1): out[j] = max(a[2j-1], a[2j], a[2j+1]); ReLU >= 0
    # makes the zero left-pad equivalent to PyTorch's -inf pad.
    o_ref[0] = jnp.maximum(jnp.maximum(ae, ao),
                           _shift(ao, 1)).astype(o_ref.dtype)


def _make_dense_layer_kernel(num_pieces):
    """BN + ReLU + conv1(1x1) + BN + ReLU + conv2(k=3, 'same'), fully fused."""
    def kernel(*refs):
        x_refs = refs[:num_pieces]
        s1_ref, b1_ref, w1_ref, s2_ref, b2_ref, w2_ref, o_ref = refs[num_pieces:]
        # DenseNet concat happens here, in VMEM, from the feature "pieces".
        x = _concat_lanes([r[0].astype(jnp.float32) for r in x_refs])  # (L, Cin)
        a = jnp.maximum(x * s1_ref[...] + b1_ref[...], 0.0)
        t = jnp.dot(a.astype(jnp.bfloat16), w1_ref[...],
                    preferred_element_type=jnp.float32)                # (L, bott)
        u = jnp.maximum(t * s2_ref[...] + b2_ref[...], 0.0)
        # k=3 'same' conv as one matmul over the three shifted taps.
        stacked = _concat_lanes([_shift(u, 1), u, _shift(u, -1)])      # (L, 3*bott)
        o = jnp.dot(stacked.astype(jnp.bfloat16), w2_ref[...],
                    preferred_element_type=jnp.float32)
        o_ref[0] = o.astype(o_ref.dtype)                               # single store
    return kernel


def _make_transition_kernel(num_pieces):
    """BN + ReLU + conv(1x1) + AvgPool1d(2,2), fused (pool commuted through conv)."""
    def kernel(*refs):
        e_refs = refs[:num_pieces]
        d_refs = refs[num_pieces:2 * num_pieces]
        s_ref, b_ref, w_ref, o_ref = refs[2 * num_pieces:]
        xe = _concat_lanes([r[0].astype(jnp.float32) for r in e_refs])  # rows 2i
        xo = _concat_lanes([r[0].astype(jnp.float32) for r in d_refs])  # rows 2i+1
        s = s_ref[...]
        b = b_ref[...]
        ae = jnp.maximum(xe * s + b, 0.0)
        ao = jnp.maximum(xo * s + b, 0.0)
        m = (0.5 * (ae + ao)).astype(jnp.bfloat16)   # avgpool folded before 1x1 conv
        o_ref[0] = jnp.dot(m, w_ref[...],
                           preferred_element_type=jnp.float32).astype(o_ref.dtype)
    return kernel


def _make_head_kernel(num_pieces):
    """ReLU -> adaptive_avg_pool1d(1) -> Linear over the whole batch at once."""
    def kernel(*refs):
        x_refs = refs[:num_pieces]
        w_ref, b_ref, o_ref = refs[num_pieces:]
        pooled = _concat_lanes([
            jnp.mean(jnp.maximum(r[...].astype(jnp.float32), 0.0), axis=1)
            for r in x_refs])                                          # (N, Cin)
        o_ref[...] = (jnp.dot(pooled, w_ref[...],
                              preferred_element_type=jnp.float32) + b_ref[...])
    return kernel


# -----------------------------------------------------------------------------
# pallas_call wrappers
# -----------------------------------------------------------------------------
def stem(x_parts, w_flat, scale, bias):
    N, Q, Cin = x_parts[0].shape
    KC, F0 = w_flat.shape
    in_specs = ([pl.BlockSpec((1, Q, Cin), lambda n: (n, 0, 0)) for _ in range(4)]
                + [pl.BlockSpec((KC, F0), lambda n: (0, 0)),
                   pl.BlockSpec((1, F0), lambda n: (0, 0)),
                   pl.BlockSpec((1, F0), lambda n: (0, 0))])
    return pl.pallas_call(
        _stem_kernel,
        out_shape=jax.ShapeDtypeStruct((N, Q, F0), jnp.bfloat16),
        grid=(N,),
        in_specs=in_specs,
        out_specs=pl.BlockSpec((1, Q, F0), lambda n: (n, 0, 0)),
        compiler_params=_cparams(1),
    )(*x_parts, w_flat, scale, bias)


def dense_layer(pieces, lp):
    N, Lb, _ = pieces[0].shape
    Cin = sum(int(p.shape[-1]) for p in pieces)
    bott = lp["w1"].shape[1]
    growth = lp["w2"].shape[1]
    piece_specs = [pl.BlockSpec((1, Lb, int(p.shape[-1])), lambda n: (n, 0, 0))
                   for p in pieces]
    param_specs = [pl.BlockSpec((1, Cin), lambda n: (0, 0)),
                   pl.BlockSpec((1, Cin), lambda n: (0, 0)),
                   pl.BlockSpec((Cin, bott), lambda n: (0, 0)),
                   pl.BlockSpec((1, bott), lambda n: (0, 0)),
                   pl.BlockSpec((1, bott), lambda n: (0, 0)),
                   pl.BlockSpec((3 * bott, growth), lambda n: (0, 0))]
    return pl.pallas_call(
        _make_dense_layer_kernel(len(pieces)),
        out_shape=jax.ShapeDtypeStruct((N, Lb, growth), jnp.bfloat16),
        grid=(N,),
        in_specs=piece_specs + param_specs,
        out_specs=pl.BlockSpec((1, Lb, growth), lambda n: (n, 0, 0)),
        compiler_params=_cparams(1),
    )(*pieces, lp["s1"], lp["b1"], lp["w1"], lp["s2"], lp["b2"], lp["w2"])


def transition(pieces, tp):
    N, Lb, _ = pieces[0].shape
    assert Lb % 2 == 0, "transition avgpool needs even length"
    Lh = Lb // 2
    Cin = sum(int(p.shape[-1]) for p in pieces)
    Cout = tp["w"].shape[1]
    evens = [p[:, 0::2, :] for p in pieces]   # cheap XLA parity split of inputs
    odds = [p[:, 1::2, :] for p in pieces]
    piece_specs = [pl.BlockSpec((1, Lh, int(p.shape[-1])), lambda n: (n, 0, 0))
                   for p in evens + odds]
    param_specs = [pl.BlockSpec((1, Cin), lambda n: (0, 0)),
                   pl.BlockSpec((1, Cin), lambda n: (0, 0)),
                   pl.BlockSpec((Cin, Cout), lambda n: (0, 0))]
    return pl.pallas_call(
        _make_transition_kernel(len(pieces)),
        out_shape=jax.ShapeDtypeStruct((N, Lh, Cout), jnp.bfloat16),
        grid=(N,),
        in_specs=piece_specs + param_specs,
        out_specs=pl.BlockSpec((1, Lh, Cout), lambda n: (n, 0, 0)),
        compiler_params=_cparams(1),
    )(*(evens + odds), tp["scale"], tp["bias"], tp["w"])


def head(pieces, w, b):
    N, Lb, _ = pieces[0].shape
    Cin = sum(int(p.shape[-1]) for p in pieces)
    Cout = w.shape[1]
    piece_specs = [pl.BlockSpec((N, Lb, int(p.shape[-1])), lambda i: (0, 0, 0))
                   for p in pieces]
    param_specs = [pl.BlockSpec((Cin, Cout), lambda i: (0, 0)),
                   pl.BlockSpec((1, Cout), lambda i: (0, 0))]
    return pl.pallas_call(
        _make_head_kernel(len(pieces)),
        out_shape=jax.ShapeDtypeStruct((N, Cout), jnp.float32),
        grid=(1,),
        in_specs=piece_specs + param_specs,
        out_specs=pl.BlockSpec((N, Cout), lambda i: (0, 0)),
        compiler_params=_cparams(1),
    )(*pieces, w, b.reshape(1, Cout))


# -----------------------------------------------------------------------------
# Parameter construction (deterministic, mirrors the nn.Module __init__)
# -----------------------------------------------------------------------------
def _fold_bn(c):
    gamma = jnp.ones((c,), jnp.float32)          # init.constant_(weight, 1)
    beta = jnp.zeros((c,), jnp.float32)          # init.constant_(bias, 0)
    mean = jnp.zeros((c,), jnp.float32)
    var = jnp.ones((c,), jnp.float32)
    scale = gamma / jnp.sqrt(var + _BN_EPS)
    bias = beta - mean * scale
    return scale.reshape(1, c), bias.reshape(1, c)


def _kaiming_conv(key, k, cin, cout):
    # nn.init.kaiming_normal_ (fan_in = cin*k): std = sqrt(2 / (cin*k))
    std = (2.0 / (cin * k)) ** 0.5
    w = std * jax.random.normal(key, (k, cin, cout), jnp.float32)
    return w.reshape(k * cin, cout).astype(jnp.bfloat16)   # taps stacked in k order


def init_densenet_params(key, input_channels, output_channels=256,
                         growth_rate=32, block_config=(6, 12, 24, 16),
                         num_init_features=64, bn_size=4):
    keys = iter(jax.random.split(key, 256))
    params = {}
    params["conv0_w"] = _kaiming_conv(next(keys), 7, input_channels,
                                      num_init_features)
    params["bn0_scale"], params["bn0_bias"] = _fold_bn(num_init_features)

    num_features = num_init_features
    blocks, transitions = [], []
    for i, num_layers in enumerate(block_config):
        layers = []
        for j in range(num_layers):
            cin = num_features + j * growth_rate
            bott = bn_size * growth_rate
            s1, b1 = _fold_bn(cin)
            s2, b2 = _fold_bn(bott)
            layers.append({
                "s1": s1, "b1": b1,
                "w1": _kaiming_conv(next(keys), 1, cin, bott),
                "s2": s2, "b2": b2,
                "w2": _kaiming_conv(next(keys), 3, bott, growth_rate),
            })
        blocks.append(layers)
        num_features += num_layers * growth_rate
        if i != len(block_config) - 1:
            st, bt = _fold_bn(num_features)
            transitions.append({
                "scale": st, "bias": bt,
                "w": _kaiming_conv(next(keys), 1, num_features,
                                   num_features // 2),
            })
            num_features //= 2
        else:
            transitions.append(None)
    params["blocks"] = blocks
    params["transitions"] = transitions

    bound = (1.0 / num_features) ** 0.5          # PyTorch Linear default weight init
    params["cls_w"] = jax.random.uniform(next(keys),
                                         (num_features, output_channels),
                                         jnp.float32, -bound, bound)
    params["cls_b"] = jnp.zeros((output_channels,), jnp.float32)  # constant_(b, 0)
    return params


# -----------------------------------------------------------------------------
# Forward pass
# -----------------------------------------------------------------------------
def densenet_forward(x_ncl, params):
    """x_ncl: (N, C_in, L) in PyTorch NCL layout."""
    x = jnp.transpose(x_ncl, (0, 2, 1)).astype(jnp.bfloat16)   # -> (N, L, C)
    N, L, _ = x.shape
    assert L % 4 == 0, "stem (stride-2 conv + stride-2 maxpool) needs L % 4 == 0"
    x_parts = [x[:, r::4, :] for r in range(4)]                # residues mod 4

    # fused stem: conv(k7,s2) -> BN -> ReLU -> maxpool(k3,s2)  => (N, L//4, F0)
    h = stem(x_parts, params["conv0_w"], params["bn0_scale"], params["bn0_bias"])

    pieces = [h]   # DenseNet feature "pieces"; concatenation happens in VMEM
    for layers, trans in zip(params["blocks"], params["transitions"]):
        for lp in layers:
            pieces.append(dense_layer(pieces, lp))
        if trans is not None:
            pieces = [transition(pieces, trans)]

    # head: ReLU -> adaptive_avg_pool1d(1) -> flatten -> Linear
    return head(pieces, params["cls_w"], params["cls_b"])


# -----------------------------------------------------------------------------
if __name__ == "__main__":
    key = jax.random.PRNGKey(0)
    k_params, k_x = jax.random.split(key)

    # small but structurally faithful configuration
    N, C_IN, L = 2, 4, 64
    OUT_CH, GROWTH, BLOCKS, INIT_F, BN_SIZE = 32, 8, (2, 2), 16, 2

    x = jax.random.normal(k_x, (N, C_IN, L), jnp.float32)   # PyTorch NCL input
    params = init_densenet_params(k_params, input_channels=C_IN,
                                  output_channels=OUT_CH, growth_rate=GROWTH,
                                  block_config=BLOCKS, num_init_features=INIT_F,
                                  bn_size=BN_SIZE)

    out = jax.jit(densenet_forward)(x, params)
    out = jax.block_until_ready(out)
    assert out.shape == (N, OUT_CH), out.shape
    assert bool(jnp.all(jnp.isfinite(out)))
    print("KERNEL_OK")
</pallas_src>

<mosaic_0001>
module attributes {stable_mosaic.version = 11 : i64} {
  func.func @_stem_kernel(%arg0: i32, %arg1: memref<1x16x4xbf16, #tpu.memory_space<vmem>>, %arg2: memref<1x16x4xbf16, #tpu.memory_space<vmem>>, %arg3: memref<1x16x4xbf16, #tpu.memory_space<vmem>>, %arg4: memref<1x16x4xbf16, #tpu.memory_space<vmem>>, %arg5: memref<28x16xbf16, #tpu.memory_space<vmem>>, %arg6: memref<1x16xf32, #tpu.memory_space<vmem>>, %arg7: memref<1x16xf32, #tpu.memory_space<vmem>>, %arg8: memref<1x16x16xbf16, #tpu.memory_space<vmem>>) attributes {dimension_semantics = [#tpu.dimension_semantics<parallel>], iteration_bounds = array<i64: 2>, scalar_prefetch = 0 : i64, scratch_operands = 0 : i64, tpu.core_type = #tpu.core_type<tc>, window_params = [{transform_indices = @transform_0, window_bounds = array<i64: 1, 16, 4>}, {transform_indices = @transform_1, window_bounds = array<i64: 1, 16, 4>}, {transform_indices = @transform_2, window_bounds = array<i64: 1, 16, 4>}, {transform_indices = @transform_3, window_bounds = array<i64: 1, 16, 4>}, {pipeline_mode = #tpu.pipeline_mode<synchronous>, transform_indices = @transform_4, window_bounds = array<i64: 28, 16>}, {pipeline_mode = #tpu.pipeline_mode<synchronous>, transform_indices = @transform_5, window_bounds = array<i64: 1, 16>}, {pipeline_mode = #tpu.pipeline_mode<synchronous>, transform_indices = @transform_6, window_bounds = array<i64: 1, 16>}, {transform_indices = @transform_7, window_bounds = array<i64: 1, 16, 16>}]} {
    %c0 = arith.constant 0 : index
    %c0_0 = arith.constant 0 : index
    %c0_1 = arith.constant 0 : index
    %0 = vector.load %arg1[%c0, %c0_0, %c0_1] : memref<1x16x4xbf16, #tpu.memory_space<vmem>>, vector<1x16x4xbf16>
    %1 = vector.shape_cast %0 : vector<1x16x4xbf16> to vector<16x4xbf16>
    %2 = arith.extf %1 : vector<16x4xbf16> to vector<16x4xf32>
    %c0_2 = arith.constant 0 : index
    %c0_3 = arith.constant 0 : index
    %c0_4 = arith.constant 0 : index
    %3 = vector.load %arg2[%c0_2, %c0_3, %c0_4] : memref<1x16x4xbf16, #tpu.memory_space<vmem>>, vector<1x16x4xbf16>
    %4 = vector.shape_cast %3 : vector<1x16x4xbf16> to vector<16x4xbf16>
    %5 = arith.extf %4 : vector<16x4xbf16> to vector<16x4xf32>
    %c0_5 = arith.constant 0 : index
    %c0_6 = arith.constant 0 : index
    %c0_7 = arith.constant 0 : index
    %6 = vector.load %arg3[%c0_5, %c0_6, %c0_7] : memref<1x16x4xbf16, #tpu.memory_space<vmem>>, vector<1x16x4xbf16>
    %7 = vector.shape_cast %6 : vector<1x16x4xbf16> to vector<16x4xbf16>
    %8 = arith.extf %7 : vector<16x4xbf16> to vector<16x4xf32>
    %c0_8 = arith.constant 0 : index
    %c0_9 = arith.constant 0 : index
    %c0_10 = arith.constant 0 : index
    %9 = vector.load %arg4[%c0_8, %c0_9, %c0_10] : memref<1x16x4xbf16, #tpu.memory_space<vmem>>, vector<1x16x4xbf16>
    %10 = vector.shape_cast %9 : vector<1x16x4xbf16> to vector<16x4xbf16>
    %11 = arith.extf %10 : vector<16x4xbf16> to vector<16x4xf32>
    %c1_i32 = arith.constant 1 : i32
    %12 = tpu.dynamic_rotate %5 by %c1_i32 dim 0 : vector<16x4xf32>, i32 -> vector<16x4xf32>
    %13 = tpu.iota {dimensions = array<i32: 0>} : vector<16x4xi32>
    %c1_i32_11 = arith.constant 1 : i32
    %14 = vector.broadcast %c1_i32_11 : i32 to vector<16x4xi32>
    %15 = arith.cmpi slt, %13, %14 : vector<16x4xi32>
    %cst = arith.constant 0.000000e+00 : f32
    %16 = vector.broadcast %cst : f32 to vector<16x4xf32>
    %17 = arith.select %15, %16, %12 : vector<16x4xi1>, vector<16x4xf32>
    %c1_i32_12 = arith.constant 1 : i32
    %18 = tpu.dynamic_rotate %8 by %c1_i32_12 dim 0 : vector<16x4xf32>, i32 -> vector<16x4xf32>
    %19 = tpu.iota {dimensions = array<i32: 0>} : vector<16x4xi32>
    %c1_i32_13 = arith.constant 1 : i32
    %20 = vector.broadcast %c1_i32_13 : i32 to vector<16x4xi32>
    %21 = arith.cmpi slt, %19, %20 : vector<16x4xi32>
    %cst_14 = arith.constant 0.000000e+00 : f32
    %22 = vector.broadcast %cst_14 : f32 to vector<16x4xf32>
    %23 = arith.select %21, %22, %18 : vector<16x4xi1>, vector<16x4xf32>
    %c1_i32_15 = arith.constant 1 : i32
    %24 = tpu.dynamic_rotate %11 by %c1_i32_15 dim 0 : vector<16x4xf32>, i32 -> vector<16x4xf32>
    %25 = tpu.iota {dimensions = array<i32: 0>} : vector<16x4xi32>
    %c1_i32_16 = arith.constant 1 : i32
    %26 = vector.broadcast %c1_i32_16 : i32 to vector<16x4xi32>
    %27 = arith.cmpi slt, %25, %26 : vector<16x4xi32>
    %cst_17 = arith.constant 0.000000e+00 : f32
    %28 = vector.broadcast %cst_17 : f32 to vector<16x4xf32>
    %29 = arith.select %27, %28, %24 : vector<16x4xi1>, vector<16x4xf32>
    %30 = tpu.concatenate %17, %23, %29, %2, %5, %8, %11 in 1 : vector<16x4xf32>, vector<16x4xf32>, vector<16x4xf32>, vector<16x4xf32>, vector<16x4xf32>, vector<16x4xf32>, vector<16x4xf32> -> vector<16x28xf32>
    %31 = arith.truncf %30 : vector<16x28xf32> to vector<16x28xbf16>
    %c1_i32_18 = arith.constant 1 : i32
    %32 = tpu.dynamic_rotate %11 by %c1_i32_18 dim 0 : vector<16x4xf32>, i32 -> vector<16x4xf32>
    %33 = tpu.iota {dimensions = array<i32: 0>} : vector<16x4xi32>
    %c1_i32_19 = arith.constant 1 : i32
    %34 = vector.broadcast %c1_i32_19 : i32 to vector<16x4xi32>
    %35 = arith.cmpi slt, %33, %34 : vector<16x4xi32>
    %cst_20 = arith.constant 0.000000e+00 : f32
    %36 = vector.broadcast %cst_20 : f32 to vector<16x4xf32>
    %37 = arith.select %35, %36, %32 : vector<16x4xi1>, vector<16x4xf32>
    %c15_i32 = arith.constant 15 : i32
    %38 = tpu.dynamic_rotate %2 by %c15_i32 dim 0 : vector<16x4xf32>, i32 -> vector<16x4xf32>
    %39 = tpu.iota {dimensions = array<i32: 0>} : vector<16x4xi32>
    %c15_i32_21 = arith.constant 15 : i32
    %40 = vector.broadcast %c15_i32_21 : i32 to vector<16x4xi32>
    %41 = arith.cmpi sge, %39, %40 : vector<16x4xi32>
    %cst_22 = arith.constant 0.000000e+00 : f32
    %42 = vector.broadcast %cst_22 : f32 to vector<16x4xf32>
    %43 = arith.select %41, %42, %38 : vector<16x4xi1>, vector<16x4xf32>
    %c15_i32_23 = arith.constant 15 : i32
    %44 = tpu.dynamic_rotate %5 by %c15_i32_23 dim 0 : vector<16x4xf32>, i32 -> vector<16x4xf32>
    %45 = tpu.iota {dimensions = array<i32: 0>} : vector<16x4xi32>
    %c15_i32_24 = arith.constant 15 : i32
    %46 = vector.broadcast %c15_i32_24 : i32 to vector<16x4xi32>
    %47 = arith.cmpi sge, %45, %46 : vector<16x4xi32>
    %cst_25 = arith.constant 0.000000e+00 : f32
    %48 = vector.broadcast %cst_25 : f32 to vector<16x4xf32>
    %49 = arith.select %47, %48, %44 : vector<16x4xi1>, vector<16x4xf32>
    %50 = tpu.concatenate %37, %2, %5, %8, %11, %43, %49 in 1 : vector<16x4xf32>, vector<16x4xf32>, vector<16x4xf32>, vector<16x4xf32>, vector<16x4xf32>, vector<16x4xf32>, vector<16x4xf32> -> vector<16x28xf32>
    %51 = arith.truncf %50 : vector<16x28xf32> to vector<16x28xbf16>
    %c0_26 = arith.constant 0 : index
    %c0_27 = arith.constant 0 : index
    %52 = vector.load %arg5[%c0_26, %c0_27] : memref<28x16xbf16, #tpu.memory_space<vmem>>, vector<28x16xbf16>
    %cst_28 = arith.constant dense<0.000000e+00> : vector<16x16xf32>
    %53 = tpu.matmul %31, %52, %cst_28 {dimension_numbers = #tpu.dot_dimension_numbers<[1], [0], [0], [1], [0, 0, 1, 1], [], []>} : vector<16x28xbf16>, vector<28x16xbf16>, vector<16x16xf32> -> vector<16x16xf32>
    %cst_29 = arith.constant dense<0.000000e+00> : vector<16x16xf32>
    %54 = tpu.matmul %51, %52, %cst_29 {dimension_numbers = #tpu.dot_dimension_numbers<[1], [0], [0], [1], [0, 0, 1, 1], [], []>} : vector<16x28xbf16>, vector<28x16xbf16>, vector<16x16xf32> -> vector<16x16xf32>
    %c0_30 = arith.constant 0 : index
    %c0_31 = arith.constant 0 : index
    %55 = vector.load %arg6[%c0_30, %c0_31] : memref<1x16xf32, #tpu.memory_space<vmem>>, vector<1x16xf32>
    %c0_32 = arith.constant 0 : index
    %c0_33 = arith.constant 0 : index
    %56 = vector.load %arg7[%c0_32, %c0_33] : memref<1x16xf32, #tpu.memory_space<vmem>>, vector<1x16xf32>
    %57 = vector.broadcast %55 : vector<1x16xf32> to vector<16x16xf32>
    %58 = arith.mulf %53, %57 : vector<16x16xf32>
    %59 = vector.broadcast %56 : vector<1x16xf32> to vector<16x16xf32>
    %60 = arith.addf %58, %59 : vector<16x16xf32>
    %cst_34 = arith.constant 0.000000e+00 : f32
    %61 = vector.broadcast %cst_34 : f32 to vector<16x16xf32>
    %62 = arith.maximumf %60, %61 : vector<16x16xf32>
    %63 = vector.broadcast %55 : vector<1x16xf32> to vector<16x16xf32>
    %64 = arith.mulf %54, %63 : vector<16x16xf32>
    %65 = vector.broadcast %56 : vector<1x16xf32> to vector<16x16xf32>
    %66 = arith.addf %64, %65 : vector<16x16xf32>
    %cst_35 = arith.constant 0.000000e+00 : f32
    %67 = vector.broadcast %cst_35 : f32 to vector<16x16xf32>
    %68 = arith.maximumf %66, %67 : vector<16x16xf32>
    %69 = arith.maximumf %62, %68 : vector<16x16xf32>
    %c1_i32_36 = arith.constant 1 : i32
    %70 = tpu.dynamic_rotate %68 by %c1_i32_36 dim 0 : vector<16x16xf32>, i32 -> vector<16x16xf32>
    %71 = tpu.iota {dimensions = array<i32: 0>} : vector<16x16xi32>
    %c1_i32_37 = arith.constant 1 : i32
    %72 = vector.broadcast %c1_i32_37 : i32 to vector<16x16xi32>
    %73 = arith.cmpi slt, %71, %72 : vector<16x16xi32>
    %cst_38 = arith.constant 0.000000e+00 : f32
    %74 = vector.broadcast %cst_38 : f32 to vector<16x16xf32>
    %75 = arith.select %73, %74, %70 : vector<16x16xi1>, vector<16x16xf32>
    %76 = arith.maximumf %69, %75 : vector<16x16xf32>
    %77 = arith.truncf %76 : vector<16x16xf32> to vector<16x16xbf16>
    %c0_39 = arith.constant 0 : index
    %c0_40 = arith.constant 0 : index
    %c0_41 = arith.constant 0 : index
    %78 = vector.load %arg8[%c0_39, %c0_40, %c0_41] : memref<1x16x16xbf16, #tpu.memory_space<vmem>>, vector<1x16x16xbf16>
    %79 = vector.shape_cast %78 : vector<1x16x16xbf16> to vector<16x16xbf16>
    %80 = vector.shape_cast %77 : vector<16x16xbf16> to vector<1x16x16xbf16>
    tpu.vector_store %arg8[%c0_39, %c0_40, %c0_41], %80 {strides = array<i32>} : memref<1x16x16xbf16, #tpu.memory_space<vmem>>, vector<1x16x16xbf16>,
    return
  }
  func.func @transform_0(%arg0: i32) -> (i32, i32, i32) {
    %c0_i32 = arith.constant 0 : i32
    %c0_i32_0 = arith.constant 0 : i32
    %c0_i32_1 = arith.constant 0 : i32
    return %arg0, %c0_i32, %c0_i32_0 : i32, i32, i32
  }
  func.func @transform_1(%arg0: i32) -> (i32, i32, i32) {
    %c0_i32 = arith.constant 0 : i32
    %c0_i32_0 = arith.constant 0 : i32
    %c0_i32_1 = arith.constant 0 : i32
    return %arg0, %c0_i32, %c0_i32_0 : i32, i32, i32
  }
  func.func @transform_2(%arg0: i32) -> (i32, i32, i32) {
    %c0_i32 = arith.constant 0 : i32
    %c0_i32_0 = arith.constant 0 : i32
    %c0_i32_1 = arith.constant 0 : i32
    return %arg0, %c0_i32, %c0_i32_0 : i32, i32, i32
  }
  func.func @transform_3(%arg0: i32) -> (i32, i32, i32) {
    %c0_i32 = arith.constant 0 : i32
    %c0_i32_0 = arith.constant 0 : i32
    %c0_i32_1 = arith.constant 0 : i32
    return %arg0, %c0_i32, %c0_i32_0 : i32, i32, i32
  }
  func.func @transform_4(%arg0: i32) -> (i32, i32) {
    %c0_i32 = arith.constant 0 : i32
    %c0_i32_0 = arith.constant 0 : i32
    %c0_i32_1 = arith.constant 0 : i32
    return %c0_i32, %c0_i32_0 : i32, i32
  }
  func.func @transform_5(%arg0: i32) -> (i32, i32) {
    %c0_i32 = arith.constant 0 : i32
    %c0_i32_0 = arith.constant 0 : i32
    %c0_i32_1 = arith.constant 0 : i32
    return %c0_i32, %c0_i32_0 : i32, i32
  }
  func.func @transform_6(%arg0: i32) -> (i32, i32) {
    %c0_i32 = arith.constant 0 : i32
    %c0_i32_0 = arith.constant 0 : i32
    %c0_i32_1 = arith.constant 0 : i32
    return %c0_i32, %c0_i32_0 : i32, i32
  }
  func.func @transform_7(%arg0: i32) -> (i32, i32, i32) {
    %c0_i32 = arith.constant 0 : i32
    %c0_i32_0 = arith.constant 0 : i32
    %c0_i32_1 = arith.constant 0 : i32
    return %arg0, %c0_i32, %c0_i32_0 : i32, i32, i32
  }
}

module attributes {stable_mosaic.version = 11 : i64} {
  func.func @kernel(%arg0: i32, %arg1: memref<1x16x16xbf16, #tpu.memory_space<vmem>>, %arg2: memref<1x16xf32, #tpu.memory_space<vmem>>, %arg3: memref<1x16xf32, #tpu.memory_space<vmem>>, %arg4: memref<16x16xbf16, #tpu.memory_space<vmem>>, %arg5: memref<1x16xf32, #tpu.memory_space<vmem>>, %arg6: memref<1x16xf32, #tpu.memory_space<vmem>>, %arg7: memref<48x8xbf16, #tpu.memory_space<vmem>>, %arg8: memref<1x16x8xbf16, #tpu.memory_space<vmem>>) attributes {dimension_semantics = [#tpu.dimension_semantics<parallel>], iteration_bounds = array<i64: 2>, scalar_prefetch = 0 : i64, scratch_operands = 0 : i64, tpu.core_type = #tpu.core_type<tc>, window_params = [{transform_indices = @transform_0, window_bounds = array<i64: 1, 16, 16>}, {pipeline_mode = #tpu.pipeline_mode<synchronous>, transform_indices = @transform_1, window_bounds = array<i64: 1, 16>}, {pipeline_mode = #tpu.pipeline_mode<synchronous>, transform_indices = @transform_2, window_bounds = array<i64: 1, 16>}, {pipeline_mode = #tpu.pipeline_mode<synchronous>, transform_indices = @transform_3, window_bounds = array<i64: 16, 16>}, {pipeline_mode = #tpu.pipeline_mode<synchronous>, transform_indices = @transform_4, window_bounds = array<i64: 1, 16>}, {pipeline_mode = #tpu.pipeline_mode<synchronous>, transform_indices = @transform_5, window_bounds = array<i64: 1, 16>}, {pipeline_mode = #tpu.pipeline_mode<synchronous>, transform_indices = @transform_6, window_bounds = array<i64: 48, 8>}, {transform_indices = @transform_7, window_bounds = array<i64: 1, 16, 8>}]} {
    %c0 = arith.constant 0 : index
    %c0_0 = arith.constant 0 : index
    %c0_1 = arith.constant 0 : index
    %0 = vector.load %arg1[%c0, %c0_0, %c0_1] : memref<1x16x16xbf16, #tpu.memory_space<vmem>>, vector<1x16x16xbf16>
    %1 = vector.shape_cast %0 : vector<1x16x16xbf16> to vector<16x16xbf16>
    %2 = arith.extf %1 : vector<16x16xbf16> to vector<16x16xf32>
    %c0_2 = arith.constant 0 : index
    %c0_3 = arith.constant 0 : index
    %3 = vector.load %arg2[%c0_2, %c0_3] : memref<1x16xf32, #tpu.memory_space<vmem>>, vector<1x16xf32>
    %4 = vector.broadcast %3 : vector<1x16xf32> to vector<16x16xf32>
    %5 = arith.mulf %2, %4 : vector<16x16xf32>
    %c0_4 = arith.constant 0 : index
    %c0_5 = arith.constant 0 : index
    %6 = vector.load %arg3[%c0_4, %c0_5] : memref<1x16xf32, #tpu.memory_space<vmem>>, vector<1x16xf32>
    %7 = vector.broadcast %6 : vector<1x16xf32> to vector<16x16xf32>
    %8 = arith.addf %5, %7 : vector<16x16xf32>
    %cst = arith.constant 0.000000e+00 : f32
    %9 = vector.broadcast %cst : f32 to vector<16x16xf32>
    %10 = arith.maximumf %8, %9 : vector<16x16xf32>
    %11 = arith.truncf %10 : vector<16x16xf32> to vector<16x16xbf16>
    %c0_6 = arith.constant 0 : index
    %c0_7 = arith.constant 0 : index
    %12 = vector.load %arg4[%c0_6, %c0_7] : memref<16x16xbf16, #tpu.memory_space<vmem>>, vector<16x16xbf16>
    %cst_8 = arith.constant dense<0.000000e+00> : vector<16x16xf32>
    %13 = tpu.matmul %11, %12, %cst_8 {dimension_numbers = #tpu.dot_dimension_numbers<[1], [0], [0], [1], [0, 0, 1, 1], [], []>} : vector<16x16xbf16>, vector<16x16xbf16>, vector<16x16xf32> -> vector<16x16xf32>
    %c0_9 = arith.constant 0 : index
    %c0_10 = arith.constant 0 : index
    %14 = vector.load %arg5[%c0_9, %c0_10] : memref<1x16xf32, #tpu.memory_space<vmem>>, vector<1x16xf32>
    %15 = vector.broadcast %14 : vector<1x16xf32> to vector<16x16xf32>
    %16 = arith.mulf %13, %15 : vector<16x16xf32>
    %c0_11 = arith.constant 0 : index
    %c0_12 = arith.constant 0 : index
    %17 = vector.load %arg6[%c0_11, %c0_12] : memref<1x16xf32, #tpu.memory_space<vmem>>, vector<1x16xf32>
    %18 = vector.broadcast %17 : vector<1x16xf32> to vector<16x16xf32>
    %19 = arith.addf %16, %18 : vector<16x16xf32>
    %cst_13 = arith.constant 0.000000e+00 : f32
    %20 = vector.broadcast %cst_13 : f32 to vector<16x16xf32>
    %21 = arith.maximumf %19, %20 : vector<16x16xf32>
    %c1_i32 = arith.constant 1 : i32
    %22 = tpu.dynamic_rotate %21 by %c1_i32 dim 0 : vector<16x16xf32>, i32 -> vector<16x16xf32>
    %23 = tpu.iota {dimensions = array<i32: 0>} : vector<16x16xi32>
    %c1_i32_14 = arith.constant 1 : i32
    %24 = vector.broadcast %c1_i32_14 : i32 to vector<16x16xi32>
    %25 = arith.cmpi slt, %23, %24 : vector<16x16xi32>
    %cst_15 = arith.constant 0.000000e+00 : f32
    %26 = vector.broadcast %cst_15 : f32 to vector<16x16xf32>
    %27 = arith.select %25, %26, %22 : vector<16x16xi1>, vector<16x16xf32>
    %c15_i32 = arith.constant 15 : i32
    %28 = tpu.dynamic_rotate %21 by %c15_i32 dim 0 : vector<16x16xf32>, i32 -> vector<16x16xf32>
    %29 = tpu.iota {dimensions = array<i32: 0>} : vector<16x16xi32>
    %c15_i32_16 = arith.constant 15 : i32
    %30 = vector.broadcast %c15_i32_16 : i32 to vector<16x16xi32>
    %31 = arith.cmpi sge, %29, %30 : vector<16x16xi32>
    %cst_17 = arith.constant 0.000000e+00 : f32
    %32 = vector.broadcast %cst_17 : f32 to vector<16x16xf32>
    %33 = arith.select %31, %32, %28 : vector<16x16xi1>, vector<16x16xf32>
    %34 = tpu.concatenate %27, %21, %33 in 1 : vector<16x16xf32>, vector<16x16xf32>, vector<16x16xf32> -> vector<16x48xf32>
    %35 = arith.truncf %34 : vector<16x48xf32> to vector<16x48xbf16>
    %c0_18 = arith.constant 0 : index
    %c0_19 = arith.constant 0 : index
    %36 = vector.load %arg7[%c0_18, %c0_19] : memref<48x8xbf16, #tpu.memory_space<vmem>>, vector<48x8xbf16>
    %cst_20 = arith.constant dense<0.000000e+00> : vector<16x8xf32>
    %37 = tpu.matmul %35, %36, %cst_20 {dimension_numbers = #tpu.dot_dimension_numbers<[1], [0], [0], [1], [0, 0, 1, 1], [], []>} : vector<16x48xbf16>, vector<48x8xbf16>, vector<16x8xf32> -> vector<16x8xf32>
    %38 = arith.truncf %37 : vector<16x8xf32> to vector<16x8xbf16>
    %c0_21 = arith.constant 0 : index
    %c0_22 = arith.constant 0 : index
    %c0_23 = arith.constant 0 : index
    %39 = vector.load %arg8[%c0_21, %c0_22, %c0_23] : memref<1x16x8xbf16, #tpu.memory_space<vmem>>, vector<1x16x8xbf16>
    %40 = vector.shape_cast %39 : vector<1x16x8xbf16> to vector<16x8xbf16>
    %41 = vector.shape_cast %38 : vector<16x8xbf16> to vector<1x16x8xbf16>
    tpu.vector_store %arg8[%c0_21, %c0_22, %c0_23], %41 {strides = array<i32>} : memref<1x16x8xbf16, #tpu.memory_space<vmem>>, vector<1x16x8xbf16>,
    return
  }
  func.func @transform_0(%arg0: i32) -> (i32, i32, i32) {
    %c0_i32 = arith.constant 0 : i32
    %c0_i32_0 = arith.constant 0 : i32
    %c0_i32_1 = arith.constant 0 : i32
    return %arg0, %c0_i32, %c0_i32_0 : i32, i32, i32
  }
  func.func @transform_1(%arg0: i32) -> (i32, i32) {
    %c0_i32 = arith.constant 0 : i32
    %c0_i32_0 = arith.constant 0 : i32
    %c0_i32_1 = arith.constant 0 : i32
    return %c0_i32, %c0_i32_0 : i32, i32
  }
  func.func @transform_2(%arg0: i32) -> (i32, i32) {
    %c0_i32 = arith.constant 0 : i32
    %c0_i32_0 = arith.constant 0 : i32
    %c0_i32_1 = arith.constant 0 : i32
    return %c0_i32, %c0_i32_0 : i32, i32
  }
  func.func @transform_3(%arg0: i32) -> (i32, i32) {
    %c0_i32 = arith.constant 0 : i32
    %c0_i32_0 = arith.constant 0 : i32
    %c0_i32_1 = arith.constant 0 : i32
    return %c0_i32, %c0_i32_0 : i32, i32
  }
  func.func @transform_4(%arg0: i32) -> (i32, i32) {
    %c0_i32 = arith.constant 0 : i32
    %c0_i32_0 = arith.constant 0 : i32
    %c0_i32_1 = arith.constant 0 : i32
    return %c0_i32, %c0_i32_0 : i32, i32
  }
  func.func @transform_5(%arg0: i32) -> (i32, i32) {
    %c0_i32 = arith.constant 0 : i32
    %c0_i32_0 = arith.constant 0 : i32
    %c0_i32_1 = arith.constant 0 : i32
    return %c0_i32, %c0_i32_0 : i32, i32
  }
  func.func @transform_6(%arg0: i32) -> (i32, i32) {
    %c0_i32 = arith.constant 0 : i32
    %c0_i32_0 = arith.constant 0 : i32
    %c0_i32_1 = arith.constant 0 : i32
    return %c0_i32, %c0_i32_0 : i32, i32
  }
  func.func @transform_7(%arg0: i32) -> (i32, i32, i32) {
    %c0_i32 = arith.constant 0 : i32
    %c0_i32_0 = arith.constant 0 : i32
    %c0_i32_1 = arith.constant 0 : i32
    return %arg0, %c0_i32, %c0_i32_0 : i32, i32, i32
  }
}

module attributes {stable_mosaic.version = 11 : i64} {
  func.func @kernel(%arg0: i32, %arg1: memref<1x16x16xbf16, #tpu.memory_space<vmem>>, %arg2: memref<1x16x8xbf16, #tpu.memory_space<vmem>>, %arg3: memref<1x24xf32, #tpu.memory_space<vmem>>, %arg4: memref<1x24xf32, #tpu.memory_space<vmem>>, %arg5: memref<24x16xbf16, #tpu.memory_space<vmem>>, %arg6: memref<1x16xf32, #tpu.memory_space<vmem>>, %arg7: memref<1x16xf32, #tpu.memory_space<vmem>>, %arg8: memref<48x8xbf16, #tpu.memory_space<vmem>>, %arg9: memref<1x16x8xbf16, #tpu.memory_space<vmem>>) attributes {dimension_semantics = [#tpu.dimension_semantics<parallel>], iteration_bounds = array<i64: 2>, scalar_prefetch = 0 : i64, scratch_operands = 0 : i64, tpu.core_type = #tpu.core_type<tc>, window_params = [{transform_indices = @transform_0, window_bounds = array<i64: 1, 16, 16>}, {transform_indices = @transform_1, window_bounds = array<i64: 1, 16, 8>}, {pipeline_mode = #tpu.pipeline_mode<synchronous>, transform_indices = @transform_2, window_bounds = array<i64: 1, 24>}, {pipeline_mode = #tpu.pipeline_mode<synchronous>, transform_indices = @transform_3, window_bounds = array<i64: 1, 24>}, {pipeline_mode = #tpu.pipeline_mode<synchronous>, transform_indices = @transform_4, window_bounds = array<i64: 24, 16>}, {pipeline_mode = #tpu.pipeline_mode<synchronous>, transform_indices = @transform_5, window_bounds = array<i64: 1, 16>}, {pipeline_mode = #tpu.pipeline_mode<synchronous>, transform_indices = @transform_6, window_bounds = array<i64: 1, 16>}, {pipeline_mode = #tpu.pipeline_mode<synchronous>, transform_indices = @transform_7, window_bounds = array<i64: 48, 8>}, {transform_indices = @transform_8, window_bounds = array<i64: 1, 16, 8>}]} {
    %c0 = arith.constant 0 : index
    %c0_0 = arith.constant 0 : index
    %c0_1 = arith.constant 0 : index
    %0 = vector.load %arg1[%c0, %c0_0, %c0_1] : memref<1x16x16xbf16, #tpu.memory_space<vmem>>, vector<1x16x16xbf16>
    %1 = vector.shape_cast %0 : vector<1x16x16xbf16> to vector<16x16xbf16>
    %2 = arith.extf %1 : vector<16x16xbf16> to vector<16x16xf32>
    %c0_2 = arith.constant 0 : index
    %c0_3 = arith.constant 0 : index
    %c0_4 = arith.constant 0 : index
    %3 = vector.load %arg2[%c0_2, %c0_3, %c0_4] : memref<1x16x8xbf16, #tpu.memory_space<vmem>>, vector<1x16x8xbf16>
    %4 = vector.shape_cast %3 : vector<1x16x8xbf16> to vector<16x8xbf16>
    %5 = arith.extf %4 : vector<16x8xbf16> to vector<16x8xf32>
    %6 = tpu.concatenate %2, %5 in 1 : vector<16x16xf32>, vector<16x8xf32> -> vector<16x24xf32>
    %c0_5 = arith.constant 0 : index
    %c0_6 = arith.constant 0 : index
    %7 = vector.load %arg3[%c0_5, %c0_6] : memref<1x24xf32, #tpu.memory_space<vmem>>, vector<1x24xf32>
    %8 = vector.broadcast %7 : vector<1x24xf32> to vector<16x24xf32>
    %9 = arith.mulf %6, %8 : vector<16x24xf32>
    %c0_7 = arith.constant 0 : index
    %c0_8 = arith.constant 0 : index
    %10 = vector.load %arg4[%c0_7, %c0_8] : memref<1x24xf32, #tpu.memory_space<vmem>>, vector<1x24xf32>
    %11 = vector.broadcast %10 : vector<1x24xf32> to vector<16x24xf32>
    %12 = arith.addf %9, %11 : vector<16x24xf32>
    %cst = arith.constant 0.000000e+00 : f32
    %13 = vector.broadcast %cst : f32 to vector<16x24xf32>
    %14 = arith.maximumf %12, %13 : vector<16x24xf32>
    %15 = arith.truncf %14 : vector<16x24xf32> to vector<16x24xbf16>
    %c0_9 = arith.constant 0 : index
    %c0_10 = arith.constant 0 : index
    %16 = vector.load %arg5[%c0_9, %c0_10] : memref<24x16xbf16, #tpu.memory_space<vmem>>, vector<24x16xbf16>
    %cst_11 = arith.constant dense<0.000000e+00> : vector<16x16xf32>
    %17 = tpu.matmul %15, %16, %cst_11 {dimension_numbers = #tpu.dot_dimension_numbers<[1], [0], [0], [1], [0, 0, 1, 1], [], []>} : vector<16x24xbf16>, vector<24x16xbf16>, vector<16x16xf32> -> vector<16x16xf32>
    %c0_12 = arith.constant 0 : index
    %c0_13 = arith.constant 0 : index
    %18 = vector.load %arg6[%c0_12, %c0_13] : memref<1x16xf32, #tpu.memory_space<vmem>>, vector<1x16xf32>
    %19 = vector.broadcast %18 : vector<1x16xf32> to vector<16x16xf32>
    %20 = arith.mulf %17, %19 : vector<16x16xf32>
    %c0_14 = arith.constant 0 : index
    %c0_15 = arith.constant 0 : index
    %21 = vector.load %arg7[%c0_14, %c0_15] : memref<1x16xf32, #tpu.memory_space<vmem>>, vector<1x16xf32>
    %22 = vector.broadcast %21 : vector<1x16xf32> to vector<16x16xf32>
    %23 = arith.addf %20, %22 : vector<16x16xf32>
    %cst_16 = arith.constant 0.000000e+00 : f32
    %24 = vector.broadcast %cst_16 : f32 to vector<16x16xf32>
    %25 = arith.maximumf %23, %24 : vector<16x16xf32>
    %c1_i32 = arith.constant 1 : i32
    %26 = tpu.dynamic_rotate %25 by %c1_i32 dim 0 : vector<16x16xf32>, i32 -> vector<16x16xf32>
    %27 = tpu.iota {dimensions = array<i32: 0>} : vector<16x16xi32>
    %c1_i32_17 = arith.constant 1 : i32
    %28 = vector.broadcast %c1_i32_17 : i32 to vector<16x16xi32>
    %29 = arith.cmpi slt, %27, %28 : vector<16x16xi32>
    %cst_18 = arith.constant 0.000000e+00 : f32
    %30 = vector.broadcast %cst_18 : f32 to vector<16x16xf32>
    %31 = arith.select %29, %30, %26 : vector<16x16xi1>, vector<16x16xf32>
    %c15_i32 = arith.constant 15 : i32
    %32 = tpu.dynamic_rotate %25 by %c15_i32 dim 0 : vector<16x16xf32>, i32 -> vector<16x16xf32>
    %33 = tpu.iota {dimensions = array<i32: 0>} : vector<16x16xi32>
    %c15_i32_19 = arith.constant 15 : i32
    %34 = vector.broadcast %c15_i32_19 : i32 to vector<16x16xi32>
    %35 = arith.cmpi sge, %33, %34 : vector<16x16xi32>
    %cst_20 = arith.constant 0.000000e+00 : f32
    %36 = vector.broadcast %cst_20 : f32 to vector<16x16xf32>
    %37 = arith.select %35, %36, %32 : vector<16x16xi1>, vector<16x16xf32>
    %38 = tpu.concatenate %31, %25, %37 in 1 : vector<16x16xf32>, vector<16x16xf32>, vector<16x16xf32> -> vector<16x48xf32>
    %39 = arith.truncf %38 : vector<16x48xf32> to vector<16x48xbf16>
    %c0_21 = arith.constant 0 : index
    %c0_22 = arith.constant 0 : index
    %40 = vector.load %arg8[%c0_21, %c0_22] : memref<48x8xbf16, #tpu.memory_space<vmem>>, vector<48x8xbf16>
    %cst_23 = arith.constant dense<0.000000e+00> : vector<16x8xf32>
    %41 = tpu.matmul %39, %40, %cst_23 {dimension_numbers = #tpu.dot_dimension_numbers<[1], [0], [0], [1], [0, 0, 1, 1], [], []>} : vector<16x48xbf16>, vector<48x8xbf16>, vector<16x8xf32> -> vector<16x8xf32>
    %42 = arith.truncf %41 : vector<16x8xf32> to vector<16x8xbf16>
    %c0_24 = arith.constant 0 : index
    %c0_25 = arith.constant 0 : index
    %c0_26 = arith.constant 0 : index
    %43 = vector.load %arg9[%c0_24, %c0_25, %c0_26] : memref<1x16x8xbf16, #tpu.memory_space<vmem>>, vector<1x16x8xbf16>
    %44 = vector.shape_cast %43 : vector<1x16x8xbf16> to vector<16x8xbf16>
    %45 = vector.shape_cast %42 : vector<16x8xbf16> to vector<1x16x8xbf16>
    tpu.vector_store %arg9[%c0_24, %c0_25, %c0_26], %45 {strides = array<i32>} : memref<1x16x8xbf16, #tpu.memory_space<vmem>>, vector<1x16x8xbf16>,
    return
  }
  func.func @transform_0(%arg0: i32) -> (i32, i32, i32) {
    %c0_i32 = arith.constant 0 : i32
    %c0_i32_0 = arith.constant 0 : i32
    %c0_i32_1 = arith.constant 0 : i32
    return %arg0, %c0_i32, %c0_i32_0 : i32, i32, i32
  }
  func.func @transform_1(%arg0: i32) -> (i32, i32, i32) {
    %c0_i32 = arith.constant 0 : i32
    %c0_i32_0 = arith.constant 0 : i32
    %c0_i32_1 = arith.constant 0 : i32
    return %arg0, %c0_i32, %c0_i32_0 : i32, i32, i32
  }
  func.func @transform_2(%arg0: i32) -> (i32, i32) {
    %c0_i32 = arith.constant 0 : i32
    %c0_i32_0 = arith.constant 0 : i32
    %c0_i32_1 = arith.constant 0 : i32
    return %c0_i32, %c0_i32_0 : i32, i32
  }
  func.func @transform_3(%arg0: i32) -> (i32, i32) {
    %c0_i32 = arith.constant 0 : i32
    %c0_i32_0 = arith.constant 0 : i32
    %c0_i32_1 = arith.constant 0 : i32
    return %c0_i32, %c0_i32_0 : i32, i32
  }
  func.func @transform_4(%arg0: i32) -> (i32, i32) {
    %c0_i32 = arith.constant 0 : i32
    %c0_i32_0 = arith.constant 0 : i32
    %c0_i32_1 = arith.constant 0 : i32
    return %c0_i32, %c0_i32_0 : i32, i32
  }
  func.func @transform_5(%arg0: i32) -> (i32, i32) {
    %c0_i32 = arith.constant 0 : i32
    %c0_i32_0 = arith.constant 0 : i32
    %c0_i32_1 = arith.constant 0 : i32
    return %c0_i32, %c0_i32_0 : i32, i32
  }
  func.func @transform_6(%arg0: i32) -> (i32, i32) {
    %c0_i32 = arith.constant 0 : i32
    %c0_i32_0 = arith.constant 0 : i32
    %c0_i32_1 = arith.constant 0 : i32
    return %c0_i32, %c0_i32_0 : i32, i32
  }
  func.func @transform_7(%arg0: i32) -> (i32, i32) {
    %c0_i32 = arith.constant 0 : i32
    %c0_i32_0 = arith.constant 0 : i32
    %c0_i32_1 = arith.constant 0 : i32
    return %c0_i32, %c0_i32_0 : i32, i32
  }
  func.func @transform_8(%arg0: i32) -> (i32, i32, i32) {
    %c0_i32 = arith.constant 0 : i32
    %c0_i32_0 = arith.constant 0 : i32
    %c0_i32_1 = arith.constant 0 : i32
    return %arg0, %c0_i32, %c0_i32_0 : i32, i32, i32
  }
}

module attributes {stable_mosaic.version = 11 : i64} {
  func.func @kernel(%arg0: i32, %arg1: memref<1x8x16xbf16, #tpu.memory_space<vmem>>, %arg2: memref<1x8x8xbf16, #tpu.memory_space<vmem>>, %arg3: memref<1x8x8xbf16, #tpu.memory_space<vmem>>, %arg4: memref<1x8x16xbf16, #tpu.memory_space<vmem>>, %arg5: memref<1x8x8xbf16, #tpu.memory_space<vmem>>, %arg6: memref<1x8x8xbf16, #tpu.memory_space<vmem>>, %arg7: memref<1x32xf32, #tpu.memory_space<vmem>>, %arg8: memref<1x32xf32, #tpu.memory_space<vmem>>, %arg9: memref<32x16xbf16, #tpu.memory_space<vmem>>, %arg10: memref<1x8x16xbf16, #tpu.memory_space<vmem>>) attributes {dimension_semantics = [#tpu.dimension_semantics<parallel>], iteration_bounds = array<i64: 2>, scalar_prefetch = 0 : i64, scratch_operands = 0 : i64, tpu.core_type = #tpu.core_type<tc>, window_params = [{transform_indices = @transform_0, window_bounds = array<i64: 1, 8, 16>}, {transform_indices = @transform_1, window_bounds = array<i64: 1, 8, 8>}, {transform_indices = @transform_2, window_bounds = array<i64: 1, 8, 8>}, {transform_indices = @transform_3, window_bounds = array<i64: 1, 8, 16>}, {transform_indices = @transform_4, window_bounds = array<i64: 1, 8, 8>}, {transform_indices = @transform_5, window_bounds = array<i64: 1, 8, 8>}, {pipeline_mode = #tpu.pipeline_mode<synchronous>, transform_indices = @transform_6, window_bounds = array<i64: 1, 32>}, {pipeline_mode = #tpu.pipeline_mode<synchronous>, transform_indices = @transform_7, window_bounds = array<i64: 1, 32>}, {pipeline_mode = #tpu.pipeline_mode<synchronous>, transform_indices = @transform_8, window_bounds = array<i64: 32, 16>}, {transform_indices = @transform_9, window_bounds = array<i64: 1, 8, 16>}]} {
    %c0 = arith.constant 0 : index
    %c0_0 = arith.constant 0 : index
    %c0_1 = arith.constant 0 : index
    %0 = vector.load %arg1[%c0, %c0_0, %c0_1] : memref<1x8x16xbf16, #tpu.memory_space<vmem>>, vector<1x8x16xbf16>
    %1 = vector.shape_cast %0 : vector<1x8x16xbf16> to vector<8x16xbf16>
    %2 = arith.extf %1 : vector<8x16xbf16> to vector<8x16xf32>
    %c0_2 = arith.constant 0 : index
    %c0_3 = arith.constant 0 : index
    %c0_4 = arith.constant 0 : index
    %3 = vector.load %arg2[%c0_2, %c0_3, %c0_4] : memref<1x8x8xbf16, #tpu.memory_space<vmem>>, vector<1x8x8xbf16>
    %4 = vector.shape_cast %3 : vector<1x8x8xbf16> to vector<8x8xbf16>
    %5 = arith.extf %4 : vector<8x8xbf16> to vector<8x8xf32>
    %c0_5 = arith.constant 0 : index
    %c0_6 = arith.constant 0 : index
    %c0_7 = arith.constant 0 : index
    %6 = vector.load %arg3[%c0_5, %c0_6, %c0_7] : memref<1x8x8xbf16, #tpu.memory_space<vmem>>, vector<1x8x8xbf16>
    %7 = vector.shape_cast %6 : vector<1x8x8xbf16> to vector<8x8xbf16>
    %8 = arith.extf %7 : vector<8x8xbf16> to vector<8x8xf32>
    %9 = tpu.concatenate %2, %5, %8 in 1 : vector<8x16xf32>, vector<8x8xf32>, vector<8x8xf32> -> vector<8x32xf32>
    %c0_8 = arith.constant 0 : index
    %c0_9 = arith.constant 0 : index
    %c0_10 = arith.constant 0 : index
    %10 = vector.load %arg4[%c0_8, %c0_9, %c0_10] : memref<1x8x16xbf16, #tpu.memory_space<vmem>>, vector<1x8x16xbf16>
    %11 = vector.shape_cast %10 : vector<1x8x16xbf16> to vector<8x16xbf16>
    %12 = arith.extf %11 : vector<8x16xbf16> to vector<8x16xf32>
    %c0_11 = arith.constant 0 : index
    %c0_12 = arith.constant 0 : index
    %c0_13 = arith.constant 0 : index
    %13 = vector.load %arg5[%c0_11, %c0_12, %c0_13] : memref<1x8x8xbf16, #tpu.memory_space<vmem>>, vector<1x8x8xbf16>
    %14 = vector.shape_cast %13 : vector<1x8x8xbf16> to vector<8x8xbf16>
    %15 = arith.extf %14 : vector<8x8xbf16> to vector<8x8xf32>
    %c0_14 = arith.constant 0 : index
    %c0_15 = arith.constant 0 : index
    %c0_16 = arith.constant 0 : index
    %16 = vector.load %arg6[%c0_14, %c0_15, %c0_16] : memref<1x8x8xbf16, #tpu.memory_space<vmem>>, vector<1x8x8xbf16>
    %17 = vector.shape_cast %16 : vector<1x8x8xbf16> to vector<8x8xbf16>
    %18 = arith.extf %17 : vector<8x8xbf16> to vector<8x8xf32>
    %19 = tpu.concatenate %12, %15, %18 in 1 : vector<8x16xf32>, vector<8x8xf32>, vector<8x8xf32> -> vector<8x32xf32>
    %c0_17 = arith.constant 0 : index
    %c0_18 = arith.constant 0 : index
    %20 = vector.load %arg7[%c0_17, %c0_18] : memref<1x32xf32, #tpu.memory_space<vmem>>, vector<1x32xf32>
    %c0_19 = arith.constant 0 : index
    %c0_20 = arith.constant 0 : index
    %21 = vector.load %arg8[%c0_19, %c0_20] : memref<1x32xf32, #tpu.memory_space<vmem>>, vector<1x32xf32>
    %22 = vector.broadcast %20 : vector<1x32xf32> to vector<8x32xf32>
    %23 = arith.mulf %9, %22 : vector<8x32xf32>
    %24 = vector.broadcast %21 : vector<1x32xf32> to vector<8x32xf32>
    %25 = arith.addf %23, %24 : vector<8x32xf32>
    %cst = arith.constant 0.000000e+00 : f32
    %26 = vector.broadcast %cst : f32 to vector<8x32xf32>
    %27 = arith.maximumf %25, %26 : vector<8x32xf32>
    %28 = vector.broadcast %20 : vector<1x32xf32> to vector<8x32xf32>
    %29 = arith.mulf %19, %28 : vector<8x32xf32>
    %30 = vector.broadcast %21 : vector<1x32xf32> to vector<8x32xf32>
    %31 = arith.addf %29, %30 : vector<8x32xf32>
    %cst_21 = arith.constant 0.000000e+00 : f32
    %32 = vector.broadcast %cst_21 : f32 to vector<8x32xf32>
    %33 = arith.maximumf %31, %32 : vector<8x32xf32>
    %34 = arith.addf %27, %33 : vector<8x32xf32>
    %cst_22 = arith.constant 5.000000e-01 : f32
    %35 = vector.broadcast %cst_22 : f32 to vector<8x32xf32>
    %36 = arith.mulf %35, %34 : vector<8x32xf32>
    %37 = arith.truncf %36 : vector<8x32xf32> to vector<8x32xbf16>
    %c0_23 = arith.constant 0 : index
    %c0_24 = arith.constant 0 : index
    %38 = vector.load %arg9[%c0_23, %c0_24] : memref<32x16xbf16, #tpu.memory_space<vmem>>, vector<32x16xbf16>
    %cst_25 = arith.constant dense<0.000000e+00> : vector<8x16xf32>
    %39 = tpu.matmul %37, %38, %cst_25 {dimension_numbers = #tpu.dot_dimension_numbers<[1], [0], [0], [1], [0, 0, 1, 1], [], []>} : vector<8x32xbf16>, vector<32x16xbf16>, vector<8x16xf32> -> vector<8x16xf32>
    %40 = arith.truncf %39 : vector<8x16xf32> to vector<8x16xbf16>
    %c0_26 = arith.constant 0 : index
    %c0_27 = arith.constant 0 : index
    %c0_28 = arith.constant 0 : index
    %41 = vector.load %arg10[%c0_26, %c0_27, %c0_28] : memref<1x8x16xbf16, #tpu.memory_space<vmem>>, vector<1x8x16xbf16>
    %42 = vector.shape_cast %41 : vector<1x8x16xbf16> to vector<8x16xbf16>
    %43 = vector.shape_cast %40 : vector<8x16xbf16> to vector<1x8x16xbf16>
    tpu.vector_store %arg10[%c0_26, %c0_27, %c0_28], %43 {strides = array<i32>} : memref<1x8x16xbf16, #tpu.memory_space<vmem>>, vector<1x8x16xbf16>,
    return
  }
  func.func @transform_0(%arg0: i32) -> (i32, i32, i32) {
    %c0_i32 = arith.constant 0 : i32
    %c0_i32_0 = arith.constant 0 : i32
    %c0_i32_1 = arith.constant 0 : i32
    return %arg0, %c0_i32, %c0_i32_0 : i32, i32, i32
  }
  func.func @transform_1(%arg0: i32) -> (i32, i32, i32) {
    %c0_i32 = arith.constant 0 : i32
    %c0_i32_0 = arith.constant 0 : i32
    %c0_i32_1 = arith.constant 0 : i32
    return %arg0, %c0_i32, %c0_i32_0 : i32, i32, i32
  }
  func.func @transform_2(%arg0: i32) -> (i32, i32, i32) {
    %c0_i32 = arith.constant 0 : i32
    %c0_i32_0 = arith.constant 0 : i32
    %c0_i32_1 = arith.constant 0 : i32
    return %arg0, %c0_i32, %c0_i32_0 : i32, i32, i32
  }
  func.func @transform_3(%arg0: i32) -> (i32, i32, i32) {
    %c0_i32 = arith.constant 0 : i32
    %c0_i32_0 = arith.constant 0 : i32
    %c0_i32_1 = arith.constant 0 : i32
    return %arg0, %c0_i32, %c0_i32_0 : i32, i32, i32
  }
  func.func @transform_4(%arg0: i32) -> (i32, i32, i32) {
    %c0_i32 = arith.constant 0 : i32
    %c0_i32_0 = arith.constant 0 : i32
    %c0_i32_1 = arith.constant 0 : i32
    return %arg0, %c0_i32, %c0_i32_0 : i32, i32, i32
  }
  func.func @transform_5(%arg0: i32) -> (i32, i32, i32) {
    %c0_i32 = arith.constant 0 : i32
    %c0_i32_0 = arith.constant 0 : i32
    %c0_i32_1 = arith.constant 0 : i32
    return %arg0, %c0_i32, %c0_i32_0 : i32, i32, i32
  }
  func.func @transform_6(%arg0: i32) -> (i32, i32) {
    %c0_i32 = arith.constant 0 : i32
    %c0_i32_0 = arith.constant 0 : i32
    %c0_i32_1 = arith.constant 0 : i32
    return %c0_i32, %c0_i32_0 : i32, i32
  }
  func.func @transform_7(%arg0: i32) -> (i32, i32) {
    %c0_i32 = arith.constant 0 : i32
    %c0_i32_0 = arith.constant 0 : i32
    %c0_i32_1 = arith.constant 0 : i32
    return %c0_i32, %c0_i32_0 : i32, i32
  }
  func.func @transform_8(%arg0: i32) -> (i32, i32) {
    %c0_i32 = arith.constant 0 : i32
    %c0_i32_0 = arith.constant 0 : i32
    %c0_i32_1 = arith.constant 0 : i32
    return %c0_i32, %c0_i32_0 : i32, i32
  }
  func.func @transform_9(%arg0: i32) -> (i32, i32, i32) {
    %c0_i32 = arith.constant 0 : i32
    %c0_i32_0 = arith.constant 0 : i32
    %c0_i32_1 = arith.constant 0 : i32
    return %arg0, %c0_i32, %c0_i32_0 : i32, i32, i32
  }
}

module attributes {stable_mosaic.version = 11 : i64} {
  func.func @kernel(%arg0: i32, %arg1: memref<2x8x16xbf16, #tpu.memory_space<vmem>>, %arg2: memref<2x8x8xbf16, #tpu.memory_space<vmem>>, %arg3: memref<2x8x8xbf16, #tpu.memory_space<vmem>>, %arg4: memref<32x32xf32, #tpu.memory_space<vmem>>, %arg5: memref<1x32xf32, #tpu.memory_space<vmem>>, %arg6: memref<2x32xf32, #tpu.memory_space<vmem>>) attributes {dimension_semantics = [#tpu.dimension_semantics<parallel>], iteration_bounds = array<i64: 1>, scalar_prefetch = 0 : i64, scratch_operands = 0 : i64, tpu.core_type = #tpu.core_type<tc>, window_params = [{pipeline_mode = #tpu.pipeline_mode<synchronous>, transform_indices = @transform_0, window_bounds = array<i64: 2, 8, 16>}, {pipeline_mode = #tpu.pipeline_mode<synchronous>, transform_indices = @transform_1, window_bounds = array<i64: 2, 8, 8>}, {pipeline_mode = #tpu.pipeline_mode<synchronous>, transform_indices = @transform_2, window_bounds = array<i64: 2, 8, 8>}, {pipeline_mode = #tpu.pipeline_mode<synchronous>, transform_indices = @transform_3, window_bounds = array<i64: 32, 32>}, {pipeline_mode = #tpu.pipeline_mode<synchronous>, transform_indices = @transform_4, window_bounds = array<i64: 1, 32>}, {pipeline_mode = #tpu.pipeline_mode<synchronous>, transform_indices = @transform_5, window_bounds = array<i64: 2, 32>}]} {
    %c0 = arith.constant 0 : index
    %c0_0 = arith.constant 0 : index
    %c0_1 = arith.constant 0 : index
    %0 = vector.load %arg1[%c0, %c0_0, %c0_1] : memref<2x8x16xbf16, #tpu.memory_space<vmem>>, vector<2x8x16xbf16>
    %1 = arith.extf %0 : vector<2x8x16xbf16> to vector<2x8x16xf32>
    %cst = arith.constant 0.000000e+00 : f32
    %2 = vector.broadcast %cst : f32 to vector<2x8x16xf32>
    %3 = arith.maximumf %1, %2 : vector<2x8x16xf32>
    %cst_2 = arith.constant dense<0.000000e+00> : vector<2x16xf32>
    %4 = vector.multi_reduction <add>, %3, %cst_2 [1] : vector<2x8x16xf32> to vector<2x16xf32>
    %cst_3 = arith.constant 8.000000e+00 : f32
    %5 = vector.broadcast %cst_3 : f32 to vector<2x16xf32>
    %6 = arith.divf %4, %5 : vector<2x16xf32>
    %c0_4 = arith.constant 0 : index
    %c0_5 = arith.constant 0 : index
    %c0_6 = arith.constant 0 : index
    %7 = vector.load %arg2[%c0_4, %c0_5, %c0_6] : memref<2x8x8xbf16, #tpu.memory_space<vmem>>, vector<2x8x8xbf16>
    %8 = arith.extf %7 : vector<2x8x8xbf16> to vector<2x8x8xf32>
    %cst_7 = arith.constant 0.000000e+00 : f32
    %9 = vector.broadcast %cst_7 : f32 to vector<2x8x8xf32>
    %10 = arith.maximumf %8, %9 : vector<2x8x8xf32>
    %cst_8 = arith.constant dense<0.000000e+00> : vector<2x8xf32>
    %11 = vector.multi_reduction <add>, %10, %cst_8 [1] : vector<2x8x8xf32> to vector<2x8xf32>
    %cst_9 = arith.constant 8.000000e+00 : f32
    %12 = vector.broadcast %cst_9 : f32 to vector<2x8xf32>
    %13 = arith.divf %11, %12 : vector<2x8xf32>
    %c0_10 = arith.constant 0 : index
    %c0_11 = arith.constant 0 : index
    %c0_12 = arith.constant 0 : index
    %14 = vector.load %arg3[%c0_10, %c0_11, %c0_12] : memref<2x8x8xbf16, #tpu.memory_space<vmem>>, vector<2x8x8xbf16>
    %15 = arith.extf %14 : vector<2x8x8xbf16> to vector<2x8x8xf32>
    %cst_13 = arith.constant 0.000000e+00 : f32
    %16 = vector.broadcast %cst_13 : f32 to vector<2x8x8xf32>
    %17 = arith.maximumf %15, %16 : vector<2x8x8xf32>
    %cst_14 = arith.constant dense<0.000000e+00> : vector<2x8xf32>
    %18 = vector.multi_reduction <add>, %17, %cst_14 [1] : vector<2x8x8xf32> to vector<2x8xf32>
    %cst_15 = arith.constant 8.000000e+00 : f32
    %19 = vector.broadcast %cst_15 : f32 to vector<2x8xf32>
    %20 = arith.divf %18, %19 : vector<2x8xf32>
    %21 = tpu.concatenate %6, %13, %20 in 1 : vector<2x16xf32>, vector<2x8xf32>, vector<2x8xf32> -> vector<2x32xf32>
    %c0_16 = arith.constant 0 : index
    %c0_17 = arith.constant 0 : index
    %22 = vector.load %arg4[%c0_16, %c0_17] : memref<32x32xf32, #tpu.memory_space<vmem>>, vector<32x32xf32>
    %cst_18 = arith.constant dense<0.000000e+00> : vector<2x32xf32>
    %23 = tpu.matmul %21, %22, %cst_18 {dimension_numbers = #tpu.dot_dimension_numbers<[1], [0], [0], [1], [0, 0, 1, 1], [], []>} : vector<2x32xf32>, vector<32x32xf32>, vector<2x32xf32> -> vector<2x32xf32>
    %c0_19 = arith.constant 0 : index
    %c0_20 = arith.constant 0 : index
    %24 = vector.load %arg5[%c0_19, %c0_20] : memref<1x32xf32, #tpu.memory_space<vmem>>, vector<1x32xf32>
    %25 = vector.broadcast %24 : vector<1x32xf32> to vector<2x32xf32>
    %26 = arith.addf %23, %25 : vector<2x32xf32>
    %c0_21 = arith.constant 0 : index
    %c0_22 = arith.constant 0 : index
    %27 = vector.load %arg6[%c0_21, %c0_22] : memref<2x32xf32, #tpu.memory_space<vmem>>, vector<2x32xf32>
    tpu.vector_store %arg6[%c0_21, %c0_22], %26 {strides = array<i32>} : memref<2x32xf32, #tpu.memory_space<vmem>>, vector<2x32xf32>,
    return
  }
  func.func @transform_0(%arg0: i32) -> (i32, i32, i32) {
    %c0_i32 = arith.constant 0 : i32
    %c0_i32_0 = arith.constant 0 : i32
    %c0_i32_1 = arith.constant 0 : i32
    %c0_i32_2 = arith.constant 0 : i32
    return %c0_i32, %c0_i32_0, %c0_i32_1 : i32, i32, i32
  }
  func.func @transform_1(%arg0: i32) -> (i32, i32, i32) {
    %c0_i32 = arith.constant 0 : i32
    %c0_i32_0 = arith.constant 0 : i32
    %c0_i32_1 = arith.constant 0 : i32
    %c0_i32_2 = arith.constant 0 : i32
    return %c0_i32, %c0_i32_0, %c0_i32_1 : i32, i32, i32
  }
  func.func @transform_2(%arg0: i32) -> (i32, i32, i32) {
    %c0_i32 = arith.constant 0 : i32
    %c0_i32_0 = arith.constant 0 : i32
    %c0_i32_1 = arith.constant 0 : i32
    %c0_i32_2 = arith.constant 0 : i32
    return %c0_i32, %c0_i32_0, %c0_i32_1 : i32, i32, i32
  }
  func.func @transform_3(%arg0: i32) -> (i32, i32) {
    %c0_i32 = arith.constant 0 : i32
    %c0_i32_0 = arith.constant 0 : i32
    %c0_i32_1 = arith.constant 0 : i32
    return %c0_i32, %c0_i32_0 : i32, i32
  }
  func.func @transform_4(%arg0: i32) -> (i32, i32) {
    %c0_i32 = arith.constant 0 : i32
    %c0_i32_0 = arith.constant 0 : i32
    %c0_i32_1 = arith.constant 0 : i32
    return %c0_i32, %c0_i32_0 : i32, i32
  }
  func.func @transform_5(%arg0: i32) -> (i32, i32) {
    %c0_i32 = arith.constant 0 : i32
    %c0_i32_0 = arith.constant 0 : i32
    %c0_i32_1 = arith.constant 0 : i32
    return %c0_i32, %c0_i32_0 : i32, i32
  }
}

module attributes {stable_mosaic.version = 11 : i64} {
  func.func @kernel(%arg0: i32, %arg1: memref<1x8x16xbf16, #tpu.memory_space<vmem>>, %arg2: memref<1x8x8xbf16, #tpu.memory_space<vmem>>, %arg3: memref<1x24xf32, #tpu.memory_space<vmem>>, %arg4: memref<1x24xf32, #tpu.memory_space<vmem>>, %arg5: memref<24x16xbf16, #tpu.memory_space<vmem>>, %arg6: memref<1x16xf32, #tpu.memory_space<vmem>>, %arg7: memref<1x16xf32, #tpu.memory_space<vmem>>, %arg8: memref<48x8xbf16, #tpu.memory_space<vmem>>, %arg9: memref<1x8x8xbf16, #tpu.memory_space<vmem>>) attributes {dimension_semantics = [#tpu.dimension_semantics<parallel>], iteration_bounds = array<i64: 2>, scalar_prefetch = 0 : i64, scratch_operands = 0 : i64, tpu.core_type = #tpu.core_type<tc>, window_params = [{transform_indices = @transform_0, window_bounds = array<i64: 1, 8, 16>}, {transform_indices = @transform_1, window_bounds = array<i64: 1, 8, 8>}, {pipeline_mode = #tpu.pipeline_mode<synchronous>, transform_indices = @transform_2, window_bounds = array<i64: 1, 24>}, {pipeline_mode = #tpu.pipeline_mode<synchronous>, transform_indices = @transform_3, window_bounds = array<i64: 1, 24>}, {pipeline_mode = #tpu.pipeline_mode<synchronous>, transform_indices = @transform_4, window_bounds = array<i64: 24, 16>}, {pipeline_mode = #tpu.pipeline_mode<synchronous>, transform_indices = @transform_5, window_bounds = array<i64: 1, 16>}, {pipeline_mode = #tpu.pipeline_mode<synchronous>, transform_indices = @transform_6, window_bounds = array<i64: 1, 16>}, {pipeline_mode = #tpu.pipeline_mode<synchronous>, transform_indices = @transform_7, window_bounds = array<i64: 48, 8>}, {transform_indices = @transform_8, window_bounds = array<i64: 1, 8, 8>}]} {
    %c0 = arith.constant 0 : index
    %c0_0 = arith.constant 0 : index
    %c0_1 = arith.constant 0 : index
    %0 = vector.load %arg1[%c0, %c0_0, %c0_1] : memref<1x8x16xbf16, #tpu.memory_space<vmem>>, vector<1x8x16xbf16>
    %1 = vector.shape_cast %0 : vector<1x8x16xbf16> to vector<8x16xbf16>
    %2 = arith.extf %1 : vector<8x16xbf16> to vector<8x16xf32>
    %c0_2 = arith.constant 0 : index
    %c0_3 = arith.constant 0 : index
    %c0_4 = arith.constant 0 : index
    %3 = vector.load %arg2[%c0_2, %c0_3, %c0_4] : memref<1x8x8xbf16, #tpu.memory_space<vmem>>, vector<1x8x8xbf16>
    %4 = vector.shape_cast %3 : vector<1x8x8xbf16> to vector<8x8xbf16>
    %5 = arith.extf %4 : vector<8x8xbf16> to vector<8x8xf32>
    %6 = tpu.concatenate %2, %5 in 1 : vector<8x16xf32>, vector<8x8xf32> -> vector<8x24xf32>
    %c0_5 = arith.constant 0 : index
    %c0_6 = arith.constant 0 : index
    %7 = vector.load %arg3[%c0_5, %c0_6] : memref<1x24xf32, #tpu.memory_space<vmem>>, vector<1x24xf32>
    %8 = vector.broadcast %7 : vector<1x24xf32> to vector<8x24xf32>
    %9 = arith.mulf %6, %8 : vector<8x24xf32>
    %c0_7 = arith.constant 0 : index
    %c0_8 = arith.constant 0 : index
    %10 = vector.load %arg4[%c0_7, %c0_8] : memref<1x24xf32, #tpu.memory_space<vmem>>, vector<1x24xf32>
    %11 = vector.broadcast %10 : vector<1x24xf32> to vector<8x24xf32>
    %12 = arith.addf %9, %11 : vector<8x24xf32>
    %cst = arith.constant 0.000000e+00 : f32
    %13 = vector.broadcast %cst : f32 to vector<8x24xf32>
    %14 = arith.maximumf %12, %13 : vector<8x24xf32>
    %15 = arith.truncf %14 : vector<8x24xf32> to vector<8x24xbf16>
    %c0_9 = arith.constant 0 : index
    %c0_10 = arith.constant 0 : index
    %16 = vector.load %arg5[%c0_9, %c0_10] : memref<24x16xbf16, #tpu.memory_space<vmem>>, vector<24x16xbf16>
    %cst_11 = arith.constant dense<0.000000e+00> : vector<8x16xf32>
    %17 = tpu.matmul %15, %16, %cst_11 {dimension_numbers = #tpu.dot_dimension_numbers<[1], [0], [0], [1], [0, 0, 1, 1], [], []>} : vector<8x24xbf16>, vector<24x16xbf16>, vector<8x16xf32> -> vector<8x16xf32>
    %c0_12 = arith.constant 0 : index
    %c0_13 = arith.constant 0 : index
    %18 = vector.load %arg6[%c0_12, %c0_13] : memref<1x16xf32, #tpu.memory_space<vmem>>, vector<1x16xf32>
    %19 = vector.broadcast %18 : vector<1x16xf32> to vector<8x16xf32>
    %20 = arith.mulf %17, %19 : vector<8x16xf32>
    %c0_14 = arith.constant 0 : index
    %c0_15 = arith.constant 0 : index
    %21 = vector.load %arg7[%c0_14, %c0_15] : memref<1x16xf32, #tpu.memory_space<vmem>>, vector<1x16xf32>
    %22 = vector.broadcast %21 : vector<1x16xf32> to vector<8x16xf32>
    %23 = arith.addf %20, %22 : vector<8x16xf32>
    %cst_16 = arith.constant 0.000000e+00 : f32
    %24 = vector.broadcast %cst_16 : f32 to vector<8x16xf32>
    %25 = arith.maximumf %23, %24 : vector<8x16xf32>
    %c1_i32 = arith.constant 1 : i32
    %26 = tpu.dynamic_rotate %25 by %c1_i32 dim 0 : vector<8x16xf32>, i32 -> vector<8x16xf32>
    %27 = tpu.iota {dimensions = array<i32: 0>} : vector<8x16xi32>
    %c1_i32_17 = arith.constant 1 : i32
    %28 = vector.broadcast %c1_i32_17 : i32 to vector<8x16xi32>
    %29 = arith.cmpi slt, %27, %28 : vector<8x16xi32>
    %cst_18 = arith.constant 0.000000e+00 : f32
    %30 = vector.broadcast %cst_18 : f32 to vector<8x16xf32>
    %31 = arith.select %29, %30, %26 : vector<8x16xi1>, vector<8x16xf32>
    %c7_i32 = arith.constant 7 : i32
    %32 = tpu.dynamic_rotate %25 by %c7_i32 dim 0 : vector<8x16xf32>, i32 -> vector<8x16xf32>
    %33 = tpu.iota {dimensions = array<i32: 0>} : vector<8x16xi32>
    %c7_i32_19 = arith.constant 7 : i32
    %34 = vector.broadcast %c7_i32_19 : i32 to vector<8x16xi32>
    %35 = arith.cmpi sge, %33, %34 : vector<8x16xi32>
    %cst_20 = arith.constant 0.000000e+00 : f32
    %36 = vector.broadcast %cst_20 : f32 to vector<8x16xf32>
    %37 = arith.select %35, %36, %32 : vector<8x16xi1>, vector<8x16xf32>
    %38 = tpu.concatenate %31, %25, %37 in 1 : vector<8x16xf32>, vector<8x16xf32>, vector<8x16xf32> -> vector<8x48xf32>
    %39 = arith.truncf %38 : vector<8x48xf32> to vector<8x48xbf16>
    %c0_21 = arith.constant 0 : index
    %c0_22 = arith.constant 0 : index
    %40 = vector.load %arg8[%c0_21, %c0_22] : memref<48x8xbf16, #tpu.memory_space<vmem>>, vector<48x8xbf16>
    %cst_23 = arith.constant dense<0.000000e+00> : vector<8x8xf32>
    %41 = tpu.matmul %39, %40, %cst_23 {dimension_numbers = #tpu.dot_dimension_numbers<[1], [0], [0], [1], [0, 0, 1, 1], [], []>} : vector<8x48xbf16>, vector<48x8xbf16>, vector<8x8xf32> -> vector<8x8xf32>
    %42 = arith.truncf %41 : vector<8x8xf32> to vector<8x8xbf16>
    %c0_24 = arith.constant 0 : index
    %c0_25 = arith.constant 0 : index
    %c0_26 = arith.constant 0 : index
    %43 = vector.load %arg9[%c0_24, %c0_25, %c0_26] : memref<1x8x8xbf16, #tpu.memory_space<vmem>>, vector<1x8x8xbf16>
    %44 = vector.shape_cast %43 : vector<1x8x8xbf16> to vector<8x8xbf16>
    %45 = vector.shape_cast %42 : vector<8x8xbf16> to vector<1x8x8xbf16>
    tpu.vector_store %arg9[%c0_24, %c0_25, %c0_26], %45 {strides = array<i32>} : memref<1x8x8xbf16, #tpu.memory_space<vmem>>, vector<1x8x8xbf16>,
    return
  }
  func.func @transform_0(%arg0: i32) -> (i32, i32, i32) {
    %c0_i32 = arith.constant 0 : i32
    %c0_i32_0 = arith.constant 0 : i32
    %c0_i32_1 = arith.constant 0 : i32
    return %arg0, %c0_i32, %c0_i32_0 : i32, i32, i32
  }
  func.func @transform_1(%arg0: i32) -> (i32, i32, i32) {
    %c0_i32 = arith.constant 0 : i32
    %c0_i32_0 = arith.constant 0 : i32
    %c0_i32_1 = arith.constant 0 : i32
    return %arg0, %c0_i32, %c0_i32_0 : i32, i32, i32
  }
  func.func @transform_2(%arg0: i32) -> (i32, i32) {
    %c0_i32 = arith.constant 0 : i32
    %c0_i32_0 = arith.constant 0 : i32
    %c0_i32_1 = arith.constant 0 : i32
    return %c0_i32, %c0_i32_0 : i32, i32
  }
  func.func @transform_3(%arg0: i32) -> (i32, i32) {
    %c0_i32 = arith.constant 0 : i32
    %c0_i32_0 = arith.constant 0 : i32
    %c0_i32_1 = arith.constant 0 : i32
    return %c0_i32, %c0_i32_0 : i32, i32
  }
  func.func @transform_4(%arg0: i32) -> (i32, i32) {
    %c0_i32 = arith.constant 0 : i32
    %c0_i32_0 = arith.constant 0 : i32
    %c0_i32_1 = arith.constant 0 : i32
    return %c0_i32, %c0_i32_0 : i32, i32
  }
  func.func @transform_5(%arg0: i32) -> (i32, i32) {
    %c0_i32 = arith.constant 0 : i32
    %c0_i32_0 = arith.constant 0 : i32
    %c0_i32_1 = arith.constant 0 : i32
    return %c0_i32, %c0_i32_0 : i32, i32
  }
  func.func @transform_6(%arg0: i32) -> (i32, i32) {
    %c0_i32 = arith.constant 0 : i32
    %c0_i32_0 = arith.constant 0 : i32
    %c0_i32_1 = arith.constant 0 : i32
    return %c0_i32, %c0_i32_0 : i32, i32
  }
  func.func @transform_7(%arg0: i32) -> (i32, i32) {
    %c0_i32 = arith.constant 0 : i32
    %c0_i32_0 = arith.constant 0 : i32
    %c0_i32_1 = arith.constant 0 : i32
    return %c0_i32, %c0_i32_0 : i32, i32
  }
  func.func @transform_8(%arg0: i32) -> (i32, i32, i32) {
    %c0_i32 = arith.constant 0 : i32
    %c0_i32_0 = arith.constant 0 : i32
    %c0_i32_1 = arith.constant 0 : i32
    return %arg0, %c0_i32, %c0_i32_0 : i32, i32, i32
  }
}

module attributes {stable_mosaic.version = 11 : i64} {
  func.func @kernel(%arg0: i32, %arg1: memref<1x8x16xbf16, #tpu.memory_space<vmem>>, %arg2: memref<1x16xf32, #tpu.memory_space<vmem>>, %arg3: memref<1x16xf32, #tpu.memory_space<vmem>>, %arg4: memref<16x16xbf16, #tpu.memory_space<vmem>>, %arg5: memref<1x16xf32, #tpu.memory_space<vmem>>, %arg6: memref<1x16xf32, #tpu.memory_space<vmem>>, %arg7: memref<48x8xbf16, #tpu.memory_space<vmem>>, %arg8: memref<1x8x8xbf16, #tpu.memory_space<vmem>>) attributes {dimension_semantics = [#tpu.dimension_semantics<parallel>], iteration_bounds = array<i64: 2>, scalar_prefetch = 0 : i64, scratch_operands = 0 : i64, tpu.core_type = #tpu.core_type<tc>, window_params = [{transform_indices = @transform_0, window_bounds = array<i64: 1, 8, 16>}, {pipeline_mode = #tpu.pipeline_mode<synchronous>, transform_indices = @transform_1, window_bounds = array<i64: 1, 16>}, {pipeline_mode = #tpu.pipeline_mode<synchronous>, transform_indices = @transform_2, window_bounds = array<i64: 1, 16>}, {pipeline_mode = #tpu.pipeline_mode<synchronous>, transform_indices = @transform_3, window_bounds = array<i64: 16, 16>}, {pipeline_mode = #tpu.pipeline_mode<synchronous>, transform_indices = @transform_4, window_bounds = array<i64: 1, 16>}, {pipeline_mode = #tpu.pipeline_mode<synchronous>, transform_indices = @transform_5, window_bounds = array<i64: 1, 16>}, {pipeline_mode = #tpu.pipeline_mode<synchronous>, transform_indices = @transform_6, window_bounds = array<i64: 48, 8>}, {transform_indices = @transform_7, window_bounds = array<i64: 1, 8, 8>}]} {
    %c0 = arith.constant 0 : index
    %c0_0 = arith.constant 0 : index
    %c0_1 = arith.constant 0 : index
    %0 = vector.load %arg1[%c0, %c0_0, %c0_1] : memref<1x8x16xbf16, #tpu.memory_space<vmem>>, vector<1x8x16xbf16>
    %1 = vector.shape_cast %0 : vector<1x8x16xbf16> to vector<8x16xbf16>
    %2 = arith.extf %1 : vector<8x16xbf16> to vector<8x16xf32>
    %c0_2 = arith.constant 0 : index
    %c0_3 = arith.constant 0 : index
    %3 = vector.load %arg2[%c0_2, %c0_3] : memref<1x16xf32, #tpu.memory_space<vmem>>, vector<1x16xf32>
    %4 = vector.broadcast %3 : vector<1x16xf32> to vector<8x16xf32>
    %5 = arith.mulf %2, %4 : vector<8x16xf32>
    %c0_4 = arith.constant 0 : index
    %c0_5 = arith.constant 0 : index
    %6 = vector.load %arg3[%c0_4, %c0_5] : memref<1x16xf32, #tpu.memory_space<vmem>>, vector<1x16xf32>
    %7 = vector.broadcast %6 : vector<1x16xf32> to vector<8x16xf32>
    %8 = arith.addf %5, %7 : vector<8x16xf32>
    %cst = arith.constant 0.000000e+00 : f32
    %9 = vector.broadcast %cst : f32 to vector<8x16xf32>
    %10 = arith.maximumf %8, %9 : vector<8x16xf32>
    %11 = arith.truncf %10 : vector<8x16xf32> to vector<8x16xbf16>
    %c0_6 = arith.constant 0 : index
    %c0_7 = arith.constant 0 : index
    %12 = vector.load %arg4[%c0_6, %c0_7] : memref<16x16xbf16, #tpu.memory_space<vmem>>, vector<16x16xbf16>
    %cst_8 = arith.constant dense<0.000000e+00> : vector<8x16xf32>
    %13 = tpu.matmul %11, %12, %cst_8 {dimension_numbers = #tpu.dot_dimension_numbers<[1], [0], [0], [1], [0, 0, 1, 1], [], []>} : vector<8x16xbf16>, vector<16x16xbf16>, vector<8x16xf32> -> vector<8x16xf32>
    %c0_9 = arith.constant 0 : index
    %c0_10 = arith.constant 0 : index
    %14 = vector.load %arg5[%c0_9, %c0_10] : memref<1x16xf32, #tpu.memory_space<vmem>>, vector<1x16xf32>
    %15 = vector.broadcast %14 : vector<1x16xf32> to vector<8x16xf32>
    %16 = arith.mulf %13, %15 : vector<8x16xf32>
    %c0_11 = arith.constant 0 : index
    %c0_12 = arith.constant 0 : index
    %17 = vector.load %arg6[%c0_11, %c0_12] : memref<1x16xf32, #tpu.memory_space<vmem>>, vector<1x16xf32>
    %18 = vector.broadcast %17 : vector<1x16xf32> to vector<8x16xf32>
    %19 = arith.addf %16, %18 : vector<8x16xf32>
    %cst_13 = arith.constant 0.000000e+00 : f32
    %20 = vector.broadcast %cst_13 : f32 to vector<8x16xf32>
    %21 = arith.maximumf %19, %20 : vector<8x16xf32>
    %c1_i32 = arith.constant 1 : i32
    %22 = tpu.dynamic_rotate %21 by %c1_i32 dim 0 : vector<8x16xf32>, i32 -> vector<8x16xf32>
    %23 = tpu.iota {dimensions = array<i32: 0>} : vector<8x16xi32>
    %c1_i32_14 = arith.constant 1 : i32
    %24 = vector.broadcast %c1_i32_14 : i32 to vector<8x16xi32>
    %25 = arith.cmpi slt, %23, %24 : vector<8x16xi32>
    %cst_15 = arith.constant 0.000000e+00 : f32
    %26 = vector.broadcast %cst_15 : f32 to vector<8x16xf32>
    %27 = arith.select %25, %26, %22 : vector<8x16xi1>, vector<8x16xf32>
    %c7_i32 = arith.constant 7 : i32
    %28 = tpu.dynamic_rotate %21 by %c7_i32 dim 0 : vector<8x16xf32>, i32 -> vector<8x16xf32>
    %29 = tpu.iota {dimensions = array<i32: 0>} : vector<8x16xi32>
    %c7_i32_16 = arith.constant 7 : i32
    %30 = vector.broadcast %c7_i32_16 : i32 to vector<8x16xi32>
    %31 = arith.cmpi sge, %29, %30 : vector<8x16xi32>
    %cst_17 = arith.constant 0.000000e+00 : f32
    %32 = vector.broadcast %cst_17 : f32 to vector<8x16xf32>
    %33 = arith.select %31, %32, %28 : vector<8x16xi1>, vector<8x16xf32>
    %34 = tpu.concatenate %27, %21, %33 in 1 : vector<8x16xf32>, vector<8x16xf32>, vector<8x16xf32> -> vector<8x48xf32>
    %35 = arith.truncf %34 : vector<8x48xf32> to vector<8x48xbf16>
    %c0_18 = arith.constant 0 : index
    %c0_19 = arith.constant 0 : index
    %36 = vector.load %arg7[%c0_18, %c0_19] : memref<48x8xbf16, #tpu.memory_space<vmem>>, vector<48x8xbf16>
    %cst_20 = arith.constant dense<0.000000e+00> : vector<8x8xf32>
    %37 = tpu.matmul %35, %36, %cst_20 {dimension_numbers = #tpu.dot_dimension_numbers<[1], [0], [0], [1], [0, 0, 1, 1], [], []>} : vector<8x48xbf16>, vector<48x8xbf16>, vector<8x8xf32> -> vector<8x8xf32>
    %38 = arith.truncf %37 : vector<8x8xf32> to vector<8x8xbf16>
    %c0_21 = arith.constant 0 : index
    %c0_22 = arith.constant 0 : index
    %c0_23 = arith.constant 0 : index
    %39 = vector.load %arg8[%c0_21, %c0_22, %c0_23] : memref<1x8x8xbf16, #tpu.memory_space<vmem>>, vector<1x8x8xbf16>
    %40 = vector.shape_cast %39 : vector<1x8x8xbf16> to vector<8x8xbf16>
    %41 = vector.shape_cast %38 : vector<8x8xbf16> to vector<1x8x8xbf16>
    tpu.vector_store %arg8[%c0_21, %c0_22, %c0_23], %41 {strides = array<i32>} : memref<1x8x8xbf16, #tpu.memory_space<vmem>>, vector<1x8x8xbf16>,
    return
  }
  func.func @transform_0(%arg0: i32) -> (i32, i32, i32) {
    %c0_i32 = arith.constant 0 : i32
    %c0_i32_0 = arith.constant 0 : i32
    %c0_i32_1 = arith.constant 0 : i32
    return %arg0, %c0_i32, %c0_i32_0 : i32, i32, i32
  }
  func.func @transform_1(%arg0: i32) -> (i32, i32) {
    %c0_i32 = arith.constant 0 : i32
    %c0_i32_0 = arith.constant 0 : i32
    %c0_i32_1 = arith.constant 0 : i32
    return %c0_i32, %c0_i32_0 : i32, i32
  }
  func.func @transform_2(%arg0: i32) -> (i32, i32) {
    %c0_i32 = arith.constant 0 : i32
    %c0_i32_0 = arith.constant 0 : i32
    %c0_i32_1 = arith.constant 0 : i32
    return %c0_i32, %c0_i32_0 : i32, i32
  }
  func.func @transform_3(%arg0: i32) -> (i32, i32) {
    %c0_i32 = arith.constant 0 : i32
    %c0_i32_0 = arith.constant 0 : i32
    %c0_i32_1 = arith.constant 0 : i32
    return %c0_i32, %c0_i32_0 : i32, i32
  }
  func.func @transform_4(%arg0: i32) -> (i32, i32) {
    %c0_i32 = arith.constant 0 : i32
    %c0_i32_0 = arith.constant 0 : i32
    %c0_i32_1 = arith.constant 0 : i32
    return %c0_i32, %c0_i32_0 : i32, i32
  }
  func.func @transform_5(%arg0: i32) -> (i32, i32) {
    %c0_i32 = arith.constant 0 : i32
    %c0_i32_0 = arith.constant 0 : i32
    %c0_i32_1 = arith.constant 0 : i32
    return %c0_i32, %c0_i32_0 : i32, i32
  }
  func.func @transform_6(%arg0: i32) -> (i32, i32) {
    %c0_i32 = arith.constant 0 : i32
    %c0_i32_0 = arith.constant 0 : i32
    %c0_i32_1 = arith.constant 0 : i32
    return %c0_i32, %c0_i32_0 : i32, i32
  }
  func.func @transform_7(%arg0: i32) -> (i32, i32, i32) {
    %c0_i32 = arith.constant 0 : i32
    %c0_i32_0 = arith.constant 0 : i32
    %c0_i32_1 = arith.constant 0 : i32
    return %arg0, %c0_i32, %c0_i32_0 : i32, i32, i32
  }
}

</mosaic_0001>

<llo_original>
// kernel: densenet_forward.9
$region0: #{densenet_forward.9}
  #allocation0 [shape = 'u32[]', space=smem, size = 0x4, offset = 0x4, fixed_abs, tag = 'smem constant byte address 0x4 - core index']
  #allocation1 [shape = 'u32[144,128]{1,0:T(1,128)}', space=vmem, size = 0x12000, scoped, tag = 'internal scratch']
  %s0 = inlined_call_operand.vmem [shape: bf16[2,16,16], index: 0, kind: input, shape index: {}]
  %s1 = inlined_call_operand.vmem [shape: bf16[2,16,8], index: 1, kind: input, shape index: {}]
  %s2 = inlined_call_operand.vmem [shape: f32[1,24], index: 2, kind: input, shape index: {}]
  %s3 = inlined_call_operand.vmem [shape: f32[1,24], index: 3, kind: input, shape index: {}]
  %s4 = inlined_call_operand.vmem [shape: bf16[24,16], index: 4, kind: input, shape index: {}]
  %s5 = inlined_call_operand.vmem [shape: f32[1,16], index: 5, kind: input, shape index: {}]
  %s6 = inlined_call_operand.vmem [shape: f32[1,16], index: 6, kind: input, shape index: {}]
  %s7 = inlined_call_operand.vmem [shape: bf16[48,8], index: 7, kind: input, shape index: {}]
  %s8 = inlined_call_operand.vmem [shape: bf16[2,16,8], index: 8, kind: output, shape index: {}]
  %s9 = sld [smem:[#allocation0]]
  $region65: #{densenet_forward.9} parent=0
    _
  %s11 = ssub.s32 1, %s9
  %s12 = scalar_select 0, %s11, %s9
  loop: start=0, step=1, limit=4
  $region2: #{densenet_forward.9} parent=0 // loop_pre_header
    _
  $region3: #{densenet_forward.9} parent=0 // loop_header
    %s14 = sphi 0, %s18
    %p15 = scmp.ge.s32.totalorder %s14, 4
    %s24 = sphi 0, %s26
    %s27 = sphi 0, %s24
    %s28 = sphi 0, %s27
    %s44 = sphi 0, %s28
    %s50 = sphi 0, %s52
    %s53 = sphi 0, %s50
    %s54 = sphi 0, %s53
    %s70 = sphi 0, %s54
    %s74 = sphi 0, %s74
    %s76 = sphi 0, %s74
    %s77 = sphi 0, %s76
    %s91 = sphi 0, %s77
    %s95 = sphi 0, %s95
    %s97 = sphi 0, %s95
    %s98 = sphi 0, %s97
    %s112 = sphi 0, %s98
    %s116 = sphi 0, %s116
    %s118 = sphi 0, %s116
    %s119 = sphi 0, %s118
    %s133 = sphi 0, %s119
    %s137 = sphi 0, %s137
    %s139 = sphi 0, %s137
    %s140 = sphi 0, %s139
    %s154 = sphi 0, %s140
    %s158 = sphi 0, %s158
    %s160 = sphi 0, %s158
    %s161 = sphi 0, %s160
    %s175 = sphi 0, %s161
    %s179 = sphi 0, %s179
    %s181 = sphi 0, %s179
    %s182 = sphi 0, %s181
    %s196 = sphi 0, %s182
    %s202 = sphi 0, %s204
    %s205 = sphi 0, %s202
    %s206 = sphi 0, %s205
    %s222 = sphi 0, %s206
  $region4: #{densenet_forward.9} parent=0 // loop_header_branch
    %17 = sbr.rel (%p15) target = $region8
  $region5: #{densenet_forward.9} parent=0 // loop_body
    %s19 = ssub.s32 %s14, 1
    %s20 = ssub.s32 %s14, 2
    %s21 = sadd.s32 %s14, 1
    %s22 = ssub.s32 %s14, %s21
    %p23 = scmp.eq.s32.totalorder %s22, 0
    %s25 = sadd.s32 %s24, 1
    %s26 = scalar_select %p23, %s24, %s25
    %p29 = pneg %p23
    %p30 = scmp.eq.s32.totalorder %s14, 1
    %p31 = por %p29, %p30
    %p32 = scmp.ne.s32.totalorder %s24, %s27
    %p33 = scmp.eq.s32.totalorder %s14, 0
    %p34 = por %p32, %p33
    %p35 = scmp.ne.s32.totalorder %s24, %s27
    %p36 = scmp.eq.s32.totalorder %s19, 1
    %p37 = por %p35, %p36
    %p38 = scmp.ne.s32.totalorder %s27, %s28
    %p39 = scmp.eq.s32.totalorder %s19, 0
    %p40 = por %p38, %p39
    %p41 = scmp.ne.s32.totalorder %s27, %s28
    %p42 = scmp.eq.s32.totalorder %s20, 1
    %p43 = por %p41, %p42
    %p45 = scmp.ne.s32.totalorder %s28, %s44
    %p46 = scmp.eq.s32.totalorder %s20, 0
    %p47 = por %p45, %p46
    %s48 = ssub.s32 %s14, %s21
    %p49 = scmp.eq.s32.totalorder %s48, 0
    %s51 = sadd.s32 %s50, 1
    %s52 = scalar_select %p49, %s50, %s51
    %p55 = pneg %p49
    %p56 = scmp.eq.s32.totalorder %s14, 1
    %p57 = por %p55, %p56
    %p58 = scmp.ne.s32.totalorder %s50, %s53
    %p59 = scmp.eq.s32.totalorder %s14, 0
    %p60 = por %p58, %p59
    %p61 = scmp.ne.s32.totalorder %s50, %s53
    %p62 = scmp.eq.s32.totalorder %s19, 1
    %p63 = por %p61, %p62
    %p64 = scmp.ne.s32.totalorder %s53, %s54
    %p65 = scmp.eq.s32.totalorder %s19, 0
    %p66 = por %p64, %p65
    %p67 = scmp.ne.s32.totalorder %s53, %s54
    %p68 = scmp.eq.s32.totalorder %s20, 1
    %p69 = por %p67, %p68
    %p71 = scmp.ne.s32.totalorder %s54, %s70
    %p72 = scmp.eq.s32.totalorder %s20, 0
    %p73 = por %p71, %p72
    %s75 = sadd.s32 %s74, 1
    %p78 = scmp.eq.s32.totalorder %s14, 1
    %p79 = scmp.ne.s32.totalorder %s74, %s76
    %p80 = scmp.eq.s32.totalorder %s14, 0
    %p81 = por %p79, %p80
    %p82 = scmp.ne.s32.totalorder %s74, %s76
    %p83 = scmp.eq.s32.totalorder %s19, 1
    %p84 = por %p82, %p83
    %p85 = scmp.ne.s32.totalorder %s76, %s77
    %p86 = scmp.eq.s32.totalorder %s19, 0
    %p87 = por %p85, %p86
    %p88 = scmp.ne.s32.totalorder %s76, %s77
    %p89 = scmp.eq.s32.totalorder %s20, 1
    %p90 = por %p88, %p89
    %p92 = scmp.ne.s32.totalorder %s77, %s91
    %p93 = scmp.eq.s32.totalorder %s20, 0
    %p94 = por %p92, %p93
    %s96 = sadd.s32 %s95, 1
    %p99 = scmp.eq.s32.totalorder %s14, 1
    %p100 = scmp.ne.s32.totalorder %s95, %s97
    %p101 = scmp.eq.s32.totalorder %s14, 0
    %p102 = por %p100, %p101
    %p103 = scmp.ne.s32.totalorder %s95, %s97
    %p104 = scmp.eq.s32.totalorder %s19, 1
    %p105 = por %p103, %p104
    %p106 = scmp.ne.s32.totalorder %s97, %s98
    %p107 = scmp.eq.s32.totalorder %s19, 0
    %p108 = por %p106, %p107
    %p109 = scmp.ne.s32.totalorder %s97, %s98
    %p110 = scmp.eq.s32.totalorder %s20, 1
    %p111 = por %p109, %p110
    %p113 = scmp.ne.s32.totalorder %s98, %s112
    %p114 = scmp.eq.s32.totalorder %s20, 0
    %p115 = por %p113, %p114
    %s117 = sadd.s32 %s116, 1
    %p120 = scmp.eq.s32.totalorder %s14, 1
    %p121 = scmp.ne.s32.totalorder %s116, %s118
    %p122 = scmp.eq.s32.totalorder %s14, 0
    %p123 = por %p121, %p122
    %p124 = scmp.ne.s32.totalorder %s116, %s118
    %p125 = scmp.eq.s32.totalorder %s19, 1
    %p126 = por %p124, %p125
    %p127 = scmp.ne.s32.totalorder %s118, %s119
    %p128 = scmp.eq.s32.totalorder %s19, 0
    %p129 = por %p127, %p128
    %p130 = scmp.ne.s32.totalorder %s118, %s119
    %p131 = scmp.eq.s32.totalorder %s20, 1
    %p132 = por %p130, %p131
    %p134 = scmp.ne.s32.totalorder %s119, %s133
    %p135 = scmp.eq.s32.totalorder %s20, 0
    %p136 = por %p134, %p135
    %s138 = sadd.s32 %s137, 1
    %p141 = scmp.eq.s32.totalorder %s14, 1
    %p142 = scmp.ne.s32.totalorder %s137, %s139
    %p143 = scmp.eq.s32.totalorder %s14, 0
    %p144 = por %p142, %p143
    %p145 = scmp.ne.s32.totalorder %s137, %s139
    %p146 = scmp.eq.s32.totalorder %s19, 1
    %p147 = por %p145, %p146
    %p148 = scmp.ne.s32.totalorder %s139, %s140
    %p149 = scmp.eq.s32.totalorder %s19, 0
    %p150 = por %p148, %p149
    %p151 = scmp.ne.s32.totalorder %s139, %s140
    %p152 = scmp.eq.s32.totalorder %s20, 1
    %p153 = por %p151, %p152
    %p155 = scmp.ne.s32.totalorder %s140, %s154
    %p156 = scmp.eq.s32.totalorder %s20, 0
    %p157 = por %p155, %p156
    %s159 = sadd.s32 %s158, 1
    %p162 = scmp.eq.s32.totalorder %s14, 1
    %p163 = scmp.ne.s32.totalorder %s158, %s160
    %p164 = scmp.eq.s32.totalorder %s14, 0
    %p165 = por %p163, %p164
    %p166 = scmp.ne.s32.totalorder %s158, %s160
    %p167 = scmp.eq.s32.totalorder %s19, 1
    %p168 = por %p166, %p167
    %p169 = scmp.ne.s32.totalorder %s160, %s161
    %p170 = scmp.eq.s32.totalorder %s19, 0
    %p171 = por %p169, %p170
    %p172 = scmp.ne.s32.totalorder %s160, %s161
    %p173 = scmp.eq.s32.totalorder %s20, 1
    %p174 = por %p172, %p173
    %p176 = scmp.ne.s32.totalorder %s161, %s175
    %p177 = scmp.eq.s32.totalorder %s20, 0
    %p178 = por %p176, %p177
    %s180 = sadd.s32 %s179, 1
    %p183 = scmp.eq.s32.totalorder %s14, 1
    %p184 = scmp.ne.s32.totalorder %s179, %s181
    %p185 = scmp.eq.s32.totalorder %s14, 0
    %p186 = por %p184, %p185
    %p187 = scmp.ne.s32.totalorder %s179, %s181
    %p188 = scmp.eq.s32.totalorder %s19, 1
    %p189 = por %p187, %p188
    %p190 = scmp.ne.s32.totalorder %s181, %s182
    %p191 = scmp.eq.s32.totalorder %s19, 0
    %p192 = por %p190, %p191
    %p193 = scmp.ne.s32.totalorder %s181, %s182
    %p194 = scmp.eq.s32.totalorder %s20, 1
    %p195 = por %p193, %p194
    %p197 = scmp.ne.s32.totalorder %s182, %s196
    %p198 = scmp.eq.s32.totalorder %s20, 0
    %p199 = por %p197, %p198
    %s200 = ssub.s32 %s14, %s21
    %p201 = scmp.eq.s32.totalorder %s200, 0
    %s203 = sadd.s32 %s202, 1
    %s204 = scalar_select %p201, %s202, %s203
    %p207 = pneg %p201
    %p208 = scmp.eq.s32.totalorder %s14, 1
    %p209 = por %p207, %p208
    %p210 = scmp.ne.s32.totalorder %s202, %s205
    %p211 = scmp.eq.s32.totalorder %s14, 0
    %p212 = por %p210, %p211
    %p213 = scmp.ne.s32.totalorder %s202, %s205
    %p214 = scmp.eq.s32.totalorder %s19, 1
    %p215 = por %p213, %p214
    %p216 = scmp.ne.s32.totalorder %s205, %s206
    %p217 = scmp.eq.s32.totalorder %s19, 0
    %p218 = por %p216, %p217
    %p219 = scmp.ne.s32.totalorder %s205, %s206
    %p220 = scmp.eq.s32.totalorder %s20, 1
    %p221 = por %p219, %p220
    %p223 = scmp.ne.s32.totalorder %s206, %s222
    %p224 = scmp.eq.s32.totalorder %s20, 0
    %p225 = por %p223, %p224
    %p226 = scmp.le.s32.totalorder 1, %s14
    %p227 = scmp.lt.s32.totalorder %s14, 3
    %p228 = pnand %p226, %p227
    %p229 = pneg %p228
    // Predicated region
    $region9: #{densenet_forward.9} parent=5 // pred_check
      _
    $region10: #{densenet_forward.9} parent=5 // pred_check_branch
      %231 = sbr.rel (%p228) target = $region12
    $region11: #{densenet_forward.9} parent=5 // pred_region
      %s232 = ssub.s32 %s14, 1
      // Predicated region
      $region13: #{densenet_forward.9} parent=11 // pred_check
        %p233 = pneg %p87
      $region14: #{densenet_forward.9} parent=11 // pred_check_branch
        %235 = sbr.rel (%p233) target = $region16
      $region15: #{densenet_forward.9} parent=11 // pred_region
        _
      $region16: #{densenet_forward.9} parent=11 // pred_fallthru
        _
      // Predicated region
      $region17: #{densenet_forward.9} parent=11 // pred_check
        %p236 = pneg %p108
      $region18: #{densenet_forward.9} parent=11 // pred_check_branch
        %238 = sbr.rel (%p236) target = $region20
      $region19: #{densenet_forward.9} parent=11 // pred_region
        _
      $region20: #{densenet_forward.9} parent=11 // pred_fallthru
        _
      // Predicated region
      $region21: #{densenet_forward.9} parent=11 // pred_check
        %p239 = pneg %p129
      $region22: #{densenet_forward.9} parent=11 // pred_check_branch
        %241 = sbr.rel (%p239) target = $region24
      $region23: #{densenet_forward.9} parent=11 // pred_region
        _
      $region24: #{densenet_forward.9} parent=11 // pred_fallthru
        _
      // Predicated region
      $region25: #{densenet_forward.9} parent=11 // pred_check
        %p242 = pneg %p150
      $region26: #{densenet_forward.9} parent=11 // pred_check_branch
        %244 = sbr.rel (%p242) target = $region28
      $region27: #{densenet_forward.9} parent=11 // pred_region
        _
      $region28: #{densenet_forward.9} parent=11 // pred_fallthru
        _
      // Predicated region
      $region29: #{densenet_forward.9} parent=11 // pred_check
        %p245 = pneg %p171
      $region30: #{densenet_forward.9} parent=11 // pred_check_branch
        %247 = sbr.rel (%p245) target = $region32
      $region31: #{densenet_forward.9} parent=11 // pred_region
        _
      $region32: #{densenet_forward.9} parent=11 // pred_fallthru
        _
      // Predicated region
      $region33: #{densenet_forward.9} parent=11 // pred_check
        %p248 = pneg %p192
      $region34: #{densenet_forward.9} parent=11 // pred_check_branch
        %250 = sbr.rel (%p248) target = $region36
      $region35: #{densenet_forward.9} parent=11 // pred_region
        _
      $region36: #{densenet_forward.9} parent=11 // pred_fallthru
        _
    $region12: #{densenet_forward.9} parent=5 // pred_fallthru
      _
    %p251 = scmp.lt.s32.totalorder %s14, 2
    // Predicated region
    $region37: #{densenet_forward.9} parent=5 // pred_check
      %p252 = pneg %p251
    $region38: #{densenet_forward.9} parent=5 // pred_check_branch
      %254 = sbr.rel (%p252) target = $region40
    $region39: #{densenet_forward.9} parent=5 // pred_region
      // Predicated region
      $region41: #{densenet_forward.9} parent=39 // pred_check
        %p255 = pneg %p34
      $region42: #{densenet_forward.9} parent=39 // pred_check_branch
        %257 = sbr.rel (%p255) target = $region44
      $region43: #{densenet_forward.9} parent=39 // pred_region
        %p258 = scmp.lt.s32.totalorder %s14, 1
        %s259 = scalar_select %p258, %s14, 1
        %s260 = smul.addr %s259, 2
        %s261 = smul.addr %s260, 4
        %s262 = scalar_lea.vmem %s0, %s261
      $region44: #{densenet_forward.9} parent=39 // pred_fallthru
        _
      // Predicated region
      $region45: #{densenet_forward.9} parent=39 // pred_check
        %p263 = pneg %p60
      $region46: #{densenet_forward.9} parent=39 // pred_check_branch
        %265 = sbr.rel (%p263) target = $region48
      $region47: #{densenet_forward.9} parent=39 // pred_region
        %p266 = scmp.lt.s32.totalorder %s14, 1
        %s267 = scalar_select %p266, %s14, 1
        %s268 = smul.addr %s267, 2
        %s269 = smul.addr %s268, 4
        %s270 = scalar_lea.vmem %s1, %s269
      $region48: #{densenet_forward.9} parent=39 // pred_fallthru
        _
    $region40: #{densenet_forward.9} parent=5 // pred_fallthru
      _
    %p271 = scmp.le.s32.totalorder 1, %s14
    %p272 = scmp.lt.s32.totalorder %s14, 3
    %p273 = pnand %p271, %p272
    %p274 = pneg %p273
    // Predicated region
    $region49: #{densenet_forward.9} parent=5 // pred_check
      _
    $region50: #{densenet_forward.9} parent=5 // pred_check_branch
      %276 = sbr.rel (%p273) target = $region52
    $region51: #{densenet_forward.9} parent=5 // pred_region
      %s277 = ssub.s32 %s14, 1
      %p278 = scmp.lt.s32.totalorder %s19, 1
      %s279 = scalar_select %p278, %s19, 1
      %s280 = smul.addr %s279, 2
      %s281 = smul.addr %s280, 4
      %s282 = scalar_lea.vmem %s0, %s281
      %p283 = pneg %p40
      %p284 = pneg %p37
      %p285 = scmp.lt.s32.totalorder %s19, 1
      %s286 = scalar_select %p285, %s19, 1
      %s287 = smul.addr %s286, 2
      %s288 = smul.addr %s287, 4
      %s289 = scalar_lea.vmem %s1, %s288
      %p290 = pneg %p66
      %p291 = pneg %p63
      %p292 = pneg %p87
      %p293 = pneg %p84
      %p294 = pneg %p108
      %p295 = pneg %p105
      %p296 = pneg %p129
      %p297 = pneg %p126
      %p298 = pneg %p150
      %p299 = pneg %p147
      %p300 = pneg %p171
      %p301 = pneg %p168
      %p302 = pneg %p192
      %p303 = pneg %p189
      %p304 = pneg %p218
      %p305 = pneg %p215
      %p306 = scmp.lt.s32.totalorder %s19, 1
      %s307 = scalar_select %p306, %s19, 1
      %s308 = smul.addr %s307, 2
      %s309 = smul.addr %s308, 4
      %s310 = scalar_lea.vmem %s8, %s309
      %p311 = scmp.lt.s32.totalorder %s19, 1
      %s312 = scalar_select %p311, %s19, 1
      %s313 = smul.addr %s312, 2
      %s314 = smul.addr %s313, 4
      %s315 = scalar_lea.vmem %s0, %s314
      %p316 = scmp.lt.s32.totalorder %s19, 1
      %s317 = scalar_select %p316, %s19, 1
      %s318 = smul.addr %s317, 2
      %s319 = smul.addr %s318, 4
      %s320 = scalar_lea.vmem %s1, %s319
      %p321 = scmp.lt.s32.totalorder %s19, 1
      %s322 = scalar_select %p321, %s19, 1
      %s323 = smul.addr %s322, 2
      %s324 = smul.addr %s323, 4
      %s325 = scalar_lea.vmem %s8, %s324
      %v327 = vld [vmem:[%s315] sm:$0xf]
      %v328 = vld [vmem:[%s315 + $0x4] sm:$0xf]
      %v329 = vunpack.c.l.bf16 %v327
      %v330 = vunpack.c.l.bf16 %v328
      %v331 = vld [vmem:[%s320] sm:$0xf]
      %v332 = vld [vmem:[%s320 + $0x4] sm:$0xf]
      %v333 = vunpack.c.l.bf16 %v331
      %v334 = vunpack.c.l.bf16 %v332
      %337 = vrot.lane.b32.xlu0 %v333, 16
      %v338 = vpop.permute.xlu0 %337
      %339 = vrot.lane.b32.xlu0 %v334, 16
      %v340 = vpop.permute.xlu0 %339
      %vm343 = vcmask 130048
      %v344 = vsel %vm343, %v329, %v338
      %v345 = vsel %vm343, %v330, %v340
      %v346 = vld [vmem:[%s2] sm:$0x1]
      %v348 = vlaneseq
      %v349 = vshrl.u32 %v348, 7
      %v350 = vsub.s32 0, %v349
      %v351 = vrot.slane %v346, %v350
      %v353 = vmul.f32 %v344, %v351
      %v354 = vmul.f32 %v345, %v351
      %v355 = vld [vmem:[%s3] sm:$0x1]
      %v357 = vlaneseq
      %v358 = vshrl.u32 %v357, 7
      %v359 = vsub.s32 0, %v358
      %v360 = vrot.slane %v355, %v359
      %v362 = vadd.f32 %v353, %v360
      %v363 = vadd.f32 %v354, %v360
      %v364 = vmax.f32 %v362, 0.0
      %v365 = vmax.f32 %v363, 0.0
      %v366 = vpack.c.bf16 %v365, %v364
      %v367 = vld [vmem:[%s4] sm:$0xf]
      %v368 = vld [vmem:[%s4 + $0x4] sm:$0xf]
      %v369 = vld [vmem:[%s4 + $0x8] sm:$0xf]
      %v373 = vunpack.c.l.b16 %v367
      %v374 = vunpack.c.l.b16 %v368
      %v375 = vunpack.c.l.b16 %v369
      %v376 = vpack.c.b16 %v374, %v373
      %v377 = vpack.c.b16 %v375, %v375
      %vm379 = vcmask 195584
      %v381 = vsel %vm379, %v366, 0
      %vm383 = vcmask 1043456
      %v385 = vsel %vm383, %v377, 0
      %387 = vmatprep.subr.bf16.mxu0 0
      %388 = vmatpush1.bf16.msra.mxu0 %v376
      %389 = vmatprep.subr.bf16.mxu0 0
      %390 = vmatpush1.bf16.msra.mxu0 %v385
      %391 = vmatprep.subr.bf16.mxu0 0
      %392 = vmatpush1.bf16.msra.mxu0 0
      %393 = vmatprep.subr.bf16.mxu0 0
      %394 = vmatpush1.bf16.msra.mxu0 0
      %395 = vmatprep.subr.bf16.mxu0 0
      %396 = vmatpush1.bf16.msra.mxu0 0
      %397 = vmatprep.subr.bf16.mxu0 0
      %398 = vmatpush1.bf16.msra.mxu0 0
      %399 = vmatprep.subr.bf16.mxu0 0
      %400 = vmatpush1.bf16.msra.mxu0 0
      %401 = vmatprep.subr.bf16.mxu0 0
      %402 = vmatpush1.bf16.msra.mxu0 0
      %403 = vmatprep.subr.bf16.mxu0 0
      %404 = vmatpush1.bf16.msra.mxu0 0
      %405 = vmatprep.subr.bf16.mxu0 0
      %406 = vmatpush1.bf16.msra.mxu0 0
      %407 = vmatprep.subr.bf16.mxu0 0
      %408 = vmatpush1.bf16.msra.mxu0 0
      %409 = vmatprep.subr.bf16.mxu0 0
      %410 = vmatpush1.bf16.msra.mxu0 0
      %411 = vmatprep.subr.bf16.mxu0 0
      %412 = vmatpush1.bf16.msra.mxu0 0
      %413 = vmatprep.subr.bf16.mxu0 0
      %414 = vmatpush1.bf16.msra.mxu0 0
      %415 = vmatprep.subr.bf16.mxu0 0
      %416 = vmatpush1.bf16.msra.mxu0 0
      %417 = vmatprep.subr.bf16.mxu0 0
      %418 = vmatpush1.bf16.msra.mxu0 0
      %419 = vmatprep.mubr.bf16.mxu0 0
      %420 = vmatmul.mubr.bf16.gmra.mrb[0].mxu0 %v381
      %v421 = vpop.f32.mrb[0].mxu0
      %v422 = vadd.f32 0.0, %v421
      %v423 = vpop.f32.mrb[0].mxu0
      %v424 = vpop.f32.mrb[0].mxu0
      %v425 = vadd.f32 0.0, %v424
      %v426 = vpop.f32.mrb[0].mxu0
      %427 = vdwg.mxu0
      %v428 = vld [vmem:[%s5] sm:$0x1]
      %v430 = vlaneseq
      %v431 = vshrl.u32 %v430, 7
      %v432 = vsub.s32 0, %v431
      %v433 = vrot.slane %v428, %v432
      %v435 = vmul.f32 %v422, %v433
      %v436 = vmul.f32 %v425, %v433
      %v437 = vld [vmem:[%s6] sm:$0x1]
      %v439 = vlaneseq
      %v440 = vshrl.u32 %v439, 7
      %v441 = vsub.s32 0, %v440
      %v442 = vrot.slane %v437, %v441
      %v444 = vadd.f32 %v435, %v442
      %v445 = vadd.f32 %v436, %v442
      %v446 = vmax.f32 %v444, 0.0
      %v447 = vmax.f32 %v445, 0.0
      %v448 = vrot.slane %v446, 7
      %v449 = vrot.slane %v447, 7
      %v450 = vlaneseq
      %v451 = vshrl.u32 %v450, 7
      %vm452 = vcmp.lt.s32.totalorder %v451, 1
      %v453 = vsel %vm452, %v448, %v449
      %v454 = vsel %vm452, %v449, %v448
      %v455 = vadd.s32 %v451, 8
      %vm456 = vcmp.lt.s32.totalorder %v455, 1
      %v457 = vsel %vm452, 0.0, %v454
      %v458 = vsel %vm456, 0.0, %v453
      %v459 = vrot.slane %v446, 1
      %v460 = vrot.slane %v447, 1
      %vm461 = vcmp.lt.s32.totalorder %v451, 7
      %v462 = vsel %vm461, %v459, %v460
      %v463 = vsel %vm461, %v460, %v459
      %vm464 = vcmp.ge.s32.totalorder %v451, 15
      %vm465 = vcmp.ge.s32.totalorder %v455, 15
      %v466 = vsel %vm464, 0.0, %v462
      %v467 = vsel %vm465, 0.0, %v463
      %470 = vrot.lane.b32.xlu0 %v446, 16
      %v471 = vpop.permute.xlu0 %470
      %472 = vrot.lane.b32.xlu0 %v447, 16
      %v473 = vpop.permute.xlu0 %472
      %478 = vrot.lane.b32.xlu0 %v466, 32
      %v479 = vpop.permute.xlu0 %478
      %480 = vrot.lane.b32.xlu0 %v467, 32
      %v481 = vpop.permute.xlu0 %480
      %v484 = vsel %vm343, %v457, %v471
      %v485 = vsel %vm343, %v458, %v473
      %vm486 = vcmask 261120
      %v487 = vsel %vm486, %v484, %v479
      %v488 = vsel %vm486, %v485, %v481
      %v489 = vpack.c.bf16 %v488, %v487
      %v490 = vld [vmem:[%s7] sm:$0xf]
      %v491 = vld [vmem:[%s7 + $0x4] sm:$0xf]
      %v492 = vld [vmem:[%s7 + $0x8] sm:$0xf]
      %v493 = vld [vmem:[%s7 + $0xc] sm:$0xf]
      %v494 = vld [vmem:[%s7 + $0x10] sm:$0xf]
      %v495 = vld [vmem:[%s7 + $0x14] sm:$0xf]
      %v502 = vunpack.c.l.b16 %v490
      %v503 = vunpack.c.l.b16 %v491
      %v504 = vunpack.c.l.b16 %v492
      %v505 = vunpack.c.l.b16 %v493
      %v506 = vunpack.c.l.b16 %v494
      %v507 = vunpack.c.l.b16 %v495
      %v508 = vpack.c.b16 %v503, %v502
      %v509 = vpack.c.b16 %v505, %v504
      %v510 = vpack.c.b16 %v507, %v506
      %vm514 = vcmask 392192
      %v516 = vsel %vm514, %v489, 0
      %518 = vmatprep.subr.bf16.mxu0 0
      %519 = vmatpush1.bf16.msra.mxu0 %v508
      %520 = vmatprep.subr.bf16.mxu0 0
      %521 = vmatpush1.bf16.msra.mxu0 %v509
      %522 = vmatprep.subr.bf16.mxu0 0
      %523 = vmatpush1.bf16.msra.mxu0 %v510
      %524 = vmatprep.subr.bf16.mxu0 0
      %525 = vmatpush1.bf16.msra.mxu0 0
      %526 = vmatprep.subr.bf16.mxu0 0
      %527 = vmatpush1.bf16.msra.mxu0 0
      %528 = vmatprep.subr.bf16.mxu0 0
      %529 = vmatpush1.bf16.msra.mxu0 0
      %530 = vmatprep.subr.bf16.mxu0 0
      %531 = vmatpush1.bf16.msra.mxu0 0
      %532 = vmatprep.subr.bf16.mxu0 0
      %533 = vmatpush1.bf16.msra.mxu0 0
      %534 = vmatprep.subr.bf16.mxu0 0
      %535 = vmatpush1.bf16.msra.mxu0 0
      %536 = vmatprep.subr.bf16.mxu0 0
      %537 = vmatpush1.bf16.msra.mxu0 0
      %538 = vmatprep.subr.bf16.mxu0 0
      %539 = vmatpush1.bf16.msra.mxu0 0
      %540 = vmatprep.subr.bf16.mxu0 0
      %541 = vmatpush1.bf16.msra.mxu0 0
      %542 = vmatprep.subr.bf16.mxu0 0
      %543 = vmatpush1.bf16.msra.mxu0 0
      %544 = vmatprep.subr.bf16.mxu0 0
      %545 = vmatpush1.bf16.msra.mxu0 0
      %546 = vmatprep.subr.bf16.mxu0 0
      %547 = vmatpush1.bf16.msra.mxu0 0
      %548 = vmatprep.subr.bf16.mxu0 0
      %549 = vmatpush1.bf16.msra.mxu0 0
      %550 = vmatprep.mubr.bf16.mxu0 0
      %551 = vmatmul.mubr.bf16.gmra.mrb[0].mxu0 %v516
      %v552 = vpop.f32.mrb[0].mxu0
      %v553 = vadd.f32 0.0, %v552
      %v554 = vpop.f32.mrb[0].mxu0
      %v555 = vpop.f32.mrb[0].mxu0
      %v556 = vadd.f32 0.0, %v555
      %v557 = vpop.f32.mrb[0].mxu0
      %558 = vdwg.mxu0
      %v559 = vpack.c.bf16 %v556, %v553
      %v561 = vunpack.c.l.b16 %v559
      %v562 = vunpack.c.h.b16 %v559
      %v563 = vpack.c.b16 %v561, %v561
      %v564 = vpack.c.b16 %v562, %v562
      %vm567 = vcmask 60416
      %568 = vst.msk [vmem:[%s325] sm:$0xf] %vm567, %v563
      %569 = vst.msk [vmem:[%s325 + $0x4] sm:$0xf] %vm567, %v564
      %p570 = scmp.lt.s32.totalorder %s19, 1
      %s571 = scalar_select %p570, %s19, 1
      %s572 = smul.addr %s571, 2
      %s573 = smul.addr %s572, 4
      %s574 = scalar_lea.vmem %s8, %s573
      // Predicated region
      $region53: #{densenet_forward.9} parent=51 // pred_check
        %p575 = pneg %p215
      $region54: #{densenet_forward.9} parent=51 // pred_check_branch
        %577 = sbr.rel (%p575) target = $region56
      $region55: #{densenet_forward.9} parent=51 // pred_region
        _
      $region56: #{densenet_forward.9} parent=51 // pred_fallthru
        _
    $region52: #{densenet_forward.9} parent=5 // pred_fallthru
      _
    %p578 = scmp.le.s32.totalorder 2, %s14
    // Predicated region
    $region57: #{densenet_forward.9} parent=5 // pred_check
      %p579 = pneg %p578
    $region58: #{densenet_forward.9} parent=5 // pred_check_branch
      %581 = sbr.rel (%p579) target = $region60
    $region59: #{densenet_forward.9} parent=5 // pred_region
      %s582 = ssub.s32 %s14, 2
      // Predicated region
      $region61: #{densenet_forward.9} parent=59 // pred_check
        %p583 = pneg %p221
      $region62: #{densenet_forward.9} parent=59 // pred_check_branch
        %585 = sbr.rel (%p583) target = $region64
      $region63: #{densenet_forward.9} parent=59 // pred_region
        %p586 = scmp.lt.s32.totalorder %s20, 1
        %s587 = scalar_select %p586, %s20, 1
        %s588 = smul.addr %s587, 2
        %s589 = smul.addr %s588, 4
        %s590 = scalar_lea.vmem %s8, %s589
      $region64: #{densenet_forward.9} parent=59 // pred_fallthru
        _
    $region60: #{densenet_forward.9} parent=5 // pred_fallthru
      _
  $region6: #{densenet_forward.9} parent=0 // loop_footer
    %s18 = sadd.s32 1, %s14
  $region7: #{densenet_forward.9} parent=0 // loop_footer_branch
    %13 = sbr.rel target = $region3
  $region8: #{densenet_forward.9} parent=0 // loop_exit
    _

// kernel: densenet_forward.7
$region0: #{densenet_forward.7}
  #allocation0 [shape = 'u32[]', space=smem, size = 0x4, offset = 0x4, fixed_abs, tag = 'smem constant byte address 0x4 - core index']
  #allocation1 [shape = 'u32[144,128]{1,0:T(1,128)}', space=vmem, size = 0x12000, scoped, tag = 'internal scratch']
  %s0 = inlined_call_operand.vmem [shape: bf16[2,16,4], index: 0, kind: input, shape index: {}]
  %s1 = inlined_call_operand.vmem [shape: bf16[2,16,4], index: 1, kind: input, shape index: {}]
  %s2 = inlined_call_operand.vmem [shape: bf16[2,16,4], index: 2, kind: input, shape index: {}]
  %s3 = inlined_call_operand.vmem [shape: bf16[2,16,4], index: 3, kind: input, shape index: {}]
  %s4 = inlined_call_operand.vmem [shape: bf16[28,16], index: 4, kind: input, shape index: {}]
  %s5 = inlined_call_operand.vmem [shape: f32[1,16], index: 5, kind: input, shape index: {}]
  %s6 = inlined_call_operand.vmem [shape: f32[1,16], index: 6, kind: input, shape index: {}]
  %s7 = inlined_call_operand.vmem [shape: bf16[2,16,16], index: 7, kind: output, shape index: {}]
  %s8 = sld [smem:[#allocation0]]
  $region61: #{densenet_forward.7} parent=0
    _
  %s10 = ssub.s32 1, %s8
  %s11 = scalar_select 0, %s10, %s8
  loop: start=0, step=1, limit=4
  $region2: #{densenet_forward.7} parent=0 // loop_pre_header
    _
  $region3: #{densenet_forward.7} parent=0 // loop_header
    %s13 = sphi 0, %s17
    %p14 = scmp.ge.s32.totalorder %s13, 4
    %s23 = sphi 0, %s25
    %s26 = sphi 0, %s23
    %s27 = sphi 0, %s26
    %s43 = sphi 0, %s27
    %s49 = sphi 0, %s51
    %s52 = sphi 0, %s49
    %s53 = sphi 0, %s52
    %s69 = sphi 0, %s53
    %s75 = sphi 0, %s77
    %s78 = sphi 0, %s75
    %s79 = sphi 0, %s78
    %s95 = sphi 0, %s79
    %s101 = sphi 0, %s103
    %s104 = sphi 0, %s101
    %s105 = sphi 0, %s104
    %s121 = sphi 0, %s105
    %s125 = sphi 0, %s125
    %s127 = sphi 0, %s125
    %s128 = sphi 0, %s127
    %s142 = sphi 0, %s128
    %s146 = sphi 0, %s146
    %s148 = sphi 0, %s146
    %s149 = sphi 0, %s148
    %s163 = sphi 0, %s149
    %s167 = sphi 0, %s167
    %s169 = sphi 0, %s167
    %s170 = sphi 0, %s169
    %s184 = sphi 0, %s170
    %s190 = sphi 0, %s192
    %s193 = sphi 0, %s190
    %s194 = sphi 0, %s193
    %s210 = sphi 0, %s194
  $region4: #{densenet_forward.7} parent=0 // loop_header_branch
    %16 = sbr.rel (%p14) target = $region8
  $region5: #{densenet_forward.7} parent=0 // loop_body
    %s18 = ssub.s32 %s13, 1
    %s19 = ssub.s32 %s13, 2
    %s20 = sadd.s32 %s13, 1
    %s21 = ssub.s32 %s13, %s20
    %p22 = scmp.eq.s32.totalorder %s21, 0
    %s24 = sadd.s32 %s23, 1
    %s25 = scalar_select %p22, %s23, %s24
    %p28 = pneg %p22
    %p29 = scmp.eq.s32.totalorder %s13, 1
    %p30 = por %p28, %p29
    %p31 = scmp.ne.s32.totalorder %s23, %s26
    %p32 = scmp.eq.s32.totalorder %s13, 0
    %p33 = por %p31, %p32
    %p34 = scmp.ne.s32.totalorder %s23, %s26
    %p35 = scmp.eq.s32.totalorder %s18, 1
    %p36 = por %p34, %p35
    %p37 = scmp.ne.s32.totalorder %s26, %s27
    %p38 = scmp.eq.s32.totalorder %s18, 0
    %p39 = por %p37, %p38
    %p40 = scmp.ne.s32.totalorder %s26, %s27
    %p41 = scmp.eq.s32.totalorder %s19, 1
    %p42 = por %p40, %p41
    %p44 = scmp.ne.s32.totalorder %s27, %s43
    %p45 = scmp.eq.s32.totalorder %s19, 0
    %p46 = por %p44, %p45
    %s47 = ssub.s32 %s13, %s20
    %p48 = scmp.eq.s32.totalorder %s47, 0
    %s50 = sadd.s32 %s49, 1
    %s51 = scalar_select %p48, %s49, %s50
    %p54 = pneg %p48
    %p55 = scmp.eq.s32.totalorder %s13, 1
    %p56 = por %p54, %p55
    %p57 = scmp.ne.s32.totalorder %s49, %s52
    %p58 = scmp.eq.s32.totalorder %s13, 0
    %p59 = por %p57, %p58
    %p60 = scmp.ne.s32.totalorder %s49, %s52
    %p61 = scmp.eq.s32.totalorder %s18, 1
    %p62 = por %p60, %p61
    %p63 = scmp.ne.s32.totalorder %s52, %s53
    %p64 = scmp.eq.s32.totalorder %s18, 0
    %p65 = por %p63, %p64
    %p66 = scmp.ne.s32.totalorder %s52, %s53
    %p67 = scmp.eq.s32.totalorder %s19, 1
    %p68 = por %p66, %p67
    %p70 = scmp.ne.s32.totalorder %s53, %s69
    %p71 = scmp.eq.s32.totalorder %s19, 0
    %p72 = por %p70, %p71
    %s73 = ssub.s32 %s13, %s20
    %p74 = scmp.eq.s32.totalorder %s73, 0
    %s76 = sadd.s32 %s75, 1
    %s77 = scalar_select %p74, %s75, %s76
    %p80 = pneg %p74
    %p81 = scmp.eq.s32.totalorder %s13, 1
    %p82 = por %p80, %p81
    %p83 = scmp.ne.s32.totalorder %s75, %s78
    %p84 = scmp.eq.s32.totalorder %s13, 0
    %p85 = por %p83, %p84
    %p86 = scmp.ne.s32.totalorder %s75, %s78
    %p87 = scmp.eq.s32.totalorder %s18, 1
    %p88 = por %p86, %p87
    %p89 = scmp.ne.s32.totalorder %s78, %s79
    %p90 = scmp.eq.s32.totalorder %s18, 0
    %p91 = por %p89, %p90
    %p92 = scmp.ne.s32.totalorder %s78, %s79
    %p93 = scmp.eq.s32.totalorder %s19, 1
    %p94 = por %p92, %p93
    %p96 = scmp.ne.s32.totalorder %s79, %s95
    %p97 = scmp.eq.s32.totalorder %s19, 0
    %p98 = por %p96, %p97
    %s99 = ssub.s32 %s13, %s20
    %p100 = scmp.eq.s32.totalorder %s99, 0
    %s102 = sadd.s32 %s101, 1
    %s103 = scalar_select %p100, %s101, %s102
    %p106 = pneg %p100
    %p107 = scmp.eq.s32.totalorder %s13, 1
    %p108 = por %p106, %p107
    %p109 = scmp.ne.s32.totalorder %s101, %s104
    %p110 = scmp.eq.s32.totalorder %s13, 0
    %p111 = por %p109, %p110
    %p112 = scmp.ne.s32.totalorder %s101, %s104
    %p113 = scmp.eq.s32.totalorder %s18, 1
    %p114 = por %p112, %p113
    %p115 = scmp.ne.s32.totalorder %s104, %s105
    %p116 = scmp.eq.s32.totalorder %s18, 0
    %p117 = por %p115, %p116
    %p118 = scmp.ne.s32.totalorder %s104, %s105
    %p119 = scmp.eq.s32.totalorder %s19, 1
    %p120 = por %p118, %p119
    %p122 = scmp.ne.s32.totalorder %s105, %s121
    %p123 = scmp.eq.s32.totalorder %s19, 0
    %p124 = por %p122, %p123
    %s126 = sadd.s32 %s125, 1
    %p129 = scmp.eq.s32.totalorder %s13, 1
    %p130 = scmp.ne.s32.totalorder %s125, %s127
    %p131 = scmp.eq.s32.totalorder %s13, 0
    %p132 = por %p130, %p131
    %p133 = scmp.ne.s32.totalorder %s125, %s127
    %p134 = scmp.eq.s32.totalorder %s18, 1
    %p135 = por %p133, %p134
    %p136 = scmp.ne.s32.totalorder %s127, %s128
    %p137 = scmp.eq.s32.totalorder %s18, 0
    %p138 = por %p136, %p137
    %p139 = scmp.ne.s32.totalorder %s127, %s128
    %p140 = scmp.eq.s32.totalorder %s19, 1
    %p141 = por %p139, %p140
    %p143 = scmp.ne.s32.totalorder %s128, %s142
    %p144 = scmp.eq.s32.totalorder %s19, 0
    %p145 = por %p143, %p144
    %s147 = sadd.s32 %s146, 1
    %p150 = scmp.eq.s32.totalorder %s13, 1
    %p151 = scmp.ne.s32.totalorder %s146, %s148
    %p152 = scmp.eq.s32.totalorder %s13, 0
    %p153 = por %p151, %p152
    %p154 = scmp.ne.s32.totalorder %s146, %s148
    %p155 = scmp.eq.s32.totalorder %s18, 1
    %p156 = por %p154, %p155
    %p157 = scmp.ne.s32.totalorder %s148, %s149
    %p158 = scmp.eq.s32.totalorder %s18, 0
    %p159 = por %p157, %p158
    %p160 = scmp.ne.s32.totalorder %s148, %s149
    %p161 = scmp.eq.s32.totalorder %s19, 1
    %p162 = por %p160, %p161
    %p164 = scmp.ne.s32.totalorder %s149, %s163
    %p165 = scmp.eq.s32.totalorder %s19, 0
    %p166 = por %p164, %p165
    %s168 = sadd.s32 %s167, 1
    %p171 = scmp.eq.s32.totalorder %s13, 1
    %p172 = scmp.ne.s32.totalorder %s167, %s169
    %p173 = scmp.eq.s32.totalorder %s13, 0
    %p174 = por %p172, %p173
    %p175 = scmp.ne.s32.totalorder %s167, %s169
    %p176 = scmp.eq.s32.totalorder %s18, 1
    %p177 = por %p175, %p176
    %p178 = scmp.ne.s32.totalorder %s169, %s170
    %p179 = scmp.eq.s32.totalorder %s18, 0
    %p180 = por %p178, %p179
    %p181 = scmp.ne.s32.totalorder %s169, %s170
    %p182 = scmp.eq.s32.totalorder %s19, 1
    %p183 = por %p181, %p182
    %p185 = scmp.ne.s32.totalorder %s170, %s184
    %p186 = scmp.eq.s32.totalorder %s19, 0
    %p187 = por %p185, %p186
    %s188 = ssub.s32 %s13, %s20
    %p189 = scmp.eq.s32.totalorder %s188, 0
    %s191 = sadd.s32 %s190, 1
    %s192 = scalar_select %p189, %s190, %s191
    %p195 = pneg %p189
    %p196 = scmp.eq.s32.totalorder %s13, 1
    %p197 = por %p195, %p196
    %p198 = scmp.ne.s32.totalorder %s190, %s193
    %p199 = scmp.eq.s32.totalorder %s13, 0
    %p200 = por %p198, %p199
    %p201 = scmp.ne.s32.totalorder %s190, %s193
    %p202 = scmp.eq.s32.totalorder %s18, 1
    %p203 = por %p201, %p202
    %p204 = scmp.ne.s32.totalorder %s193, %s194
    %p205 = scmp.eq.s32.totalorder %s18, 0
    %p206 = por %p204, %p205
    %p207 = scmp.ne.s32.totalorder %s193, %s194
    %p208 = scmp.eq.s32.totalorder %s19, 1
    %p209 = por %p207, %p208
    %p211 = scmp.ne.s32.totalorder %s194, %s210
    %p212 = scmp.eq.s32.totalorder %s19, 0
    %p213 = por %p211, %p212
    %p214 = scmp.le.s32.totalorder 1, %s13
    %p215 = scmp.lt.s32.totalorder %s13, 3
    %p216 = pnand %p214, %p215
    %p217 = pneg %p216
    // Predicated region
    $region9: #{densenet_forward.7} parent=5 // pred_check
      _
    $region10: #{densenet_forward.7} parent=5 // pred_check_branch
      %219 = sbr.rel (%p216) target = $region12
    $region11: #{densenet_forward.7} parent=5 // pred_region
      %s220 = ssub.s32 %s13, 1
      // Predicated region
      $region13: #{densenet_forward.7} parent=11 // pred_check
        %p221 = pneg %p138
      $region14: #{densenet_forward.7} parent=11 // pred_check_branch
        %223 = sbr.rel (%p221) target = $region16
      $region15: #{densenet_forward.7} parent=11 // pred_region
        _
      $region16: #{densenet_forward.7} parent=11 // pred_fallthru
        _
      // Predicated region
      $region17: #{densenet_forward.7} parent=11 // pred_check
        %p224 = pneg %p159
      $region18: #{densenet_forward.7} parent=11 // pred_check_branch
        %226 = sbr.rel (%p224) target = $region20
      $region19: #{densenet_forward.7} parent=11 // pred_region
        _
      $region20: #{densenet_forward.7} parent=11 // pred_fallthru
        _
      // Predicated region
      $region21: #{densenet_forward.7} parent=11 // pred_check
        %p227 = pneg %p180
      $region22: #{densenet_forward.7} parent=11 // pred_check_branch
        %229 = sbr.rel (%p227) target = $region24
      $region23: #{densenet_forward.7} parent=11 // pred_region
        _
      $region24: #{densenet_forward.7} parent=11 // pred_fallthru
        _
    $region12: #{densenet_forward.7} parent=5 // pred_fallthru
      _
    %p230 = scmp.lt.s32.totalorder %s13, 2
    // Predicated region
    $region25: #{densenet_forward.7} parent=5 // pred_check
      %p231 = pneg %p230
    $region26: #{densenet_forward.7} parent=5 // pred_check_branch
      %233 = sbr.rel (%p231) target = $region28
    $region27: #{densenet_forward.7} parent=5 // pred_region
      // Predicated region
      $region29: #{densenet_forward.7} parent=27 // pred_check
        %p234 = pneg %p33
      $region30: #{densenet_forward.7} parent=27 // pred_check_branch
        %236 = sbr.rel (%p234) target = $region32
      $region31: #{densenet_forward.7} parent=27 // pred_region
        %p237 = scmp.lt.s32.totalorder %s13, 1
        %s238 = scalar_select %p237, %s13, 1
        %s239 = smul.addr %s238, 2
        %s240 = smul.addr %s239, 4
        %s241 = scalar_lea.vmem %s0, %s240
      $region32: #{densenet_forward.7} parent=27 // pred_fallthru
        _
      // Predicated region
      $region33: #{densenet_forward.7} parent=27 // pred_check
        %p242 = pneg %p59
      $region34: #{densenet_forward.7} parent=27 // pred_check_branch
        %244 = sbr.rel (%p242) target = $region36
      $region35: #{densenet_forward.7} parent=27 // pred_region
        %p245 = scmp.lt.s32.totalorder %s13, 1
        %s246 = scalar_select %p245, %s13, 1
        %s247 = smul.addr %s246, 2
        %s248 = smul.addr %s247, 4
        %s249 = scalar_lea.vmem %s1, %s248
      $region36: #{densenet_forward.7} parent=27 // pred_fallthru
        _
      // Predicated region
      $region37: #{densenet_forward.7} parent=27 // pred_check
        %p250 = pneg %p85
      $region38: #{densenet_forward.7} parent=27 // pred_check_branch
        %252 = sbr.rel (%p250) target = $region40
      $region39: #{densenet_forward.7} parent=27 // pred_region
        %p253 = scmp.lt.s32.totalorder %s13, 1
        %s254 = scalar_select %p253, %s13, 1
        %s255 = smul.addr %s254, 2
        %s256 = smul.addr %s255, 4
        %s257 = scalar_lea.vmem %s2, %s256
      $region40: #{densenet_forward.7} parent=27 // pred_fallthru
        _
      // Predicated region
      $region41: #{densenet_forward.7} parent=27 // pred_check
        %p258 = pneg %p111
      $region42: #{densenet_forward.7} parent=27 // pred_check_branch
        %260 = sbr.rel (%p258) target = $region44
      $region43: #{densenet_forward.7} parent=27 // pred_region
        %p261 = scmp.lt.s32.totalorder %s13, 1
        %s262 = scalar_select %p261, %s13, 1
        %s263 = smul.addr %s262, 2
        %s264 = smul.addr %s263, 4
        %s265 = scalar_lea.vmem %s3, %s264
      $region44: #{densenet_forward.7} parent=27 // pred_fallthru
        _
    $region28: #{densenet_forward.7} parent=5 // pred_fallthru
      _
    %p266 = scmp.le.s32.totalorder 1, %s13
    %p267 = scmp.lt.s32.totalorder %s13, 3
    %p268 = pnand %p266, %p267
    %p269 = pneg %p268
    // Predicated region
    $region45: #{densenet_forward.7} parent=5 // pred_check
      _
    $region46: #{densenet_forward.7} parent=5 // pred_check_branch
      %271 = sbr.rel (%p268) target = $region48
    $region47: #{densenet_forward.7} parent=5 // pred_region
      %s272 = ssub.s32 %s13, 1
      %p273 = scmp.lt.s32.totalorder %s18, 1
      %s274 = scalar_select %p273, %s18, 1
      %s275 = smul.addr %s274, 2
      %s276 = smul.addr %s275, 4
      %s277 = scalar_lea.vmem %s0, %s276
      %p278 = pneg %p39
      %p279 = pneg %p36
      %p280 = scmp.lt.s32.totalorder %s18, 1
      %s281 = scalar_select %p280, %s18, 1
      %s282 = smul.addr %s281, 2
      %s283 = smul.addr %s282, 4
      %s284 = scalar_lea.vmem %s1, %s283
      %p285 = pneg %p65
      %p286 = pneg %p62
      %p287 = scmp.lt.s32.totalorder %s18, 1
      %s288 = scalar_select %p287, %s18, 1
      %s289 = smul.addr %s288, 2
      %s290 = smul.addr %s289, 4
      %s291 = scalar_lea.vmem %s2, %s290
      %p292 = pneg %p91
      %p293 = pneg %p88
      %p294 = scmp.lt.s32.totalorder %s18, 1
      %s295 = scalar_select %p294, %s18, 1
      %s296 = smul.addr %s295, 2
      %s297 = smul.addr %s296, 4
      %s298 = scalar_lea.vmem %s3, %s297
      %p299 = pneg %p117
      %p300 = pneg %p114
      %p301 = pneg %p138
      %p302 = pneg %p135
      %p303 = pneg %p159
      %p304 = pneg %p156
      %p305 = pneg %p180
      %p306 = pneg %p177
      %p307 = pneg %p206
      %p308 = pneg %p203
      %p309 = scmp.lt.s32.totalorder %s18, 1
      %s310 = scalar_select %p309, %s18, 1
      %s311 = smul.addr %s310, 2
      %s312 = smul.addr %s311, 4
      %s313 = scalar_lea.vmem %s7, %s312
      %p314 = scmp.lt.s32.totalorder %s18, 1
      %s315 = scalar_select %p314, %s18, 1
      %s316 = smul.addr %s315, 2
      %s317 = smul.addr %s316, 4
      %s318 = scalar_lea.vmem %s0, %s317
      %p319 = scmp.lt.s32.totalorder %s18, 1
      %s320 = scalar_select %p319, %s18, 1
      %s321 = smul.addr %s320, 2
      %s322 = smul.addr %s321, 4
      %s323 = scalar_lea.vmem %s1, %s322
      %p324 = scmp.lt.s32.totalorder %s18, 1
      %s325 = scalar_select %p324, %s18, 1
      %s326 = smul.addr %s325, 2
      %s327 = smul.addr %s326, 4
      %s328 = scalar_lea.vmem %s2, %s327
      %p329 = scmp.lt.s32.totalorder %s18, 1
      %s330 = scalar_select %p329, %s18, 1
      %s331 = smul.addr %s330, 2
      %s332 = smul.addr %s331, 4
      %s333 = scalar_lea.vmem %s3, %s332
      %p334 = scmp.lt.s32.totalorder %s18, 1
      %s335 = scalar_select %p334, %s18, 1
      %s336 = smul.addr %s335, 2
      %s337 = smul.addr %s336, 4
      %s338 = scalar_lea.vmem %s7, %s337
      %v340 = vld [vmem:[%s318] sm:$0xf]
      %v341 = vld [vmem:[%s318 + $0x4] sm:$0xf]
      %v342 = vunpack.c.l.bf16 %v340
      %v343 = vunpack.c.l.bf16 %v341
      %v344 = vld [vmem:[%s323] sm:$0xf]
      %v345 = vld [vmem:[%s323 + $0x4] sm:$0xf]
      %v346 = vunpack.c.l.bf16 %v344
      %v347 = vunpack.c.l.bf16 %v345
      %v348 = vld [vmem:[%s328] sm:$0xf]
      %v349 = vld [vmem:[%s328 + $0x4] sm:$0xf]
      %v350 = vunpack.c.l.bf16 %v348
      %v351 = vunpack.c.l.bf16 %v349
      %v352 = vld [vmem:[%s333] sm:$0xf]
      %v353 = vld [vmem:[%s333 + $0x4] sm:$0xf]
      %v354 = vunpack.c.l.bf16 %v352
      %v355 = vunpack.c.l.bf16 %v353
      %v356 = vrot.slane %v346, 7
      %v357 = vrot.slane %v347, 7
      %v358 = vlaneseq
      %v359 = vshrl.u32 %v358, 7
      %vm360 = vcmp.lt.s32.totalorder %v359, 1
      %v361 = vsel %vm360, %v356, %v357
      %v362 = vsel %vm360, %v357, %v356
      %v363 = vadd.s32 %v359, 8
      %vm364 = vcmp.lt.s32.totalorder %v363, 1
      %v365 = vsel %vm360, 0.0, %v362
      %v366 = vsel %vm364, 0.0, %v361
      %v367 = vrot.slane %v350, 7
      %v368 = vrot.slane %v351, 7
      %v369 = vsel %vm360, %v367, %v368
      %v370 = vsel %vm360, %v368, %v367
      %v371 = vsel %vm360, 0.0, %v370
      %v372 = vsel %vm364, 0.0, %v369
      %v373 = vrot.slane %v354, 7
      %v374 = vrot.slane %v355, 7
      %v375 = vsel %vm360, %v373, %v374
      %v376 = vsel %vm360, %v374, %v373
      %v377 = vsel %vm360, 0.0, %v376
      %v378 = vsel %vm364, 0.0, %v375
      %381 = vrot.lane.b32.xlu0 %v371, 4
      %v382 = vpop.permute.xlu0 %381
      %383 = vrot.lane.b32.xlu0 %v372, 4
      %v384 = vpop.permute.xlu0 %383
      %389 = vrot.lane.b32.xlu0 %v377, 8
      %v390 = vpop.permute.xlu0 %389
      %391 = vrot.lane.b32.xlu0 %v378, 8
      %v392 = vpop.permute.xlu0 %391
      %397 = vrot.lane.b32.xlu0 %v342, 12
      %v398 = vpop.permute.xlu0 %397
      %399 = vrot.lane.b32.xlu0 %v343, 12
      %v400 = vpop.permute.xlu0 %399
      %405 = vrot.lane.b32.xlu0 %v346, 16
      %v406 = vpop.permute.xlu0 %405
      %407 = vrot.lane.b32.xlu0 %v347, 16
      %v408 = vpop.permute.xlu0 %407
      %413 = vrot.lane.b32.xlu0 %v350, 20
      %v414 = vpop.permute.xlu0 %413
      %415 = vrot.lane.b32.xlu0 %v351, 20
      %v416 = vpop.permute.xlu0 %415
      %421 = vrot.lane.b32.xlu0 %v354, 24
      %v422 = vpop.permute.xlu0 %421
      %423 = vrot.lane.b32.xlu0 %v355, 24
      %v424 = vpop.permute.xlu0 %423
      %vm427 = vcmask 31744
      %v428 = vsel %vm427, %v365, %v382
      %v429 = vsel %vm427, %v366, %v384
      %vm430 = vcmask 64512
      %v431 = vsel %vm430, %v428, %v390
      %v432 = vsel %vm430, %v429, %v392
      %vm433 = vcmask 97280
      %v434 = vsel %vm433, %v431, %v398
      %v435 = vsel %vm433, %v432, %v400
      %vm436 = vcmask 130048
      %v437 = vsel %vm436, %v434, %v406
      %v438 = vsel %vm436, %v435, %v408
      %vm439 = vcmask 162816
      %v440 = vsel %vm439, %v437, %v414
      %v441 = vsel %vm439, %v438, %v416
      %vm442 = vcmask 195584
      %v443 = vsel %vm442, %v440, %v422
      %v444 = vsel %vm442, %v441, %v424
      %v445 = vpack.c.bf16 %v444, %v443
      %v446 = vrot.slane %v342, 1
      %v447 = vrot.slane %v343, 1
      %vm448 = vcmp.lt.s32.totalorder %v359, 7
      %v449 = vsel %vm448, %v446, %v447
      %v450 = vsel %vm448, %v447, %v446
      %vm451 = vcmp.ge.s32.totalorder %v359, 15
      %vm452 = vcmp.ge.s32.totalorder %v363, 15
      %v453 = vsel %vm451, 0.0, %v449
      %v454 = vsel %vm452, 0.0, %v450
      %v455 = vrot.slane %v346, 1
      %v456 = vrot.slane %v347, 1
      %v457 = vsel %vm448, %v455, %v456
      %v458 = vsel %vm448, %v456, %v455
      %v459 = vsel %vm451, 0.0, %v457
      %v460 = vsel %vm452, 0.0, %v458
      %461 = vrot.lane.b32.xlu0 %v342, 4
      %v462 = vpop.permute.xlu0 %461
      %463 = vrot.lane.b32.xlu0 %v343, 4
      %v464 = vpop.permute.xlu0 %463
      %467 = vrot.lane.b32.xlu0 %v346, 8
      %v468 = vpop.permute.xlu0 %467
      %469 = vrot.lane.b32.xlu0 %v347, 8
      %v470 = vpop.permute.xlu0 %469
      %473 = vrot.lane.b32.xlu0 %v350, 12
      %v474 = vpop.permute.xlu0 %473
      %475 = vrot.lane.b32.xlu0 %v351, 12
      %v476 = vpop.permute.xlu0 %475
      %479 = vrot.lane.b32.xlu0 %v354, 16
      %v480 = vpop.permute.xlu0 %479
      %481 = vrot.lane.b32.xlu0 %v355, 16
      %v482 = vpop.permute.xlu0 %481
      %487 = vrot.lane.b32.xlu0 %v453, 20
      %v488 = vpop.permute.xlu0 %487
      %489 = vrot.lane.b32.xlu0 %v454, 20
      %v490 = vpop.permute.xlu0 %489
      %495 = vrot.lane.b32.xlu0 %v459, 24
      %v496 = vpop.permute.xlu0 %495
      %497 = vrot.lane.b32.xlu0 %v460, 24
      %v498 = vpop.permute.xlu0 %497
      %v501 = vsel %vm427, %v377, %v462
      %v502 = vsel %vm427, %v378, %v464
      %v503 = vsel %vm430, %v501, %v468
      %v504 = vsel %vm430, %v502, %v470
      %v505 = vsel %vm433, %v503, %v474
      %v506 = vsel %vm433, %v504, %v476
      %v507 = vsel %vm436, %v505, %v480
      %v508 = vsel %vm436, %v506, %v482
      %v509 = vsel %vm439, %v507, %v488
      %v510 = vsel %vm439, %v508, %v490
      %v511 = vsel %vm442, %v509, %v496
      %v512 = vsel %vm442, %v510, %v498
      %v513 = vpack.c.bf16 %v512, %v511
      %v514 = vld [vmem:[%s4] sm:$0xf]
      %v515 = vld [vmem:[%s4 + $0x4] sm:$0xf]
      %v516 = vld [vmem:[%s4 + $0x8] sm:$0xf]
      %v517 = vld [vmem:[%s4 + $0xc] sm:$0x3]
      %v522 = vunpack.c.l.b16 %v514
      %v523 = vunpack.c.l.b16 %v515
      %v524 = vunpack.c.l.b16 %v516
      %v525 = vunpack.c.l.b16 %v517
      %v526 = vpack.c.b16 %v523, %v522
      %v527 = vpack.c.b16 %v525, %v524
      %vm529 = vcmask 228352
      %v531 = vsel %vm529, %v445, 0
      %vm533 = vcmask 1045504
      %v535 = vsel %vm533, %v527, 0
      %537 = vmatprep.subr.bf16.mxu0 0
      %538 = vmatpush1.bf16.msra.mxu0 %v526
      %539 = vmatprep.subr.bf16.mxu0 0
      %540 = vmatpush1.bf16.msra.mxu0 %v535
      %541 = vmatprep.subr.bf16.mxu0 0
      %542 = vmatpush1.bf16.msra.mxu0 0
      %543 = vmatprep.subr.bf16.mxu0 0
      %544 = vmatpush1.bf16.msra.mxu0 0
      %545 = vmatprep.subr.bf16.mxu0 0
      %546 = vmatpush1.bf16.msra.mxu0 0
      %547 = vmatprep.subr.bf16.mxu0 0
      %548 = vmatpush1.bf16.msra.mxu0 0
      %549 = vmatprep.subr.bf16.mxu0 0
      %550 = vmatpush1.bf16.msra.mxu0 0
      %551 = vmatprep.subr.bf16.mxu0 0
      %552 = vmatpush1.bf16.msra.mxu0 0
      %553 = vmatprep.subr.bf16.mxu0 0
      %554 = vmatpush1.bf16.msra.mxu0 0
      %555 = vmatprep.subr.bf16.mxu0 0
      %556 = vmatpush1.bf16.msra.mxu0 0
      %557 = vmatprep.subr.bf16.mxu0 0
      %558 = vmatpush1.bf16.msra.mxu0 0
      %559 = vmatprep.subr.bf16.mxu0 0
      %560 = vmatpush1.bf16.msra.mxu0 0
      %561 = vmatprep.subr.bf16.mxu0 0
      %562 = vmatpush1.bf16.msra.mxu0 0
      %563 = vmatprep.subr.bf16.mxu0 0
      %564 = vmatpush1.bf16.msra.mxu0 0
      %565 = vmatprep.subr.bf16.mxu0 0
      %566 = vmatpush1.bf16.msra.mxu0 0
      %567 = vmatprep.subr.bf16.mxu0 0
      %568 = vmatpush1.bf16.msra.mxu0 0
      %569 = vmatprep.mubr.bf16.mxu0 0
      %570 = vmatmul.mubr.bf16.gmra.mrb[0].mxu0 %v531
      %v571 = vpop.f32.mrb[0].mxu0
      %v572 = vadd.f32 0.0, %v571
      %v573 = vpop.f32.mrb[0].mxu0
      %v574 = vpop.f32.mrb[0].mxu0
      %v575 = vadd.f32 0.0, %v574
      %v576 = vpop.f32.mrb[0].mxu0
      %577 = vdwg.mxu0
      %v579 = vsel %vm529, %v513, 0
      %581 = vmatprep.subr.bf16.mxu0 0
      %582 = vmatpush1.bf16.msra.mxu0 %v526
      %583 = vmatprep.subr.bf16.mxu0 0
      %584 = vmatpush1.bf16.msra.mxu0 %v535
      %585 = vmatprep.subr.bf16.mxu0 0
      %586 = vmatpush1.bf16.msra.mxu0 0
      %587 = vmatprep.subr.bf16.mxu0 0
      %588 = vmatpush1.bf16.msra.mxu0 0
      %589 = vmatprep.subr.bf16.mxu0 0
      %590 = vmatpush1.bf16.msra.mxu0 0
      %591 = vmatprep.subr.bf16.mxu0 0
      %592 = vmatpush1.bf16.msra.mxu0 0
      %593 = vmatprep.subr.bf16.mxu0 0
      %594 = vmatpush1.bf16.msra.mxu0 0
      %595 = vmatprep.subr.bf16.mxu0 0
      %596 = vmatpush1.bf16.msra.mxu0 0
      %597 = vmatprep.subr.bf16.mxu0 0
      %598 = vmatpush1.bf16.msra.mxu0 0
      %599 = vmatprep.subr.bf16.mxu0 0
      %600 = vmatpush1.bf16.msra.mxu0 0
      %601 = vmatprep.subr.bf16.mxu0 0
      %602 = vmatpush1.bf16.msra.mxu0 0
      %603 = vmatprep.subr.bf16.mxu0 0
      %604 = vmatpush1.bf16.msra.mxu0 0
      %605 = vmatprep.subr.bf16.mxu0 0
      %606 = vmatpush1.bf16.msra.mxu0 0
      %607 = vmatprep.subr.bf16.mxu0 0
      %608 = vmatpush1.bf16.msra.mxu0 0
      %609 = vmatprep.subr.bf16.mxu0 0
      %610 = vmatpush1.bf16.msra.mxu0 0
      %611 = vmatprep.subr.bf16.mxu0 0
      %612 = vmatpush1.bf16.msra.mxu0 0
      %613 = vmatprep.mubr.bf16.mxu0 0
      %614 = vmatmul.mubr.bf16.gmra.mrb[0].mxu0 %v579
      %v615 = vpop.f32.mrb[0].mxu0
      %v616 = vadd.f32 0.0, %v615
      %v617 = vpop.f32.mrb[0].mxu0
      %v618 = vpop.f32.mrb[0].mxu0
      %v619 = vadd.f32 0.0, %v618
      %v620 = vpop.f32.mrb[0].mxu0
      %621 = vdwg.mxu0
      %v622 = vld [vmem:[%s5] sm:$0x1]
      %v623 = vld [vmem:[%s6] sm:$0x1]
      %v625 = vlaneseq
      %v626 = vshrl.u32 %v625, 7
      %v627 = vsub.s32 0, %v626
      %v628 = vrot.slane %v622, %v627
      %v630 = vmul.f32 %v572, %v628
      %v631 = vmul.f32 %v575, %v628
      %v633 = vlaneseq
      %v634 = vshrl.u32 %v633, 7
      %v635 = vsub.s32 0, %v634
      %v636 = vrot.slane %v623, %v635
      %v638 = vadd.f32 %v630, %v636
      %v639 = vadd.f32 %v631, %v636
      %v640 = vmax.f32 %v638, 0.0
      %v641 = vmax.f32 %v639, 0.0
      %v642 = vmul.f32 %v616, %v628
      %v643 = vmul.f32 %v619, %v628
      %v644 = vadd.f32 %v642, %v636
      %v645 = vadd.f32 %v643, %v636
      %v646 = vmax.f32 %v644, 0.0
      %v647 = vmax.f32 %v645, 0.0
      %v648 = vmax.f32 %v640, %v646
      %v649 = vmax.f32 %v641, %v647
      %v650 = vrot.slane %v646, 7
      %v651 = vrot.slane %v647, 7
      %v652 = vsel %vm360, %v650, %v651
      %v653 = vsel %vm360, %v651, %v650
      %v654 = vsel %vm360, 0.0, %v653
      %v655 = vsel %vm364, 0.0, %v652
      %v656 = vmax.f32 %v648, %v654
      %v657 = vmax.f32 %v649, %v655
      %v658 = vpack.c.bf16 %v657, %v656
      %v660 = vunpack.c.l.b16 %v658
      %v661 = vunpack.c.h.b16 %v658
      %v662 = vpack.c.b16 %v660, %v660
      %v663 = vpack.c.b16 %v661, %v661
      %vm666 = vcmask 125952
      %667 = vst.msk [vmem:[%s338] sm:$0xf] %vm666, %v662
      %668 = vst.msk [vmem:[%s338 + $0x4] sm:$0xf] %vm666, %v663
      %p669 = scmp.lt.s32.totalorder %s18, 1
      %s670 = scalar_select %p669, %s18, 1
      %s671 = smul.addr %s670, 2
      %s672 = smul.addr %s671, 4
      %s673 = scalar_lea.vmem %s7, %s672
      // Predicated region
      $region49: #{densenet_forward.7} parent=47 // pred_check
        %p674 = pneg %p203
      $region50: #{densenet_forward.7} parent=47 // pred_check_branch
        %676 = sbr.rel (%p674) target = $region52
      $region51: #{densenet_forward.7} parent=47 // pred_region
        _
      $region52: #{densenet_forward.7} parent=47 // pred_fallthru
        _
    $region48: #{densenet_forward.7} parent=5 // pred_fallthru
      _
    %p677 = scmp.le.s32.totalorder 2, %s13
    // Predicated region
    $region53: #{densenet_forward.7} parent=5 // pred_check
      %p678 = pneg %p677
    $region54: #{densenet_forward.7} parent=5 // pred_check_branch
      %680 = sbr.rel (%p678) target = $region56
    $region55: #{densenet_forward.7} parent=5 // pred_region
      %s681 = ssub.s32 %s13, 2
      // Predicated region
      $region57: #{densenet_forward.7} parent=55 // pred_check
        %p682 = pneg %p209
      $region58: #{densenet_forward.7} parent=55 // pred_check_branch
        %684 = sbr.rel (%p682) target = $region60
      $region59: #{densenet_forward.7} parent=55 // pred_region
        %p685 = scmp.lt.s32.totalorder %s19, 1
        %s686 = scalar_select %p685, %s19, 1
        %s687 = smul.addr %s686, 2
        %s688 = smul.addr %s687, 4
        %s689 = scalar_lea.vmem %s7, %s688
      $region60: #{densenet_forward.7} parent=55 // pred_fallthru
        _
    $region56: #{densenet_forward.7} parent=5 // pred_fallthru
      _
  $region6: #{densenet_forward.7} parent=0 // loop_footer
    %s17 = sadd.s32 1, %s13
  $region7: #{densenet_forward.7} parent=0 // loop_footer_branch
    %12 = sbr.rel target = $region3
  $region8: #{densenet_forward.7} parent=0 // loop_exit
    _

// kernel: densenet_forward.8
$region0: #{densenet_forward.8}
  #allocation0 [shape = 'u32[]', space=smem, size = 0x4, offset = 0x4, fixed_abs, tag = 'smem constant byte address 0x4 - core index']
  #allocation1 [shape = 'u32[144,128]{1,0:T(1,128)}', space=vmem, size = 0x12000, scoped, tag = 'internal scratch']
  %s0 = inlined_call_operand.vmem [shape: bf16[2,16,16], index: 0, kind: input, shape index: {}]
  %s1 = inlined_call_operand.vmem [shape: f32[1,16], index: 1, kind: input, shape index: {}]
  %s2 = inlined_call_operand.vmem [shape: f32[1,16], index: 2, kind: input, shape index: {}]
  %s3 = inlined_call_operand.vmem [shape: bf16[16,16], index: 3, kind: input, shape index: {}]
  %s4 = inlined_call_operand.vmem [shape: f32[1,16], index: 4, kind: input, shape index: {}]
  %s5 = inlined_call_operand.vmem [shape: f32[1,16], index: 5, kind: input, shape index: {}]
  %s6 = inlined_call_operand.vmem [shape: bf16[48,8], index: 6, kind: input, shape index: {}]
  %s7 = inlined_call_operand.vmem [shape: bf16[2,16,8], index: 7, kind: output, shape index: {}]
  %s8 = sld [smem:[#allocation0]]
  $region61: #{densenet_forward.8} parent=0
    _
  %s10 = ssub.s32 1, %s8
  %s11 = scalar_select 0, %s10, %s8
  loop: start=0, step=1, limit=4
  $region2: #{densenet_forward.8} parent=0 // loop_pre_header
    _
  $region3: #{densenet_forward.8} parent=0 // loop_header
    %s13 = sphi 0, %s17
    %p14 = scmp.ge.s32.totalorder %s13, 4
    %s23 = sphi 0, %s25
    %s26 = sphi 0, %s23
    %s27 = sphi 0, %s26
    %s43 = sphi 0, %s27
    %s47 = sphi 0, %s47
    %s49 = sphi 0, %s47
    %s50 = sphi 0, %s49
    %s64 = sphi 0, %s50
    %s68 = sphi 0, %s68
    %s70 = sphi 0, %s68
    %s71 = sphi 0, %s70
    %s85 = sphi 0, %s71
    %s89 = sphi 0, %s89
    %s91 = sphi 0, %s89
    %s92 = sphi 0, %s91
    %s106 = sphi 0, %s92
    %s110 = sphi 0, %s110
    %s112 = sphi 0, %s110
    %s113 = sphi 0, %s112
    %s127 = sphi 0, %s113
    %s131 = sphi 0, %s131
    %s133 = sphi 0, %s131
    %s134 = sphi 0, %s133
    %s148 = sphi 0, %s134
    %s152 = sphi 0, %s152
    %s154 = sphi 0, %s152
    %s155 = sphi 0, %s154
    %s169 = sphi 0, %s155
    %s175 = sphi 0, %s177
    %s178 = sphi 0, %s175
    %s179 = sphi 0, %s178
    %s195 = sphi 0, %s179
  $region4: #{densenet_forward.8} parent=0 // loop_header_branch
    %16 = sbr.rel (%p14) target = $region8
  $region5: #{densenet_forward.8} parent=0 // loop_body
    %s18 = ssub.s32 %s13, 1
    %s19 = ssub.s32 %s13, 2
    %s20 = sadd.s32 %s13, 1
    %s21 = ssub.s32 %s13, %s20
    %p22 = scmp.eq.s32.totalorder %s21, 0
    %s24 = sadd.s32 %s23, 1
    %s25 = scalar_select %p22, %s23, %s24
    %p28 = pneg %p22
    %p29 = scmp.eq.s32.totalorder %s13, 1
    %p30 = por %p28, %p29
    %p31 = scmp.ne.s32.totalorder %s23, %s26
    %p32 = scmp.eq.s32.totalorder %s13, 0
    %p33 = por %p31, %p32
    %p34 = scmp.ne.s32.totalorder %s23, %s26
    %p35 = scmp.eq.s32.totalorder %s18, 1
    %p36 = por %p34, %p35
    %p37 = scmp.ne.s32.totalorder %s26, %s27
    %p38 = scmp.eq.s32.totalorder %s18, 0
    %p39 = por %p37, %p38
    %p40 = scmp.ne.s32.totalorder %s26, %s27
    %p41 = scmp.eq.s32.totalorder %s19, 1
    %p42 = por %p40, %p41
    %p44 = scmp.ne.s32.totalorder %s27, %s43
    %p45 = scmp.eq.s32.totalorder %s19, 0
    %p46 = por %p44, %p45
    %s48 = sadd.s32 %s47, 1
    %p51 = scmp.eq.s32.totalorder %s13, 1
    %p52 = scmp.ne.s32.totalorder %s47, %s49
    %p53 = scmp.eq.s32.totalorder %s13, 0
    %p54 = por %p52, %p53
    %p55 = scmp.ne.s32.totalorder %s47, %s49
    %p56 = scmp.eq.s32.totalorder %s18, 1
    %p57 = por %p55, %p56
    %p58 = scmp.ne.s32.totalorder %s49, %s50
    %p59 = scmp.eq.s32.totalorder %s18, 0
    %p60 = por %p58, %p59
    %p61 = scmp.ne.s32.totalorder %s49, %s50
    %p62 = scmp.eq.s32.totalorder %s19, 1
    %p63 = por %p61, %p62
    %p65 = scmp.ne.s32.totalorder %s50, %s64
    %p66 = scmp.eq.s32.totalorder %s19, 0
    %p67 = por %p65, %p66
    %s69 = sadd.s32 %s68, 1
    %p72 = scmp.eq.s32.totalorder %s13, 1
    %p73 = scmp.ne.s32.totalorder %s68, %s70
    %p74 = scmp.eq.s32.totalorder %s13, 0
    %p75 = por %p73, %p74
    %p76 = scmp.ne.s32.totalorder %s68, %s70
    %p77 = scmp.eq.s32.totalorder %s18, 1
    %p78 = por %p76, %p77
    %p79 = scmp.ne.s32.totalorder %s70, %s71
    %p80 = scmp.eq.s32.totalorder %s18, 0
    %p81 = por %p79, %p80
    %p82 = scmp.ne.s32.totalorder %s70, %s71
    %p83 = scmp.eq.s32.totalorder %s19, 1
    %p84 = por %p82, %p83
    %p86 = scmp.ne.s32.totalorder %s71, %s85
    %p87 = scmp.eq.s32.totalorder %s19, 0
    %p88 = por %p86, %p87
    %s90 = sadd.s32 %s89, 1
    %p93 = scmp.eq.s32.totalorder %s13, 1
    %p94 = scmp.ne.s32.totalorder %s89, %s91
    %p95 = scmp.eq.s32.totalorder %s13, 0
    %p96 = por %p94, %p95
    %p97 = scmp.ne.s32.totalorder %s89, %s91
    %p98 = scmp.eq.s32.totalorder %s18, 1
    %p99 = por %p97, %p98
    %p100 = scmp.ne.s32.totalorder %s91, %s92
    %p101 = scmp.eq.s32.totalorder %s18, 0
    %p102 = por %p100, %p101
    %p103 = scmp.ne.s32.totalorder %s91, %s92
    %p104 = scmp.eq.s32.totalorder %s19, 1
    %p105 = por %p103, %p104
    %p107 = scmp.ne.s32.totalorder %s92, %s106
    %p108 = scmp.eq.s32.totalorder %s19, 0
    %p109 = por %p107, %p108
    %s111 = sadd.s32 %s110, 1
    %p114 = scmp.eq.s32.totalorder %s13, 1
    %p115 = scmp.ne.s32.totalorder %s110, %s112
    %p116 = scmp.eq.s32.totalorder %s13, 0
    %p117 = por %p115, %p116
    %p118 = scmp.ne.s32.totalorder %s110, %s112
    %p119 = scmp.eq.s32.totalorder %s18, 1
    %p120 = por %p118, %p119
    %p121 = scmp.ne.s32.totalorder %s112, %s113
    %p122 = scmp.eq.s32.totalorder %s18, 0
    %p123 = por %p121, %p122
    %p124 = scmp.ne.s32.totalorder %s112, %s113
    %p125 = scmp.eq.s32.totalorder %s19, 1
    %p126 = por %p124, %p125
    %p128 = scmp.ne.s32.totalorder %s113, %s127
    %p129 = scmp.eq.s32.totalorder %s19, 0
    %p130 = por %p128, %p129
    %s132 = sadd.s32 %s131, 1
    %p135 = scmp.eq.s32.totalorder %s13, 1
    %p136 = scmp.ne.s32.totalorder %s131, %s133
    %p137 = scmp.eq.s32.totalorder %s13, 0
    %p138 = por %p136, %p137
    %p139 = scmp.ne.s32.totalorder %s131, %s133
    %p140 = scmp.eq.s32.totalorder %s18, 1
    %p141 = por %p139, %p140
    %p142 = scmp.ne.s32.totalorder %s133, %s134
    %p143 = scmp.eq.s32.totalorder %s18, 0
    %p144 = por %p142, %p143
    %p145 = scmp.ne.s32.totalorder %s133, %s134
    %p146 = scmp.eq.s32.totalorder %s19, 1
    %p147 = por %p145, %p146
    %p149 = scmp.ne.s32.totalorder %s134, %s148
    %p150 = scmp.eq.s32.totalorder %s19, 0
    %p151 = por %p149, %p150
    %s153 = sadd.s32 %s152, 1
    %p156 = scmp.eq.s32.totalorder %s13, 1
    %p157 = scmp.ne.s32.totalorder %s152, %s154
    %p158 = scmp.eq.s32.totalorder %s13, 0
    %p159 = por %p157, %p158
    %p160 = scmp.ne.s32.totalorder %s152, %s154
    %p161 = scmp.eq.s32.totalorder %s18, 1
    %p162 = por %p160, %p161
    %p163 = scmp.ne.s32.totalorder %s154, %s155
    %p164 = scmp.eq.s32.totalorder %s18, 0
    %p165 = por %p163, %p164
    %p166 = scmp.ne.s32.totalorder %s154, %s155
    %p167 = scmp.eq.s32.totalorder %s19, 1
    %p168 = por %p166, %p167
    %p170 = scmp.ne.s32.totalorder %s155, %s169
    %p171 = scmp.eq.s32.totalorder %s19, 0
    %p172 = por %p170, %p171
    %s173 = ssub.s32 %s13, %s20
    %p174 = scmp.eq.s32.totalorder %s173, 0
    %s176 = sadd.s32 %s175, 1
    %s177 = scalar_select %p174, %s175, %s176
    %p180 = pneg %p174
    %p181 = scmp.eq.s32.totalorder %s13, 1
    %p182 = por %p180, %p181
    %p183 = scmp.ne.s32.totalorder %s175, %s178
    %p184 = scmp.eq.s32.totalorder %s13, 0
    %p185 = por %p183, %p184
    %p186 = scmp.ne.s32.totalorder %s175, %s178
    %p187 = scmp.eq.s32.totalorder %s18, 1
    %p188 = por %p186, %p187
    %p189 = scmp.ne.s32.totalorder %s178, %s179
    %p190 = scmp.eq.s32.totalorder %s18, 0
    %p191 = por %p189, %p190
    %p192 = scmp.ne.s32.totalorder %s178, %s179
    %p193 = scmp.eq.s32.totalorder %s19, 1
    %p194 = por %p192, %p193
    %p196 = scmp.ne.s32.totalorder %s179, %s195
    %p197 = scmp.eq.s32.totalorder %s19, 0
    %p198 = por %p196, %p197
    %p199 = scmp.le.s32.totalorder 1, %s13
    %p200 = scmp.lt.s32.totalorder %s13, 3
    %p201 = pnand %p199, %p200
    %p202 = pneg %p201
    // Predicated region
    $region9: #{densenet_forward.8} parent=5 // pred_check
      _
    $region10: #{densenet_forward.8} parent=5 // pred_check_branch
      %204 = sbr.rel (%p201) target = $region12
    $region11: #{densenet_forward.8} parent=5 // pred_region
      %s205 = ssub.s32 %s13, 1
      // Predicated region
      $region13: #{densenet_forward.8} parent=11 // pred_check
        %p206 = pneg %p60
      $region14: #{densenet_forward.8} parent=11 // pred_check_branch
        %208 = sbr.rel (%p206) target = $region16
      $region15: #{densenet_forward.8} parent=11 // pred_region
        _
      $region16: #{densenet_forward.8} parent=11 // pred_fallthru
        _
      // Predicated region
      $region17: #{densenet_forward.8} parent=11 // pred_check
        %p209 = pneg %p81
      $region18: #{densenet_forward.8} parent=11 // pred_check_branch
        %211 = sbr.rel (%p209) target = $region20
      $region19: #{densenet_forward.8} parent=11 // pred_region
        _
      $region20: #{densenet_forward.8} parent=11 // pred_fallthru
        _
      // Predicated region
      $region21: #{densenet_forward.8} parent=11 // pred_check
        %p212 = pneg %p102
      $region22: #{densenet_forward.8} parent=11 // pred_check_branch
        %214 = sbr.rel (%p212) target = $region24
      $region23: #{densenet_forward.8} parent=11 // pred_region
        _
      $region24: #{densenet_forward.8} parent=11 // pred_fallthru
        _
      // Predicated region
      $region25: #{densenet_forward.8} parent=11 // pred_check
        %p215 = pneg %p123
      $region26: #{densenet_forward.8} parent=11 // pred_check_branch
        %217 = sbr.rel (%p215) target = $region28
      $region27: #{densenet_forward.8} parent=11 // pred_region
        _
      $region28: #{densenet_forward.8} parent=11 // pred_fallthru
        _
      // Predicated region
      $region29: #{densenet_forward.8} parent=11 // pred_check
        %p218 = pneg %p144
      $region30: #{densenet_forward.8} parent=11 // pred_check_branch
        %220 = sbr.rel (%p218) target = $region32
      $region31: #{densenet_forward.8} parent=11 // pred_region
        _
      $region32: #{densenet_forward.8} parent=11 // pred_fallthru
        _
      // Predicated region
      $region33: #{densenet_forward.8} parent=11 // pred_check
        %p221 = pneg %p165
      $region34: #{densenet_forward.8} parent=11 // pred_check_branch
        %223 = sbr.rel (%p221) target = $region36
      $region35: #{densenet_forward.8} parent=11 // pred_region
        _
      $region36: #{densenet_forward.8} parent=11 // pred_fallthru
        _
    $region12: #{densenet_forward.8} parent=5 // pred_fallthru
      _
    %p224 = scmp.lt.s32.totalorder %s13, 2
    // Predicated region
    $region37: #{densenet_forward.8} parent=5 // pred_check
      %p225 = pneg %p224
    $region38: #{densenet_forward.8} parent=5 // pred_check_branch
      %227 = sbr.rel (%p225) target = $region40
    $region39: #{densenet_forward.8} parent=5 // pred_region
      // Predicated region
      $region41: #{densenet_forward.8} parent=39 // pred_check
        %p228 = pneg %p33
      $region42: #{densenet_forward.8} parent=39 // pred_check_branch
        %230 = sbr.rel (%p228) target = $region44
      $region43: #{densenet_forward.8} parent=39 // pred_region
        %p231 = scmp.lt.s32.totalorder %s13, 1
        %s232 = scalar_select %p231, %s13, 1
        %s233 = smul.addr %s232, 2
        %s234 = smul.addr %s233, 4
        %s235 = scalar_lea.vmem %s0, %s234
      $region44: #{densenet_forward.8} parent=39 // pred_fallthru
        _
    $region40: #{densenet_forward.8} parent=5 // pred_fallthru
      _
    %p236 = scmp.le.s32.totalorder 1, %s13
    %p237 = scmp.lt.s32.totalorder %s13, 3
    %p238 = pnand %p236, %p237
    %p239 = pneg %p238
    // Predicated region
    $region45: #{densenet_forward.8} parent=5 // pred_check
      _
    $region46: #{densenet_forward.8} parent=5 // pred_check_branch
      %241 = sbr.rel (%p238) target = $region48
    $region47: #{densenet_forward.8} parent=5 // pred_region
      %s242 = ssub.s32 %s13, 1
      %p243 = scmp.lt.s32.totalorder %s18, 1
      %s244 = scalar_select %p243, %s18, 1
      %s245 = smul.addr %s244, 2
      %s246 = smul.addr %s245, 4
      %s247 = scalar_lea.vmem %s0, %s246
      %p248 = pneg %p39
      %p249 = pneg %p36
      %p250 = pneg %p60
      %p251 = pneg %p57
      %p252 = pneg %p81
      %p253 = pneg %p78
      %p254 = pneg %p102
      %p255 = pneg %p99
      %p256 = pneg %p123
      %p257 = pneg %p120
      %p258 = pneg %p144
      %p259 = pneg %p141
      %p260 = pneg %p165
      %p261 = pneg %p162
      %p262 = pneg %p191
      %p263 = pneg %p188
      %p264 = scmp.lt.s32.totalorder %s18, 1
      %s265 = scalar_select %p264, %s18, 1
      %s266 = smul.addr %s265, 2
      %s267 = smul.addr %s266, 4
      %s268 = scalar_lea.vmem %s7, %s267
      %p269 = scmp.lt.s32.totalorder %s18, 1
      %s270 = scalar_select %p269, %s18, 1
      %s271 = smul.addr %s270, 2
      %s272 = smul.addr %s271, 4
      %s273 = scalar_lea.vmem %s0, %s272
      %p274 = scmp.lt.s32.totalorder %s18, 1
      %s275 = scalar_select %p274, %s18, 1
      %s276 = smul.addr %s275, 2
      %s277 = smul.addr %s276, 4
      %s278 = scalar_lea.vmem %s7, %s277
      %v280 = vld [vmem:[%s273] sm:$0xf]
      %v281 = vld [vmem:[%s273 + $0x4] sm:$0xf]
      %v282 = vunpack.c.l.bf16 %v280
      %v283 = vunpack.c.l.bf16 %v281
      %v284 = vld [vmem:[%s1] sm:$0x1]
      %v286 = vlaneseq
      %v287 = vshrl.u32 %v286, 7
      %v288 = vsub.s32 0, %v287
      %v289 = vrot.slane %v284, %v288
      %v291 = vmul.f32 %v282, %v289
      %v292 = vmul.f32 %v283, %v289
      %v293 = vld [vmem:[%s2] sm:$0x1]
      %v295 = vlaneseq
      %v296 = vshrl.u32 %v295, 7
      %v297 = vsub.s32 0, %v296
      %v298 = vrot.slane %v293, %v297
      %v300 = vadd.f32 %v291, %v298
      %v301 = vadd.f32 %v292, %v298
      %v302 = vmax.f32 %v300, 0.0
      %v303 = vmax.f32 %v301, 0.0
      %v304 = vpack.c.bf16 %v303, %v302
      %v305 = vld [vmem:[%s3] sm:$0xf]
      %v306 = vld [vmem:[%s3 + $0x4] sm:$0xf]
      %v309 = vunpack.c.l.b16 %v305
      %v310 = vunpack.c.l.b16 %v306
      %v311 = vpack.c.b16 %v310, %v309
      %vm313 = vcmask 130048
      %v315 = vsel %vm313, %v304, 0
      %317 = vmatprep.subr.bf16.mxu0 0
      %318 = vmatpush1.bf16.msra.mxu0 %v311
      %319 = vmatprep.subr.bf16.mxu0 0
      %320 = vmatpush1.bf16.msra.mxu0 0
      %321 = vmatprep.subr.bf16.mxu0 0
      %322 = vmatpush1.bf16.msra.mxu0 0
      %323 = vmatprep.subr.bf16.mxu0 0
      %324 = vmatpush1.bf16.msra.mxu0 0
      %325 = vmatprep.subr.bf16.mxu0 0
      %326 = vmatpush1.bf16.msra.mxu0 0
      %327 = vmatprep.subr.bf16.mxu0 0
      %328 = vmatpush1.bf16.msra.mxu0 0
      %329 = vmatprep.subr.bf16.mxu0 0
      %330 = vmatpush1.bf16.msra.mxu0 0
      %331 = vmatprep.subr.bf16.mxu0 0
      %332 = vmatpush1.bf16.msra.mxu0 0
      %333 = vmatprep.subr.bf16.mxu0 0
      %334 = vmatpush1.bf16.msra.mxu0 0
      %335 = vmatprep.subr.bf16.mxu0 0
      %336 = vmatpush1.bf16.msra.mxu0 0
      %337 = vmatprep.subr.bf16.mxu0 0
      %338 = vmatpush1.bf16.msra.mxu0 0
      %339 = vmatprep.subr.bf16.mxu0 0
      %340 = vmatpush1.bf16.msra.mxu0 0
      %341 = vmatprep.subr.bf16.mxu0 0
      %342 = vmatpush1.bf16.msra.mxu0 0
      %343 = vmatprep.subr.bf16.mxu0 0
      %344 = vmatpush1.bf16.msra.mxu0 0
      %345 = vmatprep.subr.bf16.mxu0 0
      %346 = vmatpush1.bf16.msra.mxu0 0
      %347 = vmatprep.subr.bf16.mxu0 0
      %348 = vmatpush1.bf16.msra.mxu0 0
      %349 = vmatprep.mubr.bf16.mxu0 0
      %350 = vmatmul.mubr.bf16.gmra.mrb[0].mxu0 %v315
      %v351 = vpop.f32.mrb[0].mxu0
      %v352 = vadd.f32 0.0, %v351
      %v353 = vpop.f32.mrb[0].mxu0
      %v354 = vpop.f32.mrb[0].mxu0
      %v355 = vadd.f32 0.0, %v354
      %v356 = vpop.f32.mrb[0].mxu0
      %357 = vdwg.mxu0
      %v358 = vld [vmem:[%s4] sm:$0x1]
      %v360 = vlaneseq
      %v361 = vshrl.u32 %v360, 7
      %v362 = vsub.s32 0, %v361
      %v363 = vrot.slane %v358, %v362
      %v365 = vmul.f32 %v352, %v363
      %v366 = vmul.f32 %v355, %v363
      %v367 = vld [vmem:[%s5] sm:$0x1]
      %v369 = vlaneseq
      %v370 = vshrl.u32 %v369, 7
      %v371 = vsub.s32 0, %v370
      %v372 = vrot.slane %v367, %v371
      %v374 = vadd.f32 %v365, %v372
      %v375 = vadd.f32 %v366, %v372
      %v376 = vmax.f32 %v374, 0.0
      %v377 = vmax.f32 %v375, 0.0
      %v378 = vrot.slane %v376, 7
      %v379 = vrot.slane %v377, 7
      %v380 = vlaneseq
      %v381 = vshrl.u32 %v380, 7
      %vm382 = vcmp.lt.s32.totalorder %v381, 1
      %v383 = vsel %vm382, %v378, %v379
      %v384 = vsel %vm382, %v379, %v378
      %v385 = vadd.s32 %v381, 8
      %vm386 = vcmp.lt.s32.totalorder %v385, 1
      %v387 = vsel %vm382, 0.0, %v384
      %v388 = vsel %vm386, 0.0, %v383
      %v389 = vrot.slane %v376, 1
      %v390 = vrot.slane %v377, 1
      %vm391 = vcmp.lt.s32.totalorder %v381, 7
      %v392 = vsel %vm391, %v389, %v390
      %v393 = vsel %vm391, %v390, %v389
      %vm394 = vcmp.ge.s32.totalorder %v381, 15
      %vm395 = vcmp.ge.s32.totalorder %v385, 15
      %v396 = vsel %vm394, 0.0, %v392
      %v397 = vsel %vm395, 0.0, %v393
      %400 = vrot.lane.b32.xlu0 %v376, 16
      %v401 = vpop.permute.xlu0 %400
      %402 = vrot.lane.b32.xlu0 %v377, 16
      %v403 = vpop.permute.xlu0 %402
      %408 = vrot.lane.b32.xlu0 %v396, 32
      %v409 = vpop.permute.xlu0 %408
      %410 = vrot.lane.b32.xlu0 %v397, 32
      %v411 = vpop.permute.xlu0 %410
      %v414 = vsel %vm313, %v387, %v401
      %v415 = vsel %vm313, %v388, %v403
      %vm416 = vcmask 261120
      %v417 = vsel %vm416, %v414, %v409
      %v418 = vsel %vm416, %v415, %v411
      %v419 = vpack.c.bf16 %v418, %v417
      %v420 = vld [vmem:[%s6] sm:$0xf]
      %v421 = vld [vmem:[%s6 + $0x4] sm:$0xf]
      %v422 = vld [vmem:[%s6 + $0x8] sm:$0xf]
      %v423 = vld [vmem:[%s6 + $0xc] sm:$0xf]
      %v424 = vld [vmem:[%s6 + $0x10] sm:$0xf]
      %v425 = vld [vmem:[%s6 + $0x14] sm:$0xf]
      %v432 = vunpack.c.l.b16 %v420
      %v433 = vunpack.c.l.b16 %v421
      %v434 = vunpack.c.l.b16 %v422
      %v435 = vunpack.c.l.b16 %v423
      %v436 = vunpack.c.l.b16 %v424
      %v437 = vunpack.c.l.b16 %v425
      %v438 = vpack.c.b16 %v433, %v432
      %v439 = vpack.c.b16 %v435, %v434
      %v440 = vpack.c.b16 %v437, %v436
      %vm444 = vcmask 392192
      %v446 = vsel %vm444, %v419, 0
      %448 = vmatprep.subr.bf16.mxu0 0
      %449 = vmatpush1.bf16.msra.mxu0 %v438
      %450 = vmatprep.subr.bf16.mxu0 0
      %451 = vmatpush1.bf16.msra.mxu0 %v439
      %452 = vmatprep.subr.bf16.mxu0 0
      %453 = vmatpush1.bf16.msra.mxu0 %v440
      %454 = vmatprep.subr.bf16.mxu0 0
      %455 = vmatpush1.bf16.msra.mxu0 0
      %456 = vmatprep.subr.bf16.mxu0 0
      %457 = vmatpush1.bf16.msra.mxu0 0
      %458 = vmatprep.subr.bf16.mxu0 0
      %459 = vmatpush1.bf16.msra.mxu0 0
      %460 = vmatprep.subr.bf16.mxu0 0
      %461 = vmatpush1.bf16.msra.mxu0 0
      %462 = vmatprep.subr.bf16.mxu0 0
      %463 = vmatpush1.bf16.msra.mxu0 0
      %464 = vmatprep.subr.bf16.mxu0 0
      %465 = vmatpush1.bf16.msra.mxu0 0
      %466 = vmatprep.subr.bf16.mxu0 0
      %467 = vmatpush1.bf16.msra.mxu0 0
      %468 = vmatprep.subr.bf16.mxu0 0
      %469 = vmatpush1.bf16.msra.mxu0 0
      %470 = vmatprep.subr.bf16.mxu0 0
      %471 = vmatpush1.bf16.msra.mxu0 0
      %472 = vmatprep.subr.bf16.mxu0 0
      %473 = vmatpush1.bf16.msra.mxu0 0
      %474 = vmatprep.subr.bf16.mxu0 0
      %475 = vmatpush1.bf16.msra.mxu0 0
      %476 = vmatprep.subr.bf16.mxu0 0
      %477 = vmatpush1.bf16.msra.mxu0 0
      %478 = vmatprep.subr.bf16.mxu0 0
      %479 = vmatpush1.bf16.msra.mxu0 0
      %480 = vmatprep.mubr.bf16.mxu0 0
      %481 = vmatmul.mubr.bf16.gmra.mrb[0].mxu0 %v446
      %v482 = vpop.f32.mrb[0].mxu0
      %v483 = vadd.f32 0.0, %v482
      %v484 = vpop.f32.mrb[0].mxu0
      %v485 = vpop.f32.mrb[0].mxu0
      %v486 = vadd.f32 0.0, %v485
      %v487 = vpop.f32.mrb[0].mxu0
      %488 = vdwg.mxu0
      %v489 = vpack.c.bf16 %v486, %v483
      %v491 = vunpack.c.l.b16 %v489
      %v492 = vunpack.c.h.b16 %v489
      %v493 = vpack.c.b16 %v491, %v491
      %v494 = vpack.c.b16 %v492, %v492
      %vm497 = vcmask 60416
      %498 = vst.msk [vmem:[%s278] sm:$0xf] %vm497, %v493
      %499 = vst.msk [vmem:[%s278 + $0x4] sm:$0xf] %vm497, %v494
      %p500 = scmp.lt.s32.totalorder %s18, 1
      %s501 = scalar_select %p500, %s18, 1
      %s502 = smul.addr %s501, 2
      %s503 = smul.addr %s502, 4
      %s504 = scalar_lea.vmem %s7, %s503
      // Predicated region
      $region49: #{densenet_forward.8} parent=47 // pred_check
        %p505 = pneg %p188
      $region50: #{densenet_forward.8} parent=47 // pred_check_branch
        %507 = sbr.rel (%p505) target = $region52
      $region51: #{densenet_forward.8} parent=47 // pred_region
        _
      $region52: #{densenet_forward.8} parent=47 // pred_fallthru
        _
    $region48: #{densenet_forward.8} parent=5 // pred_fallthru
      _
    %p508 = scmp.le.s32.totalorder 2, %s13
    // Predicated region
    $region53: #{densenet_forward.8} parent=5 // pred_check
      %p509 = pneg %p508
    $region54: #{densenet_forward.8} parent=5 // pred_check_branch
      %511 = sbr.rel (%p509) target = $region56
    $region55: #{densenet_forward.8} parent=5 // pred_region
      %s512 = ssub.s32 %s13, 2
      // Predicated region
      $region57: #{densenet_forward.8} parent=55 // pred_check
        %p513 = pneg %p194
      $region58: #{densenet_forward.8} parent=55 // pred_check_branch
        %515 = sbr.rel (%p513) target = $region60
      $region59: #{densenet_forward.8} parent=55 // pred_region
        %p516 = scmp.lt.s32.totalorder %s19, 1
        %s517 = scalar_select %p516, %s19, 1
        %s518 = smul.addr %s517, 2
        %s519 = smul.addr %s518, 4
        %s520 = scalar_lea.vmem %s7, %s519
      $region60: #{densenet_forward.8} parent=55 // pred_fallthru
        _
    $region56: #{densenet_forward.8} parent=5 // pred_fallthru
      _
  $region6: #{densenet_forward.8} parent=0 // loop_footer
    %s17 = sadd.s32 1, %s13
  $region7: #{densenet_forward.8} parent=0 // loop_footer_branch
    %12 = sbr.rel target = $region3
  $region8: #{densenet_forward.8} parent=0 // loop_exit
    _

// kernel: densenet_forward.10
$region0: #{densenet_forward.10}
  #allocation0 [shape = 'u32[]', space=smem, size = 0x4, offset = 0x4, fixed_abs, tag = 'smem constant byte address 0x4 - core index']
  #allocation1 [shape = 'u32[144,128]{1,0:T(1,128)}', space=vmem, size = 0x12000, scoped, tag = 'internal scratch']
  %s0 = inlined_call_operand.vmem [shape: bf16[2,8,16], index: 0, kind: input, shape index: {}]
  %s1 = inlined_call_operand.vmem [shape: bf16[2,8,8], index: 1, kind: input, shape index: {}]
  %s2 = inlined_call_operand.vmem [shape: bf16[2,8,8], index: 2, kind: input, shape index: {}]
  %s3 = inlined_call_operand.vmem [shape: bf16[2,8,16], index: 3, kind: input, shape index: {}]
  %s4 = inlined_call_operand.vmem [shape: bf16[2,8,8], index: 4, kind: input, shape index: {}]
  %s5 = inlined_call_operand.vmem [shape: bf16[2,8,8], index: 5, kind: input, shape index: {}]
  %s6 = inlined_call_operand.vmem [shape: f32[1,32], index: 6, kind: input, shape index: {}]
  %s7 = inlined_call_operand.vmem [shape: f32[1,32], index: 7, kind: input, shape index: {}]
  %s8 = inlined_call_operand.vmem [shape: bf16[32,16], index: 8, kind: input, shape index: {}]
  %s9 = inlined_call_operand.vmem [shape: bf16[2,8,16], index: 9, kind: output, shape index: {}]
  %s10 = sld [smem:[#allocation0]]
  $region69: #{densenet_forward.10} parent=0
    _
  %s12 = ssub.s32 1, %s10
  %s13 = scalar_select 0, %s12, %s10
  loop: start=0, step=1, limit=4
  $region2: #{densenet_forward.10} parent=0 // loop_pre_header
    _
  $region3: #{densenet_forward.10} parent=0 // loop_header
    %s15 = sphi 0, %s19
    %p16 = scmp.ge.s32.totalorder %s15, 4
    %s25 = sphi 0, %s27
    %s28 = sphi 0, %s25
    %s29 = sphi 0, %s28
    %s45 = sphi 0, %s29
    %s51 = sphi 0, %s53
    %s54 = sphi 0, %s51
    %s55 = sphi 0, %s54
    %s71 = sphi 0, %s55
    %s77 = sphi 0, %s79
    %s80 = sphi 0, %s77
    %s81 = sphi 0, %s80
    %s97 = sphi 0, %s81
    %s103 = sphi 0, %s105
    %s106 = sphi 0, %s103
    %s107 = sphi 0, %s106
    %s123 = sphi 0, %s107
    %s129 = sphi 0, %s131
    %s132 = sphi 0, %s129
    %s133 = sphi 0, %s132
    %s149 = sphi 0, %s133
    %s155 = sphi 0, %s157
    %s158 = sphi 0, %s155
    %s159 = sphi 0, %s158
    %s175 = sphi 0, %s159
    %s179 = sphi 0, %s179
    %s181 = sphi 0, %s179
    %s182 = sphi 0, %s181
    %s196 = sphi 0, %s182
    %s200 = sphi 0, %s200
    %s202 = sphi 0, %s200
    %s203 = sphi 0, %s202
    %s217 = sphi 0, %s203
    %s221 = sphi 0, %s221
    %s223 = sphi 0, %s221
    %s224 = sphi 0, %s223
    %s238 = sphi 0, %s224
    %s244 = sphi 0, %s246
    %s247 = sphi 0, %s244
    %s248 = sphi 0, %s247
    %s264 = sphi 0, %s248
  $region4: #{densenet_forward.10} parent=0 // loop_header_branch
    %18 = sbr.rel (%p16) target = $region8
  $region5: #{densenet_forward.10} parent=0 // loop_body
    %s20 = ssub.s32 %s15, 1
    %s21 = ssub.s32 %s15, 2
    %s22 = sadd.s32 %s15, 1
    %s23 = ssub.s32 %s15, %s22
    %p24 = scmp.eq.s32.totalorder %s23, 0
    %s26 = sadd.s32 %s25, 1
    %s27 = scalar_select %p24, %s25, %s26
    %p30 = pneg %p24
    %p31 = scmp.eq.s32.totalorder %s15, 1
    %p32 = por %p30, %p31
    %p33 = scmp.ne.s32.totalorder %s25, %s28
    %p34 = scmp.eq.s32.totalorder %s15, 0
    %p35 = por %p33, %p34
    %p36 = scmp.ne.s32.totalorder %s25, %s28
    %p37 = scmp.eq.s32.totalorder %s20, 1
    %p38 = por %p36, %p37
    %p39 = scmp.ne.s32.totalorder %s28, %s29
    %p40 = scmp.eq.s32.totalorder %s20, 0
    %p41 = por %p39, %p40
    %p42 = scmp.ne.s32.totalorder %s28, %s29
    %p43 = scmp.eq.s32.totalorder %s21, 1
    %p44 = por %p42, %p43
    %p46 = scmp.ne.s32.totalorder %s29, %s45
    %p47 = scmp.eq.s32.totalorder %s21, 0
    %p48 = por %p46, %p47
    %s49 = ssub.s32 %s15, %s22
    %p50 = scmp.eq.s32.totalorder %s49, 0
    %s52 = sadd.s32 %s51, 1
    %s53 = scalar_select %p50, %s51, %s52
    %p56 = pneg %p50
    %p57 = scmp.eq.s32.totalorder %s15, 1
    %p58 = por %p56, %p57
    %p59 = scmp.ne.s32.totalorder %s51, %s54
    %p60 = scmp.eq.s32.totalorder %s15, 0
    %p61 = por %p59, %p60
    %p62 = scmp.ne.s32.totalorder %s51, %s54
    %p63 = scmp.eq.s32.totalorder %s20, 1
    %p64 = por %p62, %p63
    %p65 = scmp.ne.s32.totalorder %s54, %s55
    %p66 = scmp.eq.s32.totalorder %s20, 0
    %p67 = por %p65, %p66
    %p68 = scmp.ne.s32.totalorder %s54, %s55
    %p69 = scmp.eq.s32.totalorder %s21, 1
    %p70 = por %p68, %p69
    %p72 = scmp.ne.s32.totalorder %s55, %s71
    %p73 = scmp.eq.s32.totalorder %s21, 0
    %p74 = por %p72, %p73
    %s75 = ssub.s32 %s15, %s22
    %p76 = scmp.eq.s32.totalorder %s75, 0
    %s78 = sadd.s32 %s77, 1
    %s79 = scalar_select %p76, %s77, %s78
    %p82 = pneg %p76
    %p83 = scmp.eq.s32.totalorder %s15, 1
    %p84 = por %p82, %p83
    %p85 = scmp.ne.s32.totalorder %s77, %s80
    %p86 = scmp.eq.s32.totalorder %s15, 0
    %p87 = por %p85, %p86
    %p88 = scmp.ne.s32.totalorder %s77, %s80
    %p89 = scmp.eq.s32.totalorder %s20, 1
    %p90 = por %p88, %p89
    %p91 = scmp.ne.s32.totalorder %s80, %s81
    %p92 = scmp.eq.s32.totalorder %s20, 0
    %p93 = por %p91, %p92
    %p94 = scmp.ne.s32.totalorder %s80, %s81
    %p95 = scmp.eq.s32.totalorder %s21, 1
    %p96 = por %p94, %p95
    %p98 = scmp.ne.s32.totalorder %s81, %s97
    %p99 = scmp.eq.s32.totalorder %s21, 0
    %p100 = por %p98, %p99
    %s101 = ssub.s32 %s15, %s22
    %p102 = scmp.eq.s32.totalorder %s101, 0
    %s104 = sadd.s32 %s103, 1
    %s105 = scalar_select %p102, %s103, %s104
    %p108 = pneg %p102
    %p109 = scmp.eq.s32.totalorder %s15, 1
    %p110 = por %p108, %p109
    %p111 = scmp.ne.s32.totalorder %s103, %s106
    %p112 = scmp.eq.s32.totalorder %s15, 0
    %p113 = por %p111, %p112
    %p114 = scmp.ne.s32.totalorder %s103, %s106
    %p115 = scmp.eq.s32.totalorder %s20, 1
    %p116 = por %p114, %p115
    %p117 = scmp.ne.s32.totalorder %s106, %s107
    %p118 = scmp.eq.s32.totalorder %s20, 0
    %p119 = por %p117, %p118
    %p120 = scmp.ne.s32.totalorder %s106, %s107
    %p121 = scmp.eq.s32.totalorder %s21, 1
    %p122 = por %p120, %p121
    %p124 = scmp.ne.s32.totalorder %s107, %s123
    %p125 = scmp.eq.s32.totalorder %s21, 0
    %p126 = por %p124, %p125
    %s127 = ssub.s32 %s15, %s22
    %p128 = scmp.eq.s32.totalorder %s127, 0
    %s130 = sadd.s32 %s129, 1
    %s131 = scalar_select %p128, %s129, %s130
    %p134 = pneg %p128
    %p135 = scmp.eq.s32.totalorder %s15, 1
    %p136 = por %p134, %p135
    %p137 = scmp.ne.s32.totalorder %s129, %s132
    %p138 = scmp.eq.s32.totalorder %s15, 0
    %p139 = por %p137, %p138
    %p140 = scmp.ne.s32.totalorder %s129, %s132
    %p141 = scmp.eq.s32.totalorder %s20, 1
    %p142 = por %p140, %p141
    %p143 = scmp.ne.s32.totalorder %s132, %s133
    %p144 = scmp.eq.s32.totalorder %s20, 0
    %p145 = por %p143, %p144
    %p146 = scmp.ne.s32.totalorder %s132, %s133
    %p147 = scmp.eq.s32.totalorder %s21, 1
    %p148 = por %p146, %p147
    %p150 = scmp.ne.s32.totalorder %s133, %s149
    %p151 = scmp.eq.s32.totalorder %s21, 0
    %p152 = por %p150, %p151
    %s153 = ssub.s32 %s15, %s22
    %p154 = scmp.eq.s32.totalorder %s153, 0
    %s156 = sadd.s32 %s155, 1
    %s157 = scalar_select %p154, %s155, %s156
    %p160 = pneg %p154
    %p161 = scmp.eq.s32.totalorder %s15, 1
    %p162 = por %p160, %p161
    %p163 = scmp.ne.s32.totalorder %s155, %s158
    %p164 = scmp.eq.s32.totalorder %s15, 0
    %p165 = por %p163, %p164
    %p166 = scmp.ne.s32.totalorder %s155, %s158
    %p167 = scmp.eq.s32.totalorder %s20, 1
    %p168 = por %p166, %p167
    %p169 = scmp.ne.s32.totalorder %s158, %s159
    %p170 = scmp.eq.s32.totalorder %s20, 0
    %p171 = por %p169, %p170
    %p172 = scmp.ne.s32.totalorder %s158, %s159
    %p173 = scmp.eq.s32.totalorder %s21, 1
    %p174 = por %p172, %p173
    %p176 = scmp.ne.s32.totalorder %s159, %s175
    %p177 = scmp.eq.s32.totalorder %s21, 0
    %p178 = por %p176, %p177
    %s180 = sadd.s32 %s179, 1
    %p183 = scmp.eq.s32.totalorder %s15, 1
    %p184 = scmp.ne.s32.totalorder %s179, %s181
    %p185 = scmp.eq.s32.totalorder %s15, 0
    %p186 = por %p184, %p185
    %p187 = scmp.ne.s32.totalorder %s179, %s181
    %p188 = scmp.eq.s32.totalorder %s20, 1
    %p189 = por %p187, %p188
    %p190 = scmp.ne.s32.totalorder %s181, %s182
    %p191 = scmp.eq.s32.totalorder %s20, 0
    %p192 = por %p190, %p191
    %p193 = scmp.ne.s32.totalorder %s181, %s182
    %p194 = scmp.eq.s32.totalorder %s21, 1
    %p195 = por %p193, %p194
    %p197 = scmp.ne.s32.totalorder %s182, %s196
    %p198 = scmp.eq.s32.totalorder %s21, 0
    %p199 = por %p197, %p198
    %s201 = sadd.s32 %s200, 1
    %p204 = scmp.eq.s32.totalorder %s15, 1
    %p205 = scmp.ne.s32.totalorder %s200, %s202
    %p206 = scmp.eq.s32.totalorder %s15, 0
    %p207 = por %p205, %p206
    %p208 = scmp.ne.s32.totalorder %s200, %s202
    %p209 = scmp.eq.s32.totalorder %s20, 1
    %p210 = por %p208, %p209
    %p211 = scmp.ne.s32.totalorder %s202, %s203
    %p212 = scmp.eq.s32.totalorder %s20, 0
    %p213 = por %p211, %p212
    %p214 = scmp.ne.s32.totalorder %s202, %s203
    %p215 = scmp.eq.s32.totalorder %s21, 1
    %p216 = por %p214, %p215
    %p218 = scmp.ne.s32.totalorder %s203, %s217
    %p219 = scmp.eq.s32.totalorder %s21, 0
    %p220 = por %p218, %p219
    %s222 = sadd.s32 %s221, 1
    %p225 = scmp.eq.s32.totalorder %s15, 1
    %p226 = scmp.ne.s32.totalorder %s221, %s223
    %p227 = scmp.eq.s32.totalorder %s15, 0
    %p228 = por %p226, %p227
    %p229 = scmp.ne.s32.totalorder %s221, %s223
    %p230 = scmp.eq.s32.totalorder %s20, 1
    %p231 = por %p229, %p230
    %p232 = scmp.ne.s32.totalorder %s223, %s224
    %p233 = scmp.eq.s32.totalorder %s20, 0
    %p234 = por %p232, %p233
    %p235 = scmp.ne.s32.totalorder %s223, %s224
    %p236 = scmp.eq.s32.totalorder %s21, 1
    %p237 = por %p235, %p236
    %p239 = scmp.ne.s32.totalorder %s224, %s238
    %p240 = scmp.eq.s32.totalorder %s21, 0
    %p241 = por %p239, %p240
    %s242 = ssub.s32 %s15, %s22
    %p243 = scmp.eq.s32.totalorder %s242, 0
    %s245 = sadd.s32 %s244, 1
    %s246 = scalar_select %p243, %s244, %s245
    %p249 = pneg %p243
    %p250 = scmp.eq.s32.totalorder %s15, 1
    %p251 = por %p249, %p250
    %p252 = scmp.ne.s32.totalorder %s244, %s247
    %p253 = scmp.eq.s32.totalorder %s15, 0
    %p254 = por %p252, %p253
    %p255 = scmp.ne.s32.totalorder %s244, %s247
    %p256 = scmp.eq.s32.totalorder %s20, 1
    %p257 = por %p255, %p256
    %p258 = scmp.ne.s32.totalorder %s247, %s248
    %p259 = scmp.eq.s32.totalorder %s20, 0
    %p260 = por %p258, %p259
    %p261 = scmp.ne.s32.totalorder %s247, %s248
    %p262 = scmp.eq.s32.totalorder %s21, 1
    %p263 = por %p261, %p262
    %p265 = scmp.ne.s32.totalorder %s248, %s264
    %p266 = scmp.eq.s32.totalorder %s21, 0
    %p267 = por %p265, %p266
    %p268 = scmp.le.s32.totalorder 1, %s15
    %p269 = scmp.lt.s32.totalorder %s15, 3
    %p270 = pnand %p268, %p269
    %p271 = pneg %p270
    // Predicated region
    $region9: #{densenet_forward.10} parent=5 // pred_check
      _
    $region10: #{densenet_forward.10} parent=5 // pred_check_branch
      %273 = sbr.rel (%p270) target = $region12
    $region11: #{densenet_forward.10} parent=5 // pred_region
      %s274 = ssub.s32 %s15, 1
      // Predicated region
      $region13: #{densenet_forward.10} parent=11 // pred_check
        %p275 = pneg %p192
      $region14: #{densenet_forward.10} parent=11 // pred_check_branch
        %277 = sbr.rel (%p275) target = $region16
      $region15: #{densenet_forward.10} parent=11 // pred_region
        _
      $region16: #{densenet_forward.10} parent=11 // pred_fallthru
        _
      // Predicated region
      $region17: #{densenet_forward.10} parent=11 // pred_check
        %p278 = pneg %p213
      $region18: #{densenet_forward.10} parent=11 // pred_check_branch
        %280 = sbr.rel (%p278) target = $region20
      $region19: #{densenet_forward.10} parent=11 // pred_region
        _
      $region20: #{densenet_forward.10} parent=11 // pred_fallthru
        _
      // Predicated region
      $region21: #{densenet_forward.10} parent=11 // pred_check
        %p281 = pneg %p234
      $region22: #{densenet_forward.10} parent=11 // pred_check_branch
        %283 = sbr.rel (%p281) target = $region24
      $region23: #{densenet_forward.10} parent=11 // pred_region
        _
      $region24: #{densenet_forward.10} parent=11 // pred_fallthru
        _
    $region12: #{densenet_forward.10} parent=5 // pred_fallthru
      _
    %p284 = scmp.lt.s32.totalorder %s15, 2
    // Predicated region
    $region25: #{densenet_forward.10} parent=5 // pred_check
      %p285 = pneg %p284
    $region26: #{densenet_forward.10} parent=5 // pred_check_branch
      %287 = sbr.rel (%p285) target = $region28
    $region27: #{densenet_forward.10} parent=5 // pred_region
      // Predicated region
      $region29: #{densenet_forward.10} parent=27 // pred_check
        %p288 = pneg %p35
      $region30: #{densenet_forward.10} parent=27 // pred_check_branch
        %290 = sbr.rel (%p288) target = $region32
      $region31: #{densenet_forward.10} parent=27 // pred_region
        %p291 = scmp.lt.s32.totalorder %s15, 1
        %s292 = scalar_select %p291, %s15, 1
        %s293 = smul.addr %s292, 4
        %s294 = scalar_lea.vmem %s0, %s293
      $region32: #{densenet_forward.10} parent=27 // pred_fallthru
        _
      // Predicated region
      $region33: #{densenet_forward.10} parent=27 // pred_check
        %p295 = pneg %p61
      $region34: #{densenet_forward.10} parent=27 // pred_check_branch
        %297 = sbr.rel (%p295) target = $region36
      $region35: #{densenet_forward.10} parent=27 // pred_region
        %p298 = scmp.lt.s32.totalorder %s15, 1
        %s299 = scalar_select %p298, %s15, 1
        %s300 = smul.addr %s299, 4
        %s301 = scalar_lea.vmem %s1, %s300
      $region36: #{densenet_forward.10} parent=27 // pred_fallthru
        _
      // Predicated region
      $region37: #{densenet_forward.10} parent=27 // pred_check
        %p302 = pneg %p87
      $region38: #{densenet_forward.10} parent=27 // pred_check_branch
        %304 = sbr.rel (%p302) target = $region40
      $region39: #{densenet_forward.10} parent=27 // pred_region
        %p305 = scmp.lt.s32.totalorder %s15, 1
        %s306 = scalar_select %p305, %s15, 1
        %s307 = smul.addr %s306, 4
        %s308 = scalar_lea.vmem %s2, %s307
      $region40: #{densenet_forward.10} parent=27 // pred_fallthru
        _
      // Predicated region
      $region41: #{densenet_forward.10} parent=27 // pred_check
        %p309 = pneg %p113
      $region42: #{densenet_forward.10} parent=27 // pred_check_branch
        %311 = sbr.rel (%p309) target = $region44
      $region43: #{densenet_forward.10} parent=27 // pred_region
        %p312 = scmp.lt.s32.totalorder %s15, 1
        %s313 = scalar_select %p312, %s15, 1
        %s314 = smul.addr %s313, 4
        %s315 = scalar_lea.vmem %s3, %s314
      $region44: #{densenet_forward.10} parent=27 // pred_fallthru
        _
      // Predicated region
      $region45: #{densenet_forward.10} parent=27 // pred_check
        %p316 = pneg %p139
      $region46: #{densenet_forward.10} parent=27 // pred_check_branch
        %318 = sbr.rel (%p316) target = $region48
      $region47: #{densenet_forward.10} parent=27 // pred_region
        %p319 = scmp.lt.s32.totalorder %s15, 1
        %s320 = scalar_select %p319, %s15, 1
        %s321 = smul.addr %s320, 4
        %s322 = scalar_lea.vmem %s4, %s321
      $region48: #{densenet_forward.10} parent=27 // pred_fallthru
        _
      // Predicated region
      $region49: #{densenet_forward.10} parent=27 // pred_check
        %p323 = pneg %p165
      $region50: #{densenet_forward.10} parent=27 // pred_check_branch
        %325 = sbr.rel (%p323) target = $region52
      $region51: #{densenet_forward.10} parent=27 // pred_region
        %p326 = scmp.lt.s32.totalorder %s15, 1
        %s327 = scalar_select %p326, %s15, 1
        %s328 = smul.addr %s327, 4
        %s329 = scalar_lea.vmem %s5, %s328
      $region52: #{densenet_forward.10} parent=27 // pred_fallthru
        _
    $region28: #{densenet_forward.10} parent=5 // pred_fallthru
      _
    %p330 = scmp.le.s32.totalorder 1, %s15
    %p331 = scmp.lt.s32.totalorder %s15, 3
    %p332 = pnand %p330, %p331
    %p333 = pneg %p332
    // Predicated region
    $region53: #{densenet_forward.10} parent=5 // pred_check
      _
    $region54: #{densenet_forward.10} parent=5 // pred_check_branch
      %335 = sbr.rel (%p332) target = $region56
    $region55: #{densenet_forward.10} parent=5 // pred_region
      %s336 = ssub.s32 %s15, 1
      %p337 = scmp.lt.s32.totalorder %s20, 1
      %s338 = scalar_select %p337, %s20, 1
      %s339 = smul.addr %s338, 4
      %s340 = scalar_lea.vmem %s0, %s339
      %p341 = pneg %p41
      %p342 = pneg %p38
      %p343 = scmp.lt.s32.totalorder %s20, 1
      %s344 = scalar_select %p343, %s20, 1
      %s345 = smul.addr %s344, 4
      %s346 = scalar_lea.vmem %s1, %s345
      %p347 = pneg %p67
      %p348 = pneg %p64
      %p349 = scmp.lt.s32.totalorder %s20, 1
      %s350 = scalar_select %p349, %s20, 1
      %s351 = smul.addr %s350, 4
      %s352 = scalar_lea.vmem %s2, %s351
      %p353 = pneg %p93
      %p354 = pneg %p90
      %p355 = scmp.lt.s32.totalorder %s20, 1
      %s356 = scalar_select %p355, %s20, 1
      %s357 = smul.addr %s356, 4
      %s358 = scalar_lea.vmem %s3, %s357
      %p359 = pneg %p119
      %p360 = pneg %p116
      %p361 = scmp.lt.s32.totalorder %s20, 1
      %s362 = scalar_select %p361, %s20, 1
      %s363 = smul.addr %s362, 4
      %s364 = scalar_lea.vmem %s4, %s363
      %p365 = pneg %p145
      %p366 = pneg %p142
      %p367 = scmp.lt.s32.totalorder %s20, 1
      %s368 = scalar_select %p367, %s20, 1
      %s369 = smul.addr %s368, 4
      %s370 = scalar_lea.vmem %s5, %s369
      %p371 = pneg %p171
      %p372 = pneg %p168
      %p373 = pneg %p192
      %p374 = pneg %p189
      %p375 = pneg %p213
      %p376 = pneg %p210
      %p377 = pneg %p234
      %p378 = pneg %p231
      %p379 = pneg %p260
      %p380 = pneg %p257
      %p381 = scmp.lt.s32.totalorder %s20, 1
      %s382 = scalar_select %p381, %s20, 1
      %s383 = smul.addr %s382, 4
      %s384 = scalar_lea.vmem %s9, %s383
      %p385 = scmp.lt.s32.totalorder %s20, 1
      %s386 = scalar_select %p385, %s20, 1
      %s387 = smul.addr %s386, 4
      %s388 = scalar_lea.vmem %s0, %s387
      %p389 = scmp.lt.s32.totalorder %s20, 1
      %s390 = scalar_select %p389, %s20, 1
      %s391 = smul.addr %s390, 4
      %s392 = scalar_lea.vmem %s1, %s391
      %p393 = scmp.lt.s32.totalorder %s20, 1
      %s394 = scalar_select %p393, %s20, 1
      %s395 = smul.addr %s394, 4
      %s396 = scalar_lea.vmem %s2, %s395
      %p397 = scmp.lt.s32.totalorder %s20, 1
      %s398 = scalar_select %p397, %s20, 1
      %s399 = smul.addr %s398, 4
      %s400 = scalar_lea.vmem %s3, %s399
      %p401 = scmp.lt.s32.totalorder %s20, 1
      %s402 = scalar_select %p401, %s20, 1
      %s403 = smul.addr %s402, 4
      %s404 = scalar_lea.vmem %s4, %s403
      %p405 = scmp.lt.s32.totalorder %s20, 1
      %s406 = scalar_select %p405, %s20, 1
      %s407 = smul.addr %s406, 4
      %s408 = scalar_lea.vmem %s5, %s407
      %p409 = scmp.lt.s32.totalorder %s20, 1
      %s410 = scalar_select %p409, %s20, 1
      %s411 = smul.addr %s410, 4
      %s412 = scalar_lea.vmem %s9, %s411
      %v414 = vld [vmem:[%s388] sm:$0xf]
      %v415 = vunpack.c.l.bf16 %v414
      %v416 = vld [vmem:[%s392] sm:$0xf]
      %v417 = vunpack.c.l.bf16 %v416
      %v418 = vld [vmem:[%s396] sm:$0xf]
      %v419 = vunpack.c.l.bf16 %v418
      %421 = vrot.lane.b32.xlu0 %v417, 16
      %v422 = vpop.permute.xlu0 %421
      %425 = vrot.lane.b32.xlu0 %v419, 24
      %v426 = vpop.permute.xlu0 %425
      %vm428 = vcmask 130048
      %v429 = vsel %vm428, %v415, %v422
      %vm430 = vcmask 195584
      %v431 = vsel %vm430, %v429, %v426
      %v432 = vld [vmem:[%s400] sm:$0xf]
      %v433 = vunpack.c.l.bf16 %v432
      %v434 = vld [vmem:[%s404] sm:$0xf]
      %v435 = vunpack.c.l.bf16 %v434
      %v436 = vld [vmem:[%s408] sm:$0xf]
      %v437 = vunpack.c.l.bf16 %v436
      %439 = vrot.lane.b32.xlu0 %v435, 16
      %v440 = vpop.permute.xlu0 %439
      %443 = vrot.lane.b32.xlu0 %v437, 24
      %v444 = vpop.permute.xlu0 %443
      %v446 = vsel %vm428, %v433, %v440
      %v447 = vsel %vm430, %v446, %v444
      %v448 = vld [vmem:[%s6] sm:$0x1]
      %v449 = vld [vmem:[%s7] sm:$0x1]
      %v451 = vlaneseq
      %v452 = vshrl.u32 %v451, 7
      %v453 = vsub.s32 0, %v452
      %v454 = vrot.slane %v448, %v453
      %v456 = vmul.f32 %v431, %v454
      %v458 = vlaneseq
      %v459 = vshrl.u32 %v458, 7
      %v460 = vsub.s32 0, %v459
      %v461 = vrot.slane %v449, %v460
      %v463 = vadd.f32 %v456, %v461
      %v464 = vmax.f32 %v463, 0.0
      %v465 = vmul.f32 %v447, %v454
      %v466 = vadd.f32 %v465, %v461
      %v467 = vmax.f32 %v466, 0.0
      %v468 = vadd.f32 %v464, %v467
      %v469 = vmul.f32 %v468, 0.5
      %v470 = vpack.c.bf16 %v469, %v469
      %v471 = vld [vmem:[%s8] sm:$0xf]
      %v472 = vld [vmem:[%s8 + $0x4] sm:$0xf]
      %v473 = vld [vmem:[%s8 + $0x8] sm:$0xf]
      %v474 = vld [vmem:[%s8 + $0xc] sm:$0xf]
      %v479 = vunpack.c.l.b16 %v471
      %v480 = vunpack.c.l.b16 %v472
      %v481 = vunpack.c.l.b16 %v473
      %v482 = vunpack.c.l.b16 %v474
      %v483 = vpack.c.b16 %v480, %v479
      %v484 = vpack.c.b16 %v482, %v481
      %vm487 = vcmask 261120
      %v489 = vsel %vm487, %v470, 0
      %491 = vmatprep.subr.bf16.mxu0 0
      %492 = vmatpush1.bf16.msra.mxu0 %v483
      %493 = vmatprep.subr.bf16.mxu0 0
      %494 = vmatpush1.bf16.msra.mxu0 %v484
      %495 = vmatprep.subr.bf16.mxu0 0
      %496 = vmatpush1.bf16.msra.mxu0 0
      %497 = vmatprep.subr.bf16.mxu0 0
      %498 = vmatpush1.bf16.msra.mxu0 0
      %499 = vmatprep.subr.bf16.mxu0 0
      %500 = vmatpush1.bf16.msra.mxu0 0
      %501 = vmatprep.subr.bf16.mxu0 0
      %502 = vmatpush1.bf16.msra.mxu0 0
      %503 = vmatprep.subr.bf16.mxu0 0
      %504 = vmatpush1.bf16.msra.mxu0 0
      %505 = vmatprep.subr.bf16.mxu0 0
      %506 = vmatpush1.bf16.msra.mxu0 0
      %507 = vmatprep.subr.bf16.mxu0 0
      %508 = vmatpush1.bf16.msra.mxu0 0
      %509 = vmatprep.subr.bf16.mxu0 0
      %510 = vmatpush1.bf16.msra.mxu0 0
      %511 = vmatprep.subr.bf16.mxu0 0
      %512 = vmatpush1.bf16.msra.mxu0 0
      %513 = vmatprep.subr.bf16.mxu0 0
      %514 = vmatpush1.bf16.msra.mxu0 0
      %515 = vmatprep.subr.bf16.mxu0 0
      %516 = vmatpush1.bf16.msra.mxu0 0
      %517 = vmatprep.subr.bf16.mxu0 0
      %518 = vmatpush1.bf16.msra.mxu0 0
      %519 = vmatprep.subr.bf16.mxu0 0
      %520 = vmatpush1.bf16.msra.mxu0 0
      %521 = vmatprep.subr.bf16.mxu0 0
      %522 = vmatpush1.bf16.msra.mxu0 0
      %523 = vmatprep.mubr.bf16.mxu0 0
      %524 = vmatmul.mubr.bf16.gmra.mrb[0].mxu0 %v489
      %v525 = vpop.f32.mrb[0].mxu0
      %v526 = vadd.f32 0.0, %v525
      %v527 = vpop.f32.mrb[0].mxu0
      %v528 = vpop.f32.mrb[0].mxu0
      %v529 = vpop.f32.mrb[0].mxu0
      %530 = vdwg.mxu0
      %v531 = vpack.c.bf16 %v526, %v526
      %vm532 = vcmask 125952
      %533 = vst.msk [vmem:[%s412] sm:$0xf] %vm532, %v531
      %p534 = scmp.lt.s32.totalorder %s20, 1
      %s535 = scalar_select %p534, %s20, 1
      %s536 = smul.addr %s535, 4
      %s537 = scalar_lea.vmem %s9, %s536
      // Predicated region
      $region57: #{densenet_forward.10} parent=55 // pred_check
        %p538 = pneg %p257
      $region58: #{densenet_forward.10} parent=55 // pred_check_branch
        %540 = sbr.rel (%p538) target = $region60
      $region59: #{densenet_forward.10} parent=55 // pred_region
        _
      $region60: #{densenet_forward.10} parent=55 // pred_fallthru
        _
    $region56: #{densenet_forward.10} parent=5 // pred_fallthru
      _
    %p541 = scmp.le.s32.totalorder 2, %s15
    // Predicated region
    $region61: #{densenet_forward.10} parent=5 // pred_check
      %p542 = pneg %p541
    $region62: #{densenet_forward.10} parent=5 // pred_check_branch
      %544 = sbr.rel (%p542) target = $region64
    $region63: #{densenet_forward.10} parent=5 // pred_region
      %s545 = ssub.s32 %s15, 2
      // Predicated region
      $region65: #{densenet_forward.10} parent=63 // pred_check
        %p546 = pneg %p263
      $region66: #{densenet_forward.10} parent=63 // pred_check_branch
        %548 = sbr.rel (%p546) target = $region68
      $region67: #{densenet_forward.10} parent=63 // pred_region
        %p549 = scmp.lt.s32.totalorder %s21, 1
        %s550 = scalar_select %p549, %s21, 1
        %s551 = smul.addr %s550, 4
        %s552 = scalar_lea.vmem %s9, %s551
      $region68: #{densenet_forward.10} parent=63 // pred_fallthru
        _
    $region64: #{densenet_forward.10} parent=5 // pred_fallthru
      _
  $region6: #{densenet_forward.10} parent=0 // loop_footer
    %s19 = sadd.s32 1, %s15
  $region7: #{densenet_forward.10} parent=0 // loop_footer_branch
    %14 = sbr.rel target = $region3
  $region8: #{densenet_forward.10} parent=0 // loop_exit
    _

// kernel: densenet_forward.13
$region0: #{densenet_forward.13}
  #allocation0 [shape = 'u32[]', space=smem, size = 0x4, offset = 0x4, fixed_abs, tag = 'smem constant byte address 0x4 - core index']
  #allocation1 [shape = 'u32[144,128]{1,0:T(1,128)}', space=vmem, size = 0x12000, scoped, tag = 'internal scratch']
  %s0 = inlined_call_operand.vmem [shape: bf16[2,8,16], index: 0, kind: input, shape index: {}]
  %s1 = inlined_call_operand.vmem [shape: bf16[2,8,8], index: 1, kind: input, shape index: {}]
  %s2 = inlined_call_operand.vmem [shape: bf16[2,8,8], index: 2, kind: input, shape index: {}]
  %s3 = inlined_call_operand.vmem [shape: f32[32,32], index: 3, kind: input, shape index: {}]
  %s4 = inlined_call_operand.vmem [shape: f32[1,32], index: 4, kind: input, shape index: {}]
  %s5 = inlined_call_operand.hbm [shape: f32[2,32], index: 5, kind: output, shape index: {}]
  %s6 = sld [smem:[#allocation0]]
  $region30: #{densenet_forward.13} parent=0
    _
  %s8 = ssub.s32 1, %s6
  %s9 = scalar_select 0, %s8, %s6
  $region1: #{densenet_forward.13} parent=0
    #allocation2 [shape = 'u8[1024]{0}', space=vmem, size = 0x400, scoped, tag = 'output window, operand 0, single buffered']
    #allocation3 [shape = 's32[1]{0}', space=sflag, size = 0x4, scoped, tag = 'scoped memory for densenet_forward.13']
    %10 = vsyncpa [#allocation3], 0
    // Predicated region
    $region2: #{densenet_forward.13} parent=1 // pred_check
      _
    $region3: #{densenet_forward.13} parent=1 // pred_check_branch
      %12 = sbr.rel (0) target = $region5
    $region4: #{densenet_forward.13} parent=1 // pred_region
      _
    $region5: #{densenet_forward.13} parent=1 // pred_fallthru
      _
    // Predicated region
    $region6: #{densenet_forward.13} parent=1 // pred_check
      _
    $region7: #{densenet_forward.13} parent=1 // pred_check_branch
      %14 = sbr.rel (0) target = $region9
    $region8: #{densenet_forward.13} parent=1 // pred_region
      _
    $region9: #{densenet_forward.13} parent=1 // pred_fallthru
      _
    // Predicated region
    $region10: #{densenet_forward.13} parent=1 // pred_check
      _
    $region11: #{densenet_forward.13} parent=1 // pred_check_branch
      %16 = sbr.rel (0) target = $region13
    $region12: #{densenet_forward.13} parent=1 // pred_region
      _
    $region13: #{densenet_forward.13} parent=1 // pred_fallthru
      _
    // Predicated region
    $region14: #{densenet_forward.13} parent=1 // pred_check
      _
    $region15: #{densenet_forward.13} parent=1 // pred_check_branch
      %18 = sbr.rel (0) target = $region17
    $region16: #{densenet_forward.13} parent=1 // pred_region
      _
    $region17: #{densenet_forward.13} parent=1 // pred_fallthru
      _
    // Predicated region
    $region18: #{densenet_forward.13} parent=1 // pred_check
      _
    $region19: #{densenet_forward.13} parent=1 // pred_check_branch
      %20 = sbr.rel (0) target = $region21
    $region20: #{densenet_forward.13} parent=1 // pred_region
      _
    $region21: #{densenet_forward.13} parent=1 // pred_fallthru
      _
    %v21 = vld [vmem:[%s0] sm:$0xf]
    %v22 = vld [vmem:[%s0 + $0x4] sm:$0xf]
    %v23 = vunpack.c.l.bf16 %v21
    %v24 = vunpack.c.l.bf16 %v22
    %v25 = vmax.f32 %v23, 0.0
    %v26 = vmax.f32 %v24, 0.0
    %vm27 = vcmask 130048
    %v28 = vsel %vm27, %v25, 0.0
    %v29 = vrot.slane %v28, 4
    %v30 = vadd.f32 %v28, %v29
    %v31 = vrot.slane %v30, 2
    %v32 = vadd.f32 %v30, %v31
    %v33 = vrot.slane %v32, 1
    %v34 = vadd.f32 %v32, %v33
    %v35 = vsel %vm27, %v26, 0.0
    %v36 = vrot.slane %v35, 4
    %v37 = vadd.f32 %v35, %v36
    %v38 = vrot.slane %v37, 2
    %v39 = vadd.f32 %v37, %v38
    %v40 = vrot.slane %v39, 1
    %v41 = vadd.f32 %v39, %v40
    %v42 = vrcp.pop 8.0
    %v43 = vmul.f32 %v34, %v42
    %v44 = vmul.f32 %v41, %v42
    %v45 = vld [vmem:[%s1] sm:$0xf]
    %v46 = vld [vmem:[%s1 + $0x4] sm:$0xf]
    %v47 = vunpack.c.l.bf16 %v45
    %v48 = vunpack.c.l.bf16 %v46
    %v49 = vmax.f32 %v47, 0.0
    %v50 = vmax.f32 %v48, 0.0
    %vm51 = vcmask 64512
    %v52 = vsel %vm51, %v49, 0.0
    %v53 = vrot.slane %v52, 4
    %v54 = vadd.f32 %v52, %v53
    %v55 = vrot.slane %v54, 2
    %v56 = vadd.f32 %v54, %v55
    %v57 = vrot.slane %v56, 1
    %v58 = vadd.f32 %v56, %v57
    %v59 = vsel %vm51, %v50, 0.0
    %v60 = vrot.slane %v59, 4
    %v61 = vadd.f32 %v59, %v60
    %v62 = vrot.slane %v61, 2
    %v63 = vadd.f32 %v61, %v62
    %v64 = vrot.slane %v63, 1
    %v65 = vadd.f32 %v63, %v64
    %v66 = vmul.f32 %v58, %v42
    %v67 = vmul.f32 %v65, %v42
    %v68 = vld [vmem:[%s2] sm:$0xf]
    %v69 = vld [vmem:[%s2 + $0x4] sm:$0xf]
    %v70 = vunpack.c.l.bf16 %v68
    %v71 = vunpack.c.l.bf16 %v69
    %v72 = vmax.f32 %v70, 0.0
    %v73 = vmax.f32 %v71, 0.0
    %v74 = vsel %vm51, %v72, 0.0
    %v75 = vrot.slane %v74, 4
    %v76 = vadd.f32 %v74, %v75
    %v77 = vrot.slane %v76, 2
    %v78 = vadd.f32 %v76, %v77
    %v79 = vrot.slane %v78, 1
    %v80 = vadd.f32 %v78, %v79
    %v81 = vsel %vm51, %v73, 0.0
    %v82 = vrot.slane %v81, 4
    %v83 = vadd.f32 %v81, %v82
    %v84 = vrot.slane %v83, 2
    %v85 = vadd.f32 %v83, %v84
    %v86 = vrot.slane %v85, 1
    %v87 = vadd.f32 %v85, %v86
    %v88 = vmul.f32 %v80, %v42
    %v89 = vmul.f32 %v87, %v42
    %vm92 = vcmask 1041409
    %v93 = vsel %vm92, %v44, %v43
    %v97 = vsel %vm92, %v67, %v66
    %98 = vrot.lane.b32.xlu0 %v97, 16
    %v99 = vpop.permute.xlu0 %98
    %v103 = vsel %vm92, %v89, %v88
    %104 = vrot.lane.b32.xlu0 %v103, 24
    %v105 = vpop.permute.xlu0 %104
    %v107 = vsel %vm27, %v93, %v99
    %vm108 = vcmask 195584
    %v109 = vsel %vm108, %v107, %v105
    %v110 = vld [vmem:[%s3] sm:$0xff]
    %v111 = vld [vmem:[%s3 + $0x8] sm:$0xff]
    %v112 = vld [vmem:[%s3 + $0x10] sm:$0xff]
    %v113 = vld [vmem:[%s3 + $0x18] sm:$0xff]
    %v114 = vld [vmem:[%s4] sm:$0x1]
    %v116 = vlaneseq
    %v117 = vshrl.u32 %v116, 7
    %v118 = vsub.s32 0, %v117
    %v119 = vrot.slane %v114, %v118
    %vm121 = vcmask 261120
    %v123 = vsel %vm121, %v109, 0
    %125 = vmatprep.subr.mxu0 0.0
    %126 = vmatpush1.msra.mxu0 %v110
    %127 = vmatprep.subr.mxu0 0.0
    %128 = vmatpush1.msra.mxu0 %v111
    %129 = vmatprep.subr.mxu0 0.0
    %130 = vmatpush1.msra.mxu0 %v112
    %131 = vmatprep.subr.mxu0 0.0
    %132 = vmatpush1.msra.mxu0 %v113
    %133 = vmatprep.subr.mxu0 0.0
    %134 = vmatpush1.msra.mxu0 0.0
    %135 = vmatprep.subr.mxu0 0.0
    %136 = vmatpush1.msra.mxu0 0.0
    %137 = vmatprep.subr.mxu0 0.0
    %138 = vmatpush1.msra.mxu0 0.0
    %139 = vmatprep.subr.mxu0 0.0
    %140 = vmatpush1.msra.mxu0 0.0
    %141 = vmatprep.subr.mxu0 0.0
    %142 = vmatpush1.msra.mxu0 0.0
    %143 = vmatprep.subr.mxu0 0.0
    %144 = vmatpush1.msra.mxu0 0.0
    %145 = vmatprep.subr.mxu0 0.0
    %146 = vmatpush1.msra.mxu0 0.0
    %147 = vmatprep.subr.mxu0 0.0
    %148 = vmatpush1.msra.mxu0 0.0
    %149 = vmatprep.subr.mxu0 0.0
    %150 = vmatpush1.msra.mxu0 0.0
    %151 = vmatprep.subr.mxu0 0.0
    %152 = vmatpush1.msra.mxu0 0.0
    %153 = vmatprep.subr.mxu0 0.0
    %154 = vmatpush1.msra.mxu0 0.0
    %155 = vmatprep.subr.mxu0 0.0
    %156 = vmatpush1.msra.mxu0 0.0
    %157 = vmatprep.subr.mxu0 0.0
    %158 = vmatpush1.msra.mxu0 0.0
    %159 = vmatprep.subr.mxu0 0.0
    %160 = vmatpush1.msra.mxu0 0.0
    %161 = vmatprep.subr.mxu0 0.0
    %162 = vmatpush1.msra.mxu0 0.0
    %163 = vmatprep.subr.mxu0 0.0
    %164 = vmatpush1.msra.mxu0 0.0
    %165 = vmatprep.subr.mxu0 0.0
    %166 = vmatpush1.msra.mxu0 0.0
    %167 = vmatprep.subr.mxu0 0.0
    %168 = vmatpush1.msra.mxu0 0.0
    %169 = vmatprep.subr.mxu0 0.0
    %170 = vmatpush1.msra.mxu0 0.0
    %171 = vmatprep.subr.mxu0 0.0
    %172 = vmatpush1.msra.mxu0 0.0
    %173 = vmatprep.subr.mxu0 0.0
    %174 = vmatpush1.msra.mxu0 0.0
    %175 = vmatprep.subr.mxu0 0.0
    %176 = vmatpush1.msra.mxu0 0.0
    %177 = vmatprep.subr.mxu0 0.0
    %178 = vmatpush1.msra.mxu0 0.0
    %179 = vmatprep.subr.mxu0 0.0
    %180 = vmatpush1.msra.mxu0 0.0
    %181 = vmatprep.subr.mxu0 0.0
    %182 = vmatpush1.msra.mxu0 0.0
    %183 = vmatprep.subr.mxu0 0.0
    %184 = vmatpush1.msra.mxu0 0.0
    %185 = vmatprep.subr.mxu0 0.0
    %186 = vmatpush1.msra.mxu0 0.0
    %187 = vmatprep.subr.mxu0 0.0
    %188 = vmatpush1.msra.mxu0 0.0
    %189 = vmatprep.mubr.f32.mxu0 0.0
    %190 = vmatmul.mubr.f32.gmra.mrb[0].mxu0 %v123
    %v191 = vpop.f32.mrb[0].mxu0
    %v192 = vadd.f32 %v119, %v191
    %v193 = vpop.f32.mrb[0].mxu0
    %194 = vdwg.mxu0
    %vm195 = vcmask 254976
    %196 = vst.msk [vmem:[#allocation2] sm:$0x3] %vm195, %v192
    // Predicated region
    $region22: #{densenet_forward.13} parent=1 // pred_check
      _
    $region23: #{densenet_forward.13} parent=1 // pred_check_branch
      %198 = sbr.rel (0) target = $region25
    $region24: #{densenet_forward.13} parent=1 // pred_region
      %s200 = ssub.s32 32, 32
      %201 = vsyncadd [#allocation3], %s200
      %s203 = sshll.u32 [#allocation2], 4
      %s204 = int_to_ptr.vmem [resolvable:$true] %s203
      %206 = dma.vmem_to_hbm [thread:$0]  %s204, 32, %s5, [#allocation3]
    $region25: #{densenet_forward.13} parent=1 // pred_fallthru
      _
    // Predicated region
    $region26: #{densenet_forward.13} parent=1 // pred_check
      _
    $region27: #{densenet_forward.13} parent=1 // pred_check_branch
      %208 = sbr.rel (0) target = $region29
    $region28: #{densenet_forward.13} parent=1 // pred_region
      %209 = dma.done [#allocation3], 32
    $region29: #{densenet_forward.13} parent=1 // pred_fallthru
      _
    %210 = vsyncpa [#allocation3], 1

// kernel: densenet_forward.11
$region0: #{densenet_forward.11}
  #allocation0 [shape = 'u32[]', space=smem, size = 0x4, offset = 0x4, fixed_abs, tag = 'smem constant byte address 0x4 - core index']
  #allocation1 [shape = 'u32[144,128]{1,0:T(1,128)}', space=vmem, size = 0x12000, scoped, tag = 'internal scratch']
  %s0 = inlined_call_operand.vmem [shape: bf16[2,8,16], index: 0, kind: input, shape index: {}]
  %s1 = inlined_call_operand.vmem [shape: f32[1,16], index: 1, kind: input, shape index: {}]
  %s2 = inlined_call_operand.vmem [shape: f32[1,16], index: 2, kind: input, shape index: {}]
  %s3 = inlined_call_operand.vmem [shape: bf16[16,16], index: 3, kind: input, shape index: {}]
  %s4 = inlined_call_operand.vmem [shape: f32[1,16], index: 4, kind: input, shape index: {}]
  %s5 = inlined_call_operand.vmem [shape: f32[1,16], index: 5, kind: input, shape index: {}]
  %s6 = inlined_call_operand.vmem [shape: bf16[48,8], index: 6, kind: input, shape index: {}]
  %s7 = inlined_call_operand.vmem [shape: bf16[2,8,8], index: 7, kind: output, shape index: {}]
  %s8 = sld [smem:[#allocation0]]
  $region61: #{densenet_forward.11} parent=0
    _
  %s10 = ssub.s32 1, %s8
  %s11 = scalar_select 0, %s10, %s8
  loop: start=0, step=1, limit=4
  $region2: #{densenet_forward.11} parent=0 // loop_pre_header
    _
  $region3: #{densenet_forward.11} parent=0 // loop_header
    %s13 = sphi 0, %s17
    %p14 = scmp.ge.s32.totalorder %s13, 4
    %s23 = sphi 0, %s25
    %s26 = sphi 0, %s23
    %s27 = sphi 0, %s26
    %s43 = sphi 0, %s27
    %s47 = sphi 0, %s47
    %s49 = sphi 0, %s47
    %s50 = sphi 0, %s49
    %s64 = sphi 0, %s50
    %s68 = sphi 0, %s68
    %s70 = sphi 0, %s68
    %s71 = sphi 0, %s70
    %s85 = sphi 0, %s71
    %s89 = sphi 0, %s89
    %s91 = sphi 0, %s89
    %s92 = sphi 0, %s91
    %s106 = sphi 0, %s92
    %s110 = sphi 0, %s110
    %s112 = sphi 0, %s110
    %s113 = sphi 0, %s112
    %s127 = sphi 0, %s113
    %s131 = sphi 0, %s131
    %s133 = sphi 0, %s131
    %s134 = sphi 0, %s133
    %s148 = sphi 0, %s134
    %s152 = sphi 0, %s152
    %s154 = sphi 0, %s152
    %s155 = sphi 0, %s154
    %s169 = sphi 0, %s155
    %s175 = sphi 0, %s177
    %s178 = sphi 0, %s175
    %s179 = sphi 0, %s178
    %s195 = sphi 0, %s179
  $region4: #{densenet_forward.11} parent=0 // loop_header_branch
    %16 = sbr.rel (%p14) target = $region8
  $region5: #{densenet_forward.11} parent=0 // loop_body
    %s18 = ssub.s32 %s13, 1
    %s19 = ssub.s32 %s13, 2
    %s20 = sadd.s32 %s13, 1
    %s21 = ssub.s32 %s13, %s20
    %p22 = scmp.eq.s32.totalorder %s21, 0
    %s24 = sadd.s32 %s23, 1
    %s25 = scalar_select %p22, %s23, %s24
    %p28 = pneg %p22
    %p29 = scmp.eq.s32.totalorder %s13, 1
    %p30 = por %p28, %p29
    %p31 = scmp.ne.s32.totalorder %s23, %s26
    %p32 = scmp.eq.s32.totalorder %s13, 0
    %p33 = por %p31, %p32
    %p34 = scmp.ne.s32.totalorder %s23, %s26
    %p35 = scmp.eq.s32.totalorder %s18, 1
    %p36 = por %p34, %p35
    %p37 = scmp.ne.s32.totalorder %s26, %s27
    %p38 = scmp.eq.s32.totalorder %s18, 0
    %p39 = por %p37, %p38
    %p40 = scmp.ne.s32.totalorder %s26, %s27
    %p41 = scmp.eq.s32.totalorder %s19, 1
    %p42 = por %p40, %p41
    %p44 = scmp.ne.s32.totalorder %s27, %s43
    %p45 = scmp.eq.s32.totalorder %s19, 0
    %p46 = por %p44, %p45
    %s48 = sadd.s32 %s47, 1
    %p51 = scmp.eq.s32.totalorder %s13, 1
    %p52 = scmp.ne.s32.totalorder %s47, %s49
    %p53 = scmp.eq.s32.totalorder %s13, 0
    %p54 = por %p52, %p53
    %p55 = scmp.ne.s32.totalorder %s47, %s49
    %p56 = scmp.eq.s32.totalorder %s18, 1
    %p57 = por %p55, %p56
    %p58 = scmp.ne.s32.totalorder %s49, %s50
    %p59 = scmp.eq.s32.totalorder %s18, 0
    %p60 = por %p58, %p59
    %p61 = scmp.ne.s32.totalorder %s49, %s50
    %p62 = scmp.eq.s32.totalorder %s19, 1
    %p63 = por %p61, %p62
    %p65 = scmp.ne.s32.totalorder %s50, %s64
    %p66 = scmp.eq.s32.totalorder %s19, 0
    %p67 = por %p65, %p66
    %s69 = sadd.s32 %s68, 1
    %p72 = scmp.eq.s32.totalorder %s13, 1
    %p73 = scmp.ne.s32.totalorder %s68, %s70
    %p74 = scmp.eq.s32.totalorder %s13, 0
    %p75 = por %p73, %p74
    %p76 = scmp.ne.s32.totalorder %s68, %s70
    %p77 = scmp.eq.s32.totalorder %s18, 1
    %p78 = por %p76, %p77
    %p79 = scmp.ne.s32.totalorder %s70, %s71
    %p80 = scmp.eq.s32.totalorder %s18, 0
    %p81 = por %p79, %p80
    %p82 = scmp.ne.s32.totalorder %s70, %s71
    %p83 = scmp.eq.s32.totalorder %s19, 1
    %p84 = por %p82, %p83
    %p86 = scmp.ne.s32.totalorder %s71, %s85
    %p87 = scmp.eq.s32.totalorder %s19, 0
    %p88 = por %p86, %p87
    %s90 = sadd.s32 %s89, 1
    %p93 = scmp.eq.s32.totalorder %s13, 1
    %p94 = scmp.ne.s32.totalorder %s89, %s91
    %p95 = scmp.eq.s32.totalorder %s13, 0
    %p96 = por %p94, %p95
    %p97 = scmp.ne.s32.totalorder %s89, %s91
    %p98 = scmp.eq.s32.totalorder %s18, 1
    %p99 = por %p97, %p98
    %p100 = scmp.ne.s32.totalorder %s91, %s92
    %p101 = scmp.eq.s32.totalorder %s18, 0
    %p102 = por %p100, %p101
    %p103 = scmp.ne.s32.totalorder %s91, %s92
    %p104 = scmp.eq.s32.totalorder %s19, 1
    %p105 = por %p103, %p104
    %p107 = scmp.ne.s32.totalorder %s92, %s106
    %p108 = scmp.eq.s32.totalorder %s19, 0
    %p109 = por %p107, %p108
    %s111 = sadd.s32 %s110, 1
    %p114 = scmp.eq.s32.totalorder %s13, 1
    %p115 = scmp.ne.s32.totalorder %s110, %s112
    %p116 = scmp.eq.s32.totalorder %s13, 0
    %p117 = por %p115, %p116
    %p118 = scmp.ne.s32.totalorder %s110, %s112
    %p119 = scmp.eq.s32.totalorder %s18, 1
    %p120 = por %p118, %p119
    %p121 = scmp.ne.s32.totalorder %s112, %s113
    %p122 = scmp.eq.s32.totalorder %s18, 0
    %p123 = por %p121, %p122
    %p124 = scmp.ne.s32.totalorder %s112, %s113
    %p125 = scmp.eq.s32.totalorder %s19, 1
    %p126 = por %p124, %p125
    %p128 = scmp.ne.s32.totalorder %s113, %s127
    %p129 = scmp.eq.s32.totalorder %s19, 0
    %p130 = por %p128, %p129
    %s132 = sadd.s32 %s131, 1
    %p135 = scmp.eq.s32.totalorder %s13, 1
    %p136 = scmp.ne.s32.totalorder %s131, %s133
    %p137 = scmp.eq.s32.totalorder %s13, 0
    %p138 = por %p136, %p137
    %p139 = scmp.ne.s32.totalorder %s131, %s133
    %p140 = scmp.eq.s32.totalorder %s18, 1
    %p141 = por %p139, %p140
    %p142 = scmp.ne.s32.totalorder %s133, %s134
    %p143 = scmp.eq.s32.totalorder %s18, 0
    %p144 = por %p142, %p143
    %p145 = scmp.ne.s32.totalorder %s133, %s134
    %p146 = scmp.eq.s32.totalorder %s19, 1
    %p147 = por %p145, %p146
    %p149 = scmp.ne.s32.totalorder %s134, %s148
    %p150 = scmp.eq.s32.totalorder %s19, 0
    %p151 = por %p149, %p150
    %s153 = sadd.s32 %s152, 1
    %p156 = scmp.eq.s32.totalorder %s13, 1
    %p157 = scmp.ne.s32.totalorder %s152, %s154
    %p158 = scmp.eq.s32.totalorder %s13, 0
    %p159 = por %p157, %p158
    %p160 = scmp.ne.s32.totalorder %s152, %s154
    %p161 = scmp.eq.s32.totalorder %s18, 1
    %p162 = por %p160, %p161
    %p163 = scmp.ne.s32.totalorder %s154, %s155
    %p164 = scmp.eq.s32.totalorder %s18, 0
    %p165 = por %p163, %p164
    %p166 = scmp.ne.s32.totalorder %s154, %s155
    %p167 = scmp.eq.s32.totalorder %s19, 1
    %p168 = por %p166, %p167
    %p170 = scmp.ne.s32.totalorder %s155, %s169
    %p171 = scmp.eq.s32.totalorder %s19, 0
    %p172 = por %p170, %p171
    %s173 = ssub.s32 %s13, %s20
    %p174 = scmp.eq.s32.totalorder %s173, 0
    %s176 = sadd.s32 %s175, 1
    %s177 = scalar_select %p174, %s175, %s176
    %p180 = pneg %p174
    %p181 = scmp.eq.s32.totalorder %s13, 1
    %p182 = por %p180, %p181
    %p183 = scmp.ne.s32.totalorder %s175, %s178
    %p184 = scmp.eq.s32.totalorder %s13, 0
    %p185 = por %p183, %p184
    %p186 = scmp.ne.s32.totalorder %s175, %s178
    %p187 = scmp.eq.s32.totalorder %s18, 1
    %p188 = por %p186, %p187
    %p189 = scmp.ne.s32.totalorder %s178, %s179
    %p190 = scmp.eq.s32.totalorder %s18, 0
    %p191 = por %p189, %p190
    %p192 = scmp.ne.s32.totalorder %s178, %s179
    %p193 = scmp.eq.s32.totalorder %s19, 1
    %p194 = por %p192, %p193
    %p196 = scmp.ne.s32.totalorder %s179, %s195
    %p197 = scmp.eq.s32.totalorder %s19, 0
    %p198 = por %p196, %p197
    %p199 = scmp.le.s32.totalorder 1, %s13
    %p200 = scmp.lt.s32.totalorder %s13, 3
    %p201 = pnand %p199, %p200
    %p202 = pneg %p201
    // Predicated region
    $region9: #{densenet_forward.11} parent=5 // pred_check
      _
    $region10: #{densenet_forward.11} parent=5 // pred_check_branch
      %204 = sbr.rel (%p201) target = $region12
    $region11: #{densenet_forward.11} parent=5 // pred_region
      %s205 = ssub.s32 %s13, 1
      // Predicated region
      $region13: #{densenet_forward.11} parent=11 // pred_check
        %p206 = pneg %p60
      $region14: #{densenet_forward.11} parent=11 // pred_check_branch
        %208 = sbr.rel (%p206) target = $region16
      $region15: #{densenet_forward.11} parent=11 // pred_region
        _
      $region16: #{densenet_forward.11} parent=11 // pred_fallthru
        _
      // Predicated region
      $region17: #{densenet_forward.11} parent=11 // pred_check
        %p209 = pneg %p81
      $region18: #{densenet_forward.11} parent=11 // pred_check_branch
        %211 = sbr.rel (%p209) target = $region20
      $region19: #{densenet_forward.11} parent=11 // pred_region
        _
      $region20: #{densenet_forward.11} parent=11 // pred_fallthru
        _
      // Predicated region
      $region21: #{densenet_forward.11} parent=11 // pred_check
        %p212 = pneg %p102
      $region22: #{densenet_forward.11} parent=11 // pred_check_branch
        %214 = sbr.rel (%p212) target = $region24
      $region23: #{densenet_forward.11} parent=11 // pred_region
        _
      $region24: #{densenet_forward.11} parent=11 // pred_fallthru
        _
      // Predicated region
      $region25: #{densenet_forward.11} parent=11 // pred_check
        %p215 = pneg %p123
      $region26: #{densenet_forward.11} parent=11 // pred_check_branch
        %217 = sbr.rel (%p215) target = $region28
      $region27: #{densenet_forward.11} parent=11 // pred_region
        _
      $region28: #{densenet_forward.11} parent=11 // pred_fallthru
        _
      // Predicated region
      $region29: #{densenet_forward.11} parent=11 // pred_check
        %p218 = pneg %p144
      $region30: #{densenet_forward.11} parent=11 // pred_check_branch
        %220 = sbr.rel (%p218) target = $region32
      $region31: #{densenet_forward.11} parent=11 // pred_region
        _
      $region32: #{densenet_forward.11} parent=11 // pred_fallthru
        _
      // Predicated region
      $region33: #{densenet_forward.11} parent=11 // pred_check
        %p221 = pneg %p165
      $region34: #{densenet_forward.11} parent=11 // pred_check_branch
        %223 = sbr.rel (%p221) target = $region36
      $region35: #{densenet_forward.11} parent=11 // pred_region
        _
      $region36: #{densenet_forward.11} parent=11 // pred_fallthru
        _
    $region12: #{densenet_forward.11} parent=5 // pred_fallthru
      _
    %p224 = scmp.lt.s32.totalorder %s13, 2
    // Predicated region
    $region37: #{densenet_forward.11} parent=5 // pred_check
      %p225 = pneg %p224
    $region38: #{densenet_forward.11} parent=5 // pred_check_branch
      %227 = sbr.rel (%p225) target = $region40
    $region39: #{densenet_forward.11} parent=5 // pred_region
      // Predicated region
      $region41: #{densenet_forward.11} parent=39 // pred_check
        %p228 = pneg %p33
      $region42: #{densenet_forward.11} parent=39 // pred_check_branch
        %230 = sbr.rel (%p228) target = $region44
      $region43: #{densenet_forward.11} parent=39 // pred_region
        %p231 = scmp.lt.s32.totalorder %s13, 1
        %s232 = scalar_select %p231, %s13, 1
        %s233 = smul.addr %s232, 4
        %s234 = scalar_lea.vmem %s0, %s233
      $region44: #{densenet_forward.11} parent=39 // pred_fallthru
        _
    $region40: #{densenet_forward.11} parent=5 // pred_fallthru
      _
    %p235 = scmp.le.s32.totalorder 1, %s13
    %p236 = scmp.lt.s32.totalorder %s13, 3
    %p237 = pnand %p235, %p236
    %p238 = pneg %p237
    // Predicated region
    $region45: #{densenet_forward.11} parent=5 // pred_check
      _
    $region46: #{densenet_forward.11} parent=5 // pred_check_branch
      %240 = sbr.rel (%p237) target = $region48
    $region47: #{densenet_forward.11} parent=5 // pred_region
      %s241 = ssub.s32 %s13, 1
      %p242 = scmp.lt.s32.totalorder %s18, 1
      %s243 = scalar_select %p242, %s18, 1
      %s244 = smul.addr %s243, 4
      %s245 = scalar_lea.vmem %s0, %s244
      %p246 = pneg %p39
      %p247 = pneg %p36
      %p248 = pneg %p60
      %p249 = pneg %p57
      %p250 = pneg %p81
      %p251 = pneg %p78
      %p252 = pneg %p102
      %p253 = pneg %p99
      %p254 = pneg %p123
      %p255 = pneg %p120
      %p256 = pneg %p144
      %p257 = pneg %p141
      %p258 = pneg %p165
      %p259 = pneg %p162
      %p260 = pneg %p191
      %p261 = pneg %p188
      %p262 = scmp.lt.s32.totalorder %s18, 1
      %s263 = scalar_select %p262, %s18, 1
      %s264 = smul.addr %s263, 4
      %s265 = scalar_lea.vmem %s7, %s264
      %p266 = scmp.lt.s32.totalorder %s18, 1
      %s267 = scalar_select %p266, %s18, 1
      %s268 = smul.addr %s267, 4
      %s269 = scalar_lea.vmem %s0, %s268
      %p270 = scmp.lt.s32.totalorder %s18, 1
      %s271 = scalar_select %p270, %s18, 1
      %s272 = smul.addr %s271, 4
      %s273 = scalar_lea.vmem %s7, %s272
      %v275 = vld [vmem:[%s269] sm:$0xf]
      %v276 = vunpack.c.l.bf16 %v275
      %v277 = vld [vmem:[%s1] sm:$0x1]
      %v279 = vlaneseq
      %v280 = vshrl.u32 %v279, 7
      %v281 = vsub.s32 0, %v280
      %v282 = vrot.slane %v277, %v281
      %v284 = vmul.f32 %v276, %v282
      %v285 = vld [vmem:[%s2] sm:$0x1]
      %v287 = vlaneseq
      %v288 = vshrl.u32 %v287, 7
      %v289 = vsub.s32 0, %v288
      %v290 = vrot.slane %v285, %v289
      %v292 = vadd.f32 %v284, %v290
      %v293 = vmax.f32 %v292, 0.0
      %v294 = vpack.c.bf16 %v293, %v293
      %v295 = vld [vmem:[%s3] sm:$0xf]
      %v296 = vld [vmem:[%s3 + $0x4] sm:$0xf]
      %v299 = vunpack.c.l.b16 %v295
      %v300 = vunpack.c.l.b16 %v296
      %v301 = vpack.c.b16 %v300, %v299
      %vm303 = vcmask 130048
      %v305 = vsel %vm303, %v294, 0
      %307 = vmatprep.subr.bf16.mxu0 0
      %308 = vmatpush1.bf16.msra.mxu0 %v301
      %309 = vmatprep.subr.bf16.mxu0 0
      %310 = vmatpush1.bf16.msra.mxu0 0
      %311 = vmatprep.subr.bf16.mxu0 0
      %312 = vmatpush1.bf16.msra.mxu0 0
      %313 = vmatprep.subr.bf16.mxu0 0
      %314 = vmatpush1.bf16.msra.mxu0 0
      %315 = vmatprep.subr.bf16.mxu0 0
      %316 = vmatpush1.bf16.msra.mxu0 0
      %317 = vmatprep.subr.bf16.mxu0 0
      %318 = vmatpush1.bf16.msra.mxu0 0
      %319 = vmatprep.subr.bf16.mxu0 0
      %320 = vmatpush1.bf16.msra.mxu0 0
      %321 = vmatprep.subr.bf16.mxu0 0
      %322 = vmatpush1.bf16.msra.mxu0 0
      %323 = vmatprep.subr.bf16.mxu0 0
      %324 = vmatpush1.bf16.msra.mxu0 0
      %325 = vmatprep.subr.bf16.mxu0 0
      %326 = vmatpush1.bf16.msra.mxu0 0
      %327 = vmatprep.subr.bf16.mxu0 0
      %328 = vmatpush1.bf16.msra.mxu0 0
      %329 = vmatprep.subr.bf16.mxu0 0
      %330 = vmatpush1.bf16.msra.mxu0 0
      %331 = vmatprep.subr.bf16.mxu0 0
      %332 = vmatpush1.bf16.msra.mxu0 0
      %333 = vmatprep.subr.bf16.mxu0 0
      %334 = vmatpush1.bf16.msra.mxu0 0
      %335 = vmatprep.subr.bf16.mxu0 0
      %336 = vmatpush1.bf16.msra.mxu0 0
      %337 = vmatprep.subr.bf16.mxu0 0
      %338 = vmatpush1.bf16.msra.mxu0 0
      %339 = vmatprep.mubr.bf16.mxu0 0
      %340 = vmatmul.mubr.bf16.gmra.mrb[0].mxu0 %v305
      %v341 = vpop.f32.mrb[0].mxu0
      %v342 = vadd.f32 0.0, %v341
      %v343 = vpop.f32.mrb[0].mxu0
      %v344 = vpop.f32.mrb[0].mxu0
      %v345 = vpop.f32.mrb[0].mxu0
      %346 = vdwg.mxu0
      %v347 = vld [vmem:[%s4] sm:$0x1]
      %v349 = vlaneseq
      %v350 = vshrl.u32 %v349, 7
      %v351 = vsub.s32 0, %v350
      %v352 = vrot.slane %v347, %v351
      %v354 = vmul.f32 %v342, %v352
      %v355 = vld [vmem:[%s5] sm:$0x1]
      %v357 = vlaneseq
      %v358 = vshrl.u32 %v357, 7
      %v359 = vsub.s32 0, %v358
      %v360 = vrot.slane %v355, %v359
      %v362 = vadd.f32 %v354, %v360
      %v363 = vmax.f32 %v362, 0.0
      %v364 = vrot.slane %v363, 7
      %v365 = vlaneseq
      %v366 = vshrl.u32 %v365, 7
      %vm367 = vcmp.lt.s32.totalorder %v366, 1
      %v368 = vsel %vm367, 0.0, %v364
      %v369 = vrot.slane %v363, 1
      %vm370 = vcmp.ge.s32.totalorder %v366, 7
      %v371 = vsel %vm370, 0.0, %v369
      %373 = vrot.lane.b32.xlu0 %v363, 16
      %v374 = vpop.permute.xlu0 %373
      %377 = vrot.lane.b32.xlu0 %v371, 32
      %v378 = vpop.permute.xlu0 %377
      %v380 = vsel %vm303, %v368, %v374
      %vm381 = vcmask 261120
      %v382 = vsel %vm381, %v380, %v378
      %v383 = vpack.c.bf16 %v382, %v382
      %v384 = vld [vmem:[%s6] sm:$0xf]
      %v385 = vld [vmem:[%s6 + $0x4] sm:$0xf]
      %v386 = vld [vmem:[%s6 + $0x8] sm:$0xf]
      %v387 = vld [vmem:[%s6 + $0xc] sm:$0xf]
      %v388 = vld [vmem:[%s6 + $0x10] sm:$0xf]
      %v389 = vld [vmem:[%s6 + $0x14] sm:$0xf]
      %v396 = vunpack.c.l.b16 %v384
      %v397 = vunpack.c.l.b16 %v385
      %v398 = vunpack.c.l.b16 %v386
      %v399 = vunpack.c.l.b16 %v387
      %v400 = vunpack.c.l.b16 %v388
      %v401 = vunpack.c.l.b16 %v389
      %v402 = vpack.c.b16 %v397, %v396
      %v403 = vpack.c.b16 %v399, %v398
      %v404 = vpack.c.b16 %v401, %v400
      %vm408 = vcmask 392192
      %v410 = vsel %vm408, %v383, 0
      %412 = vmatprep.subr.bf16.mxu0 0
      %413 = vmatpush1.bf16.msra.mxu0 %v402
      %414 = vmatprep.subr.bf16.mxu0 0
      %415 = vmatpush1.bf16.msra.mxu0 %v403
      %416 = vmatprep.subr.bf16.mxu0 0
      %417 = vmatpush1.bf16.msra.mxu0 %v404
      %418 = vmatprep.subr.bf16.mxu0 0
      %419 = vmatpush1.bf16.msra.mxu0 0
      %420 = vmatprep.subr.bf16.mxu0 0
      %421 = vmatpush1.bf16.msra.mxu0 0
      %422 = vmatprep.subr.bf16.mxu0 0
      %423 = vmatpush1.bf16.msra.mxu0 0
      %424 = vmatprep.subr.bf16.mxu0 0
      %425 = vmatpush1.bf16.msra.mxu0 0
      %426 = vmatprep.subr.bf16.mxu0 0
      %427 = vmatpush1.bf16.msra.mxu0 0
      %428 = vmatprep.subr.bf16.mxu0 0
      %429 = vmatpush1.bf16.msra.mxu0 0
      %430 = vmatprep.subr.bf16.mxu0 0
      %431 = vmatpush1.bf16.msra.mxu0 0
      %432 = vmatprep.subr.bf16.mxu0 0
      %433 = vmatpush1.bf16.msra.mxu0 0
      %434 = vmatprep.subr.bf16.mxu0 0
      %435 = vmatpush1.bf16.msra.mxu0 0
      %436 = vmatprep.subr.bf16.mxu0 0
      %437 = vmatpush1.bf16.msra.mxu0 0
      %438 = vmatprep.subr.bf16.mxu0 0
      %439 = vmatpush1.bf16.msra.mxu0 0
      %440 = vmatprep.subr.bf16.mxu0 0
      %441 = vmatpush1.bf16.msra.mxu0 0
      %442 = vmatprep.subr.bf16.mxu0 0
      %443 = vmatpush1.bf16.msra.mxu0 0
      %444 = vmatprep.mubr.bf16.mxu0 0
      %445 = vmatmul.mubr.bf16.gmra.mrb[0].mxu0 %v410
      %v446 = vpop.f32.mrb[0].mxu0
      %v447 = vadd.f32 0.0, %v446
      %v448 = vpop.f32.mrb[0].mxu0
      %v449 = vpop.f32.mrb[0].mxu0
      %v450 = vpop.f32.mrb[0].mxu0
      %451 = vdwg.mxu0
      %v452 = vpack.c.bf16 %v447, %v447
      %vm453 = vcmask 60416
      %454 = vst.msk [vmem:[%s273] sm:$0xf] %vm453, %v452
      %p455 = scmp.lt.s32.totalorder %s18, 1
      %s456 = scalar_select %p455, %s18, 1
      %s457 = smul.addr %s456, 4
      %s458 = scalar_lea.vmem %s7, %s457
      // Predicated region
      $region49: #{densenet_forward.11} parent=47 // pred_check
        %p459 = pneg %p188
      $region50: #{densenet_forward.11} parent=47 // pred_check_branch
        %461 = sbr.rel (%p459) target = $region52
      $region51: #{densenet_forward.11} parent=47 // pred_region
        _
      $region52: #{densenet_forward.11} parent=47 // pred_fallthru
        _
    $region48: #{densenet_forward.11} parent=5 // pred_fallthru
      _
    %p462 = scmp.le.s32.totalorder 2, %s13
    // Predicated region
    $region53: #{densenet_forward.11} parent=5 // pred_check
      %p463 = pneg %p462
    $region54: #{densenet_forward.11} parent=5 // pred_check_branch
      %465 = sbr.rel (%p463) target = $region56
    $region55: #{densenet_forward.11} parent=5 // pred_region
      %s466 = ssub.s32 %s13, 2
      // Predicated region
      $region57: #{densenet_forward.11} parent=55 // pred_check
        %p467 = pneg %p194
      $region58: #{densenet_forward.11} parent=55 // pred_check_branch
        %469 = sbr.rel (%p467) target = $region60
      $region59: #{densenet_forward.11} parent=55 // pred_region
        %p470 = scmp.lt.s32.totalorder %s19, 1
        %s471 = scalar_select %p470, %s19, 1
        %s472 = smul.addr %s471, 4
        %s473 = scalar_lea.vmem %s7, %s472
      $region60: #{densenet_forward.11} parent=55 // pred_fallthru
        _
    $region56: #{densenet_forward.11} parent=5 // pred_fallthru
      _
  $region6: #{densenet_forward.11} parent=0 // loop_footer
    %s17 = sadd.s32 1, %s13
  $region7: #{densenet_forward.11} parent=0 // loop_footer_branch
    %12 = sbr.rel target = $region3
  $region8: #{densenet_forward.11} parent=0 // loop_exit
    _

// kernel: densenet_forward.12
$region0: #{densenet_forward.12}
  #allocation0 [shape = 'u32[]', space=smem, size = 0x4, offset = 0x4, fixed_abs, tag = 'smem constant byte address 0x4 - core index']
  #allocation1 [shape = 'u32[144,128]{1,0:T(1,128)}', space=vmem, size = 0x12000, scoped, tag = 'internal scratch']
  %s0 = inlined_call_operand.vmem [shape: bf16[2,8,16], index: 0, kind: input, shape index: {}]
  %s1 = inlined_call_operand.vmem [shape: bf16[2,8,8], index: 1, kind: input, shape index: {}]
  %s2 = inlined_call_operand.vmem [shape: f32[1,24], index: 2, kind: input, shape index: {}]
  %s3 = inlined_call_operand.vmem [shape: f32[1,24], index: 3, kind: input, shape index: {}]
  %s4 = inlined_call_operand.vmem [shape: bf16[24,16], index: 4, kind: input, shape index: {}]
  %s5 = inlined_call_operand.vmem [shape: f32[1,16], index: 5, kind: input, shape index: {}]
  %s6 = inlined_call_operand.vmem [shape: f32[1,16], index: 6, kind: input, shape index: {}]
  %s7 = inlined_call_operand.vmem [shape: bf16[48,8], index: 7, kind: input, shape index: {}]
  %s8 = inlined_call_operand.vmem [shape: bf16[2,8,8], index: 8, kind: output, shape index: {}]
  %s9 = sld [smem:[#allocation0]]
  $region65: #{densenet_forward.12} parent=0
    _
  %s11 = ssub.s32 1, %s9
  %s12 = scalar_select 0, %s11, %s9
  loop: start=0, step=1, limit=4
  $region2: #{densenet_forward.12} parent=0 // loop_pre_header
    _
  $region3: #{densenet_forward.12} parent=0 // loop_header
    %s14 = sphi 0, %s18
    %p15 = scmp.ge.s32.totalorder %s14, 4
    %s24 = sphi 0, %s26
    %s27 = sphi 0, %s24
    %s28 = sphi 0, %s27
    %s44 = sphi 0, %s28
    %s50 = sphi 0, %s52
    %s53 = sphi 0, %s50
    %s54 = sphi 0, %s53
    %s70 = sphi 0, %s54
    %s74 = sphi 0, %s74
    %s76 = sphi 0, %s74
    %s77 = sphi 0, %s76
    %s91 = sphi 0, %s77
    %s95 = sphi 0, %s95
    %s97 = sphi 0, %s95
    %s98 = sphi 0, %s97
    %s112 = sphi 0, %s98
    %s116 = sphi 0, %s116
    %s118 = sphi 0, %s116
    %s119 = sphi 0, %s118
    %s133 = sphi 0, %s119
    %s137 = sphi 0, %s137
    %s139 = sphi 0, %s137
    %s140 = sphi 0, %s139
    %s154 = sphi 0, %s140
    %s158 = sphi 0, %s158
    %s160 = sphi 0, %s158
    %s161 = sphi 0, %s160
    %s175 = sphi 0, %s161
    %s179 = sphi 0, %s179
    %s181 = sphi 0, %s179
    %s182 = sphi 0, %s181
    %s196 = sphi 0, %s182
    %s202 = sphi 0, %s204
    %s205 = sphi 0, %s202
    %s206 = sphi 0, %s205
    %s222 = sphi 0, %s206
  $region4: #{densenet_forward.12} parent=0 // loop_header_branch
    %17 = sbr.rel (%p15) target = $region8
  $region5: #{densenet_forward.12} parent=0 // loop_body
    %s19 = ssub.s32 %s14, 1
    %s20 = ssub.s32 %s14, 2
    %s21 = sadd.s32 %s14, 1
    %s22 = ssub.s32 %s14, %s21
    %p23 = scmp.eq.s32.totalorder %s22, 0
    %s25 = sadd.s32 %s24, 1
    %s26 = scalar_select %p23, %s24, %s25
    %p29 = pneg %p23
    %p30 = scmp.eq.s32.totalorder %s14, 1
    %p31 = por %p29, %p30
    %p32 = scmp.ne.s32.totalorder %s24, %s27
    %p33 = scmp.eq.s32.totalorder %s14, 0
    %p34 = por %p32, %p33
    %p35 = scmp.ne.s32.totalorder %s24, %s27
    %p36 = scmp.eq.s32.totalorder %s19, 1
    %p37 = por %p35, %p36
    %p38 = scmp.ne.s32.totalorder %s27, %s28
    %p39 = scmp.eq.s32.totalorder %s19, 0
    %p40 = por %p38, %p39
    %p41 = scmp.ne.s32.totalorder %s27, %s28
    %p42 = scmp.eq.s32.totalorder %s20, 1
    %p43 = por %p41, %p42
    %p45 = scmp.ne.s32.totalorder %s28, %s44
    %p46 = scmp.eq.s32.totalorder %s20, 0
    %p47 = por %p45, %p46
    %s48 = ssub.s32 %s14, %s21
    %p49 = scmp.eq.s32.totalorder %s48, 0
    %s51 = sadd.s32 %s50, 1
    %s52 = scalar_select %p49, %s50, %s51
    %p55 = pneg %p49
    %p56 = scmp.eq.s32.totalorder %s14, 1
    %p57 = por %p55, %p56
    %p58 = scmp.ne.s32.totalorder %s50, %s53
    %p59 = scmp.eq.s32.totalorder %s14, 0
    %p60 = por %p58, %p59
    %p61 = scmp.ne.s32.totalorder %s50, %s53
    %p62 = scmp.eq.s32.totalorder %s19, 1
    %p63 = por %p61, %p62
    %p64 = scmp.ne.s32.totalorder %s53, %s54
    %p65 = scmp.eq.s32.totalorder %s19, 0
    %p66 = por %p64, %p65
    %p67 = scmp.ne.s32.totalorder %s53, %s54
    %p68 = scmp.eq.s32.totalorder %s20, 1
    %p69 = por %p67, %p68
    %p71 = scmp.ne.s32.totalorder %s54, %s70
    %p72 = scmp.eq.s32.totalorder %s20, 0
    %p73 = por %p71, %p72
    %s75 = sadd.s32 %s74, 1
    %p78 = scmp.eq.s32.totalorder %s14, 1
    %p79 = scmp.ne.s32.totalorder %s74, %s76
    %p80 = scmp.eq.s32.totalorder %s14, 0
    %p81 = por %p79, %p80
    %p82 = scmp.ne.s32.totalorder %s74, %s76
    %p83 = scmp.eq.s32.totalorder %s19, 1
    %p84 = por %p82, %p83
    %p85 = scmp.ne.s32.totalorder %s76, %s77
    %p86 = scmp.eq.s32.totalorder %s19, 0
    %p87 = por %p85, %p86
    %p88 = scmp.ne.s32.totalorder %s76, %s77
    %p89 = scmp.eq.s32.totalorder %s20, 1
    %p90 = por %p88, %p89
    %p92 = scmp.ne.s32.totalorder %s77, %s91
    %p93 = scmp.eq.s32.totalorder %s20, 0
    %p94 = por %p92, %p93
    %s96 = sadd.s32 %s95, 1
    %p99 = scmp.eq.s32.totalorder %s14, 1
    %p100 = scmp.ne.s32.totalorder %s95, %s97
    %p101 = scmp.eq.s32.totalorder %s14, 0
    %p102 = por %p100, %p101
    %p103 = scmp.ne.s32.totalorder %s95, %s97
    %p104 = scmp.eq.s32.totalorder %s19, 1
    %p105 = por %p103, %p104
    %p106 = scmp.ne.s32.totalorder %s97, %s98
    %p107 = scmp.eq.s32.totalorder %s19, 0
    %p108 = por %p106, %p107
    %p109 = scmp.ne.s32.totalorder %s97, %s98
    %p110 = scmp.eq.s32.totalorder %s20, 1
    %p111 = por %p109, %p110
    %p113 = scmp.ne.s32.totalorder %s98, %s112
    %p114 = scmp.eq.s32.totalorder %s20, 0
    %p115 = por %p113, %p114
    %s117 = sadd.s32 %s116, 1
    %p120 = scmp.eq.s32.totalorder %s14, 1
    %p121 = scmp.ne.s32.totalorder %s116, %s118
    %p122 = scmp.eq.s32.totalorder %s14, 0
    %p123 = por %p121, %p122
    %p124 = scmp.ne.s32.totalorder %s116, %s118
    %p125 = scmp.eq.s32.totalorder %s19, 1
    %p126 = por %p124, %p125
    %p127 = scmp.ne.s32.totalorder %s118, %s119
    %p128 = scmp.eq.s32.totalorder %s19, 0
    %p129 = por %p127, %p128
    %p130 = scmp.ne.s32.totalorder %s118, %s119
    %p131 = scmp.eq.s32.totalorder %s20, 1
    %p132 = por %p130, %p131
    %p134 = scmp.ne.s32.totalorder %s119, %s133
    %p135 = scmp.eq.s32.totalorder %s20, 0
    %p136 = por %p134, %p135
    %s138 = sadd.s32 %s137, 1
    %p141 = scmp.eq.s32.totalorder %s14, 1
    %p142 = scmp.ne.s32.totalorder %s137, %s139
    %p143 = scmp.eq.s32.totalorder %s14, 0
    %p144 = por %p142, %p143
    %p145 = scmp.ne.s32.totalorder %s137, %s139
    %p146 = scmp.eq.s32.totalorder %s19, 1
    %p147 = por %p145, %p146
    %p148 = scmp.ne.s32.totalorder %s139, %s140
    %p149 = scmp.eq.s32.totalorder %s19, 0
    %p150 = por %p148, %p149
    %p151 = scmp.ne.s32.totalorder %s139, %s140
    %p152 = scmp.eq.s32.totalorder %s20, 1
    %p153 = por %p151, %p152
    %p155 = scmp.ne.s32.totalorder %s140, %s154
    %p156 = scmp.eq.s32.totalorder %s20, 0
    %p157 = por %p155, %p156
    %s159 = sadd.s32 %s158, 1
    %p162 = scmp.eq.s32.totalorder %s14, 1
    %p163 = scmp.ne.s32.totalorder %s158, %s160
    %p164 = scmp.eq.s32.totalorder %s14, 0
    %p165 = por %p163, %p164
    %p166 = scmp.ne.s32.totalorder %s158, %s160
    %p167 = scmp.eq.s32.totalorder %s19, 1
    %p168 = por %p166, %p167
    %p169 = scmp.ne.s32.totalorder %s160, %s161
    %p170 = scmp.eq.s32.totalorder %s19, 0
    %p171 = por %p169, %p170
    %p172 = scmp.ne.s32.totalorder %s160, %s161
    %p173 = scmp.eq.s32.totalorder %s20, 1
    %p174 = por %p172, %p173
    %p176 = scmp.ne.s32.totalorder %s161, %s175
    %p177 = scmp.eq.s32.totalorder %s20, 0
    %p178 = por %p176, %p177
    %s180 = sadd.s32 %s179, 1
    %p183 = scmp.eq.s32.totalorder %s14, 1
    %p184 = scmp.ne.s32.totalorder %s179, %s181
    %p185 = scmp.eq.s32.totalorder %s14, 0
    %p186 = por %p184, %p185
    %p187 = scmp.ne.s32.totalorder %s179, %s181
    %p188 = scmp.eq.s32.totalorder %s19, 1
    %p189 = por %p187, %p188
    %p190 = scmp.ne.s32.totalorder %s181, %s182
    %p191 = scmp.eq.s32.totalorder %s19, 0
    %p192 = por %p190, %p191
    %p193 = scmp.ne.s32.totalorder %s181, %s182
    %p194 = scmp.eq.s32.totalorder %s20, 1
    %p195 = por %p193, %p194
    %p197 = scmp.ne.s32.totalorder %s182, %s196
    %p198 = scmp.eq.s32.totalorder %s20, 0
    %p199 = por %p197, %p198
    %s200 = ssub.s32 %s14, %s21
    %p201 = scmp.eq.s32.totalorder %s200, 0
    %s203 = sadd.s32 %s202, 1
    %s204 = scalar_select %p201, %s202, %s203
    %p207 = pneg %p201
    %p208 = scmp.eq.s32.totalorder %s14, 1
    %p209 = por %p207, %p208
    %p210 = scmp.ne.s32.totalorder %s202, %s205
    %p211 = scmp.eq.s32.totalorder %s14, 0
    %p212 = por %p210, %p211
    %p213 = scmp.ne.s32.totalorder %s202, %s205
    %p214 = scmp.eq.s32.totalorder %s19, 1
    %p215 = por %p213, %p214
    %p216 = scmp.ne.s32.totalorder %s205, %s206
    %p217 = scmp.eq.s32.totalorder %s19, 0
    %p218 = por %p216, %p217
    %p219 = scmp.ne.s32.totalorder %s205, %s206
    %p220 = scmp.eq.s32.totalorder %s20, 1
    %p221 = por %p219, %p220
    %p223 = scmp.ne.s32.totalorder %s206, %s222
    %p224 = scmp.eq.s32.totalorder %s20, 0
    %p225 = por %p223, %p224
    %p226 = scmp.le.s32.totalorder 1, %s14
    %p227 = scmp.lt.s32.totalorder %s14, 3
    %p228 = pnand %p226, %p227
    %p229 = pneg %p228
    // Predicated region
    $region9: #{densenet_forward.12} parent=5 // pred_check
      _
    $region10: #{densenet_forward.12} parent=5 // pred_check_branch
      %231 = sbr.rel (%p228) target = $region12
    $region11: #{densenet_forward.12} parent=5 // pred_region
      %s232 = ssub.s32 %s14, 1
      // Predicated region
      $region13: #{densenet_forward.12} parent=11 // pred_check
        %p233 = pneg %p87
      $region14: #{densenet_forward.12} parent=11 // pred_check_branch
        %235 = sbr.rel (%p233) target = $region16
      $region15: #{densenet_forward.12} parent=11 // pred_region
        _
      $region16: #{densenet_forward.12} parent=11 // pred_fallthru
        _
      // Predicated region
      $region17: #{densenet_forward.12} parent=11 // pred_check
        %p236 = pneg %p108
      $region18: #{densenet_forward.12} parent=11 // pred_check_branch
        %238 = sbr.rel (%p236) target = $region20
      $region19: #{densenet_forward.12} parent=11 // pred_region
        _
      $region20: #{densenet_forward.12} parent=11 // pred_fallthru
        _
      // Predicated region
      $region21: #{densenet_forward.12} parent=11 // pred_check
        %p239 = pneg %p129
      $region22: #{densenet_forward.12} parent=11 // pred_check_branch
        %241 = sbr.rel (%p239) target = $region24
      $region23: #{densenet_forward.12} parent=11 // pred_region
        _
      $region24: #{densenet_forward.12} parent=11 // pred_fallthru
        _
      // Predicated region
      $region25: #{densenet_forward.12} parent=11 // pred_check
        %p242 = pneg %p150
      $region26: #{densenet_forward.12} parent=11 // pred_check_branch
        %244 = sbr.rel (%p242) target = $region28
      $region27: #{densenet_forward.12} parent=11 // pred_region
        _
      $region28: #{densenet_forward.12} parent=11 // pred_fallthru
        _
      // Predicated region
      $region29: #{densenet_forward.12} parent=11 // pred_check
        %p245 = pneg %p171
      $region30: #{densenet_forward.12} parent=11 // pred_check_branch
        %247 = sbr.rel (%p245) target = $region32
      $region31: #{densenet_forward.12} parent=11 // pred_region
        _
      $region32: #{densenet_forward.12} parent=11 // pred_fallthru
        _
      // Predicated region
      $region33: #{densenet_forward.12} parent=11 // pred_check
        %p248 = pneg %p192
      $region34: #{densenet_forward.12} parent=11 // pred_check_branch
        %250 = sbr.rel (%p248) target = $region36
      $region35: #{densenet_forward.12} parent=11 // pred_region
        _
      $region36: #{densenet_forward.12} parent=11 // pred_fallthru
        _
    $region12: #{densenet_forward.12} parent=5 // pred_fallthru
      _
    %p251 = scmp.lt.s32.totalorder %s14, 2
    // Predicated region
    $region37: #{densenet_forward.12} parent=5 // pred_check
      %p252 = pneg %p251
    $region38: #{densenet_forward.12} parent=5 // pred_check_branch
      %254 = sbr.rel (%p252) target = $region40
    $region39: #{densenet_forward.12} parent=5 // pred_region
      // Predicated region
      $region41: #{densenet_forward.12} parent=39 // pred_check
        %p255 = pneg %p34
      $region42: #{densenet_forward.12} parent=39 // pred_check_branch
        %257 = sbr.rel (%p255) target = $region44
      $region43: #{densenet_forward.12} parent=39 // pred_region
        %p258 = scmp.lt.s32.totalorder %s14, 1
        %s259 = scalar_select %p258, %s14, 1
        %s260 = smul.addr %s259, 4
        %s261 = scalar_lea.vmem %s0, %s260
      $region44: #{densenet_forward.12} parent=39 // pred_fallthru
        _
      // Predicated region
      $region45: #{densenet_forward.12} parent=39 // pred_check
        %p262 = pneg %p60
      $region46: #{densenet_forward.12} parent=39 // pred_check_branch
        %264 = sbr.rel (%p262) target = $region48
      $region47: #{densenet_forward.12} parent=39 // pred_region
        %p265 = scmp.lt.s32.totalorder %s14, 1
        %s266 = scalar_select %p265, %s14, 1
        %s267 = smul.addr %s266, 4
        %s268 = scalar_lea.vmem %s1, %s267
      $region48: #{densenet_forward.12} parent=39 // pred_fallthru
        _
    $region40: #{densenet_forward.12} parent=5 // pred_fallthru
      _
    %p269 = scmp.le.s32.totalorder 1, %s14
    %p270 = scmp.lt.s32.totalorder %s14, 3
    %p271 = pnand %p269, %p270
    %p272 = pneg %p271
    // Predicated region
    $region49: #{densenet_forward.12} parent=5 // pred_check
      _
    $region50: #{densenet_forward.12} parent=5 // pred_check_branch
      %274 = sbr.rel (%p271) target = $region52
    $region51: #{densenet_forward.12} parent=5 // pred_region
      %s275 = ssub.s32 %s14, 1
      %p276 = scmp.lt.s32.totalorder %s19, 1
      %s277 = scalar_select %p276, %s19, 1
      %s278 = smul.addr %s277, 4
      %s279 = scalar_lea.vmem %s0, %s278
      %p280 = pneg %p40
      %p281 = pneg %p37
      %p282 = scmp.lt.s32.totalorder %s19, 1
      %s283 = scalar_select %p282, %s19, 1
      %s284 = smul.addr %s283, 4
      %s285 = scalar_lea.vmem %s1, %s284
      %p286 = pneg %p66
      %p287 = pneg %p63
      %p288 = pneg %p87
      %p289 = pneg %p84
      %p290 = pneg %p108
      %p291 = pneg %p105
      %p292 = pneg %p129
      %p293 = pneg %p126
      %p294 = pneg %p150
      %p295 = pneg %p147
      %p296 = pneg %p171
      %p297 = pneg %p168
      %p298 = pneg %p192
      %p299 = pneg %p189
      %p300 = pneg %p218
      %p301 = pneg %p215
      %p302 = scmp.lt.s32.totalorder %s19, 1
      %s303 = scalar_select %p302, %s19, 1
      %s304 = smul.addr %s303, 4
      %s305 = scalar_lea.vmem %s8, %s304
      %p306 = scmp.lt.s32.totalorder %s19, 1
      %s307 = scalar_select %p306, %s19, 1
      %s308 = smul.addr %s307, 4
      %s309 = scalar_lea.vmem %s0, %s308
      %p310 = scmp.lt.s32.totalorder %s19, 1
      %s311 = scalar_select %p310, %s19, 1
      %s312 = smul.addr %s311, 4
      %s313 = scalar_lea.vmem %s1, %s312
      %p314 = scmp.lt.s32.totalorder %s19, 1
      %s315 = scalar_select %p314, %s19, 1
      %s316 = smul.addr %s315, 4
      %s317 = scalar_lea.vmem %s8, %s316
      %v319 = vld [vmem:[%s309] sm:$0xf]
      %v320 = vunpack.c.l.bf16 %v319
      %v321 = vld [vmem:[%s313] sm:$0xf]
      %v322 = vunpack.c.l.bf16 %v321
      %324 = vrot.lane.b32.xlu0 %v322, 16
      %v325 = vpop.permute.xlu0 %324
      %vm327 = vcmask 130048
      %v328 = vsel %vm327, %v320, %v325
      %v329 = vld [vmem:[%s2] sm:$0x1]
      %v331 = vlaneseq
      %v332 = vshrl.u32 %v331, 7
      %v333 = vsub.s32 0, %v332
      %v334 = vrot.slane %v329, %v333
      %v336 = vmul.f32 %v328, %v334
      %v337 = vld [vmem:[%s3] sm:$0x1]
      %v339 = vlaneseq
      %v340 = vshrl.u32 %v339, 7
      %v341 = vsub.s32 0, %v340
      %v342 = vrot.slane %v337, %v341
      %v344 = vadd.f32 %v336, %v342
      %v345 = vmax.f32 %v344, 0.0
      %v346 = vpack.c.bf16 %v345, %v345
      %v347 = vld [vmem:[%s4] sm:$0xf]
      %v348 = vld [vmem:[%s4 + $0x4] sm:$0xf]
      %v349 = vld [vmem:[%s4 + $0x8] sm:$0xf]
      %v353 = vunpack.c.l.b16 %v347
      %v354 = vunpack.c.l.b16 %v348
      %v355 = vunpack.c.l.b16 %v349
      %v356 = vpack.c.b16 %v354, %v353
      %v357 = vpack.c.b16 %v355, %v355
      %vm359 = vcmask 195584
      %v361 = vsel %vm359, %v346, 0
      %vm363 = vcmask 1043456
      %v365 = vsel %vm363, %v357, 0
      %367 = vmatprep.subr.bf16.mxu0 0
      %368 = vmatpush1.bf16.msra.mxu0 %v356
      %369 = vmatprep.subr.bf16.mxu0 0
      %370 = vmatpush1.bf16.msra.mxu0 %v365
      %371 = vmatprep.subr.bf16.mxu0 0
      %372 = vmatpush1.bf16.msra.mxu0 0
      %373 = vmatprep.subr.bf16.mxu0 0
      %374 = vmatpush1.bf16.msra.mxu0 0
      %375 = vmatprep.subr.bf16.mxu0 0
      %376 = vmatpush1.bf16.msra.mxu0 0
      %377 = vmatprep.subr.bf16.mxu0 0
      %378 = vmatpush1.bf16.msra.mxu0 0
      %379 = vmatprep.subr.bf16.mxu0 0
      %380 = vmatpush1.bf16.msra.mxu0 0
      %381 = vmatprep.subr.bf16.mxu0 0
      %382 = vmatpush1.bf16.msra.mxu0 0
      %383 = vmatprep.subr.bf16.mxu0 0
      %384 = vmatpush1.bf16.msra.mxu0 0
      %385 = vmatprep.subr.bf16.mxu0 0
      %386 = vmatpush1.bf16.msra.mxu0 0
      %387 = vmatprep.subr.bf16.mxu0 0
      %388 = vmatpush1.bf16.msra.mxu0 0
      %389 = vmatprep.subr.bf16.mxu0 0
      %390 = vmatpush1.bf16.msra.mxu0 0
      %391 = vmatprep.subr.bf16.mxu0 0
      %392 = vmatpush1.bf16.msra.mxu0 0
      %393 = vmatprep.subr.bf16.mxu0 0
      %394 = vmatpush1.bf16.msra.mxu0 0
      %395 = vmatprep.subr.bf16.mxu0 0
      %396 = vmatpush1.bf16.msra.mxu0 0
      %397 = vmatprep.subr.bf16.mxu0 0
      %398 = vmatpush1.bf16.msra.mxu0 0
      %399 = vmatprep.mubr.bf16.mxu0 0
      %400 = vmatmul.mubr.bf16.gmra.mrb[0].mxu0 %v361
      %v401 = vpop.f32.mrb[0].mxu0
      %v402 = vadd.f32 0.0, %v401
      %v403 = vpop.f32.mrb[0].mxu0
      %v404 = vpop.f32.mrb[0].mxu0
      %v405 = vpop.f32.mrb[0].mxu0
      %406 = vdwg.mxu0
      %v407 = vld [vmem:[%s5] sm:$0x1]
      %v409 = vlaneseq
      %v410 = vshrl.u32 %v409, 7
      %v411 = vsub.s32 0, %v410
      %v412 = vrot.slane %v407, %v411
      %v414 = vmul.f32 %v402, %v412
      %v415 = vld [vmem:[%s6] sm:$0x1]
      %v417 = vlaneseq
      %v418 = vshrl.u32 %v417, 7
      %v419 = vsub.s32 0, %v418
      %v420 = vrot.slane %v415, %v419
      %v422 = vadd.f32 %v414, %v420
      %v423 = vmax.f32 %v422, 0.0
      %v424 = vrot.slane %v423, 7
      %v425 = vlaneseq
      %v426 = vshrl.u32 %v425, 7
      %vm427 = vcmp.lt.s32.totalorder %v426, 1
      %v428 = vsel %vm427, 0.0, %v424
      %v429 = vrot.slane %v423, 1
      %vm430 = vcmp.ge.s32.totalorder %v426, 7
      %v431 = vsel %vm430, 0.0, %v429
      %433 = vrot.lane.b32.xlu0 %v423, 16
      %v434 = vpop.permute.xlu0 %433
      %437 = vrot.lane.b32.xlu0 %v431, 32
      %v438 = vpop.permute.xlu0 %437
      %v440 = vsel %vm327, %v428, %v434
      %vm441 = vcmask 261120
      %v442 = vsel %vm441, %v440, %v438
      %v443 = vpack.c.bf16 %v442, %v442
      %v444 = vld [vmem:[%s7] sm:$0xf]
      %v445 = vld [vmem:[%s7 + $0x4] sm:$0xf]
      %v446 = vld [vmem:[%s7 + $0x8] sm:$0xf]
      %v447 = vld [vmem:[%s7 + $0xc] sm:$0xf]
      %v448 = vld [vmem:[%s7 + $0x10] sm:$0xf]
      %v449 = vld [vmem:[%s7 + $0x14] sm:$0xf]
      %v456 = vunpack.c.l.b16 %v444
      %v457 = vunpack.c.l.b16 %v445
      %v458 = vunpack.c.l.b16 %v446
      %v459 = vunpack.c.l.b16 %v447
      %v460 = vunpack.c.l.b16 %v448
      %v461 = vunpack.c.l.b16 %v449
      %v462 = vpack.c.b16 %v457, %v456
      %v463 = vpack.c.b16 %v459, %v458
      %v464 = vpack.c.b16 %v461, %v460
      %vm468 = vcmask 392192
      %v470 = vsel %vm468, %v443, 0
      %472 = vmatprep.subr.bf16.mxu0 0
      %473 = vmatpush1.bf16.msra.mxu0 %v462
      %474 = vmatprep.subr.bf16.mxu0 0
      %475 = vmatpush1.bf16.msra.mxu0 %v463
      %476 = vmatprep.subr.bf16.mxu0 0
      %477 = vmatpush1.bf16.msra.mxu0 %v464
      %478 = vmatprep.subr.bf16.mxu0 0
      %479 = vmatpush1.bf16.msra.mxu0 0
      %480 = vmatprep.subr.bf16.mxu0 0
      %481 = vmatpush1.bf16.msra.mxu0 0
      %482 = vmatprep.subr.bf16.mxu0 0
      %483 = vmatpush1.bf16.msra.mxu0 0
      %484 = vmatprep.subr.bf16.mxu0 0
      %485 = vmatpush1.bf16.msra.mxu0 0
      %486 = vmatprep.subr.bf16.mxu0 0
      %487 = vmatpush1.bf16.msra.mxu0 0
      %488 = vmatprep.subr.bf16.mxu0 0
      %489 = vmatpush1.bf16.msra.mxu0 0
      %490 = vmatprep.subr.bf16.mxu0 0
      %491 = vmatpush1.bf16.msra.mxu0 0
      %492 = vmatprep.subr.bf16.mxu0 0
      %493 = vmatpush1.bf16.msra.mxu0 0
      %494 = vmatprep.subr.bf16.mxu0 0
      %495 = vmatpush1.bf16.msra.mxu0 0
      %496 = vmatprep.subr.bf16.mxu0 0
      %497 = vmatpush1.bf16.msra.mxu0 0
      %498 = vmatprep.subr.bf16.mxu0 0
      %499 = vmatpush1.bf16.msra.mxu0 0
      %500 = vmatprep.subr.bf16.mxu0 0
      %501 = vmatpush1.bf16.msra.mxu0 0
      %502 = vmatprep.subr.bf16.mxu0 0
      %503 = vmatpush1.bf16.msra.mxu0 0
      %504 = vmatprep.mubr.bf16.mxu0 0
      %505 = vmatmul.mubr.bf16.gmra.mrb[0].mxu0 %v470
      %v506 = vpop.f32.mrb[0].mxu0
      %v507 = vadd.f32 0.0, %v506
      %v508 = vpop.f32.mrb[0].mxu0
      %v509 = vpop.f32.mrb[0].mxu0
      %v510 = vpop.f32.mrb[0].mxu0
      %511 = vdwg.mxu0
      %v512 = vpack.c.bf16 %v507, %v507
      %vm513 = vcmask 60416
      %514 = vst.msk [vmem:[%s317] sm:$0xf] %vm513, %v512
      %p515 = scmp.lt.s32.totalorder %s19, 1
      %s516 = scalar_select %p515, %s19, 1
      %s517 = smul.addr %s516, 4
      %s518 = scalar_lea.vmem %s8, %s517
      // Predicated region
      $region53: #{densenet_forward.12} parent=51 // pred_check
        %p519 = pneg %p215
      $region54: #{densenet_forward.12} parent=51 // pred_check_branch
        %521 = sbr.rel (%p519) target = $region56
      $region55: #{densenet_forward.12} parent=51 // pred_region
        _
      $region56: #{densenet_forward.12} parent=51 // pred_fallthru
        _
    $region52: #{densenet_forward.12} parent=5 // pred_fallthru
      _
    %p522 = scmp.le.s32.totalorder 2, %s14
    // Predicated region
    $region57: #{densenet_forward.12} parent=5 // pred_check
      %p523 = pneg %p522
    $region58: #{densenet_forward.12} parent=5 // pred_check_branch
      %525 = sbr.rel (%p523) target = $region60
    $region59: #{densenet_forward.12} parent=5 // pred_region
      %s526 = ssub.s32 %s14, 2
      // Predicated region
      $region61: #{densenet_forward.12} parent=59 // pred_check
        %p527 = pneg %p221
      $region62: #{densenet_forward.12} parent=59 // pred_check_branch
        %529 = sbr.rel (%p527) target = $region64
      $region63: #{densenet_forward.12} parent=59 // pred_region
        %p530 = scmp.lt.s32.totalorder %s20, 1
        %s531 = scalar_select %p530, %s20, 1
        %s532 = smul.addr %s531, 4
        %s533 = scalar_lea.vmem %s8, %s532
      $region64: #{densenet_forward.12} parent=59 // pred_fallthru
        _
    $region60: #{densenet_forward.12} parent=5 // pred_fallthru
      _
  $region6: #{densenet_forward.12} parent=0 // loop_footer
    %s18 = sadd.s32 1, %s14
  $region7: #{densenet_forward.12} parent=0 // loop_footer_branch
    %13 = sbr.rel target = $region3
  $region8: #{densenet_forward.12} parent=0 // loop_exit
    _

</llo_original>
